<compile_context>
chip_gen: v7x
topology: tpu7x:2x2x1
jax: 0.10.0
libtpu: 0.0.40
codegen_flags: <defaults>
</compile_context>

<pallas_src>
import functools
import math

import jax
import jax.numpy as jnp
from jax.experimental import pallas as pl
from jax.experimental.pallas import tpu as pltpu


def _round_up(n, m):
    return ((n + m - 1) // m) * m


# ------------------------------ Pallas kernel ------------------------------ #

def _joint_kernel(x_ref, wqkv_ref, wo_ref, w1_ref, b1_ref, w2_ref, b2_ref,
                  wt_ref, bt_ref, out_ref, *,
                  b_blk, seq_len, d_model, num_aspects, target_size, t_pad):
    """Fused encoder layer + joint aspect taggers for one batch block.

    x_ref:    (B_blk, S, Dp)   token activations, lanes >= D zero-padded
    wqkv_ref: (Dp, 3*Dp)       fused Q/K/V projection (each 128-aligned)
    wo_ref:   (Dp, Dp)         attention output projection
    w1/b1, w2/b2:              feed-forward weights/biases (padded)
    wt_ref:   (Dp, A*Tp)       all aspect heads, lane-dense, Tp = 128-aligned
    bt_ref:   (1, A*Tp)        all aspect biases
    out_ref:  (B_blk, A, Tp)   per-aspect log_softmax (padding lanes = -inf)
    """
    dp = x_ref.shape[-1]
    rows = b_blk * seq_len

    x = x_ref[...].reshape(rows, dp)                         # (rows, Dp)

    # --- single-head self-attention, fused QKV (128-aligned slices) ---
    qkv = jnp.dot(x, wqkv_ref[...], preferred_element_type=jnp.float32)
    scale = 1.0 / math.sqrt(float(d_model))                  # scale on q only
    q = (qkv[:, :dp] * scale).reshape(b_blk, seq_len, dp)
    k = qkv[:, dp:2 * dp].reshape(b_blk, seq_len, dp)
    v = qkv[:, 2 * dp:].reshape(b_blk, seq_len, dp)

    scores = jnp.einsum('bqd,bkd->bqk', q, k,
                        preferred_element_type=jnp.float32)  # (B_blk, S, S)
    m = jnp.max(scores, axis=-1, keepdims=True)
    p = jnp.exp(scores - m)
    p = p / jnp.sum(p, axis=-1, keepdims=True)               # exact division

    attn = jnp.einsum('bqk,bkd->bqd', p, v,
                      preferred_element_type=jnp.float32)
    attn = jnp.dot(attn.reshape(rows, dp), wo_ref[...],
                   preferred_element_type=jnp.float32)
    h = x + attn                                             # residual 1

    # --- feed-forward ---
    ff = jnp.dot(h, w1_ref[...], preferred_element_type=jnp.float32)
    ff = jnp.maximum(ff + b1_ref[...], 0.0)
    ff = jnp.dot(ff, w2_ref[...], preferred_element_type=jnp.float32)
    enc = h + ff + b2_ref[...]                               # residual 2

    # --- joint aspect taggers (CommentWiseSumLogSoftmax, all heads at once) ---
    # sum_s(x_s @ W + b) == (sum_s x_s) @ W + S * b  -> one matmul, all heads.
    enc_sum = jnp.sum(enc.reshape(b_blk, seq_len, dp), axis=1)    # (B_blk, Dp)
    logits = jnp.dot(enc_sum, wt_ref[...],
                     preferred_element_type=jnp.float32)          # (B_blk, A*Tp)
    logits = logits + float(seq_len) * bt_ref[...]

    # one vectorized log-softmax pass over the (A, Tp) slab; padding lanes -inf
    lg = logits.reshape(b_blk, num_aspects, t_pad)
    lane = jax.lax.broadcasted_iota(jnp.int32, (1, 1, t_pad), 2)
    lg = jnp.where(lane < target_size, lg, -jnp.inf)
    mh = jnp.max(lg, axis=-1, keepdims=True)
    lse = mh + jnp.log(jnp.sum(jnp.exp(lg - mh), axis=-1, keepdims=True))
    out_ref[...] = lg - lse                                   # single dense store


# ------------------------------ JAX wrapper --------------------------------- #

def joint_aspect_tagger_forward(token_ids, emb, pos, enc_params, tagger_w, tagger_b):
    """Full forward: embedding glue + fused encoder/tagger Pallas kernel."""
    B, S = token_ids.shape
    V, D = emb.shape
    F = enc_params['w1'].shape[1]
    A, _, T = tagger_w.shape

    Dp = _round_up(D, 128)
    Fp = _round_up(F, 128)
    Tp = _round_up(T, 128)

    # glue (plain JAX): embedding lookup + positional encoding
    # TODO(synk): fuse this gather into the kernel (scalar-prefetch token ids +
    # per-row DMA gather) to avoid materializing (B, S, D) in HBM.
    x_emb = (emb[token_ids] + pos[None, :, :]).astype(jnp.float32)   # (B, S, D)

    # --- batch blocking: pack ~128 matmul rows per grid step ---
    b_blk = min(B, max(1, 128 // max(S, 1)))
    n_blocks = -(-B // b_blk)
    B_pad = n_blocks * b_blk
    x_pad = jnp.pad(x_emb, ((0, B_pad - B), (0, 0), (0, Dp - D)))     # (B_pad, S, Dp)

    # --- one-time weight plumbing (outside the kernel; zero-padding is exact) ---
    pad2 = lambda a, r, c: jnp.pad(a, ((0, r - a.shape[0]), (0, c - a.shape[1])))
    wqkv = jnp.concatenate([pad2(enc_params['wq'], Dp, Dp),
                            pad2(enc_params['wk'], Dp, Dp),
                            pad2(enc_params['wv'], Dp, Dp)], axis=1)  # (Dp, 3Dp)
    wo = pad2(enc_params['wo'], Dp, Dp)
    w1 = pad2(enc_params['w1'], Dp, Fp)
    b1 = pad2(enc_params['b1'], 1, Fp)
    w2 = pad2(enc_params['w2'], Fp, Dp)
    b2 = pad2(enc_params['b2'], 1, Dp)
    wt = jnp.transpose(tagger_w, (1, 0, 2))                           # (D, A, T)
    wt = jnp.pad(wt, ((0, Dp - D), (0, 0), (0, Tp - T))).reshape(Dp, A * Tp)
    bt = jnp.pad(tagger_b, ((0, 0), (0, Tp - T))).reshape(1, A * Tp)

    # --- VMEM budget (portable: fits v7x 64 MiB, uses headroom on v5e/v6e) ---
    bytes_f32 = 4
    w_bytes = (Dp * 3 * Dp + Dp * Dp + Dp * Fp + Fp + Fp * Dp + Dp
               + Dp * A * Tp + A * Tp) * bytes_f32
    act_bytes = (b_blk * S * Dp + b_blk * A * Tp) * bytes_f32
    tmp_bytes = (7 * b_blk * S * Dp + 2 * b_blk * S * S + b_blk * S * Fp) * bytes_f32
    vmem_limit = int(min(max(2 * (w_bytes + act_bytes + tmp_bytes), 32 * 2**20),
                         56 * 2**20))

    # --- advisory cost estimate for XLA scheduling around the custom call ---
    rows_total = B_pad * S
    flops = (2 * rows_total * Dp * (3 * Dp + Dp + 2 * Fp)
             + 4 * B_pad * S * S * Dp
             + 2 * B_pad * Dp * A * Tp)
    transcendentals = B_pad * S * S + B_pad * A * Tp + B_pad * A
    bytes_accessed = bytes_f32 * (B_pad * S * Dp + B_pad * A * Tp) + w_bytes
    cost = pl.CostEstimate(flops=int(flops),
                           transcendentals=int(transcendentals),
                           bytes_accessed=int(bytes_accessed))

    kernel = functools.partial(
        _joint_kernel, b_blk=b_blk, seq_len=S, d_model=D,
        num_aspects=A, target_size=T, t_pad=Tp)

    def build_call(single_buffer_weights):
        def const_spec(shape):
            # Grid-invariant (weight) operand: constant index map; single-buffer
            # when supported so the weight footprint isn't doubled (v7x VMEM).
            idx = lambda *_: (0,) * len(shape)
            if single_buffer_weights and hasattr(pl, "Buffered"):
                return pl.BlockSpec(shape, idx, pipeline_mode=pl.Buffered(1))
            return pl.BlockSpec(shape, idx)

        return pl.pallas_call(
            kernel,
            out_shape=jax.ShapeDtypeStruct((B_pad, A, Tp), jnp.float32),
            grid=(n_blocks,),
            in_specs=[
                pl.BlockSpec((b_blk, S, Dp), lambda i: (i, 0, 0)),   # x (batch block)
                const_spec((Dp, 3 * Dp)),                            # wqkv
                const_spec((Dp, Dp)),                                # wo
                const_spec((Dp, Fp)),                                # w1
                const_spec((1, Fp)),                                 # b1
                const_spec((Fp, Dp)),                                # w2
                const_spec((1, Dp)),                                 # b2
                const_spec((Dp, A * Tp)),                            # tagger W (flat)
                const_spec((1, A * Tp)),                             # tagger b (flat)
            ],
            out_specs=pl.BlockSpec((b_blk, A, Tp), lambda i: (i, 0, 0)),
            compiler_params=pltpu.CompilerParams(
                dimension_semantics=("parallel",),
                vmem_limit_bytes=vmem_limit),
            cost_estimate=cost,
        )

    args = (x_pad, wqkv, wo, w1, b1, w2, b2, wt, bt)
    try:
        out = jax.block_until_ready(build_call(True)(*args))
    except Exception:
        # Fallback if this Pallas build rejects single-buffered constant weights.
        out = build_call(False)(*args)

    return out[:B, :, :T]                                     # (B, A, T)


# --------------------------- deterministic params --------------------------- #

def _xavier(key, shape):
    fan_in, fan_out = shape[-2], shape[-1]
    limit = math.sqrt(6.0 / (fan_in + fan_out))
    return jax.random.uniform(key, shape, jnp.float32, -limit, limit)


def _sinusoidal_pos(S, D):
    pos = jnp.arange(S, dtype=jnp.float32)[:, None]
    i = jnp.arange(D, dtype=jnp.float32)[None, :]
    angle = pos / jnp.power(10000.0, (2.0 * jnp.floor(i / 2.0)) / D)
    return jnp.where((jnp.arange(D) % 2) == 0, jnp.sin(angle), jnp.cos(angle))


# ------------------------------ pure-JAX ref -------------------------------- #

def _reference(token_ids, emb, pos, p, tagger_w, tagger_b):
    x = emb[token_ids] + pos[None, :, :]
    d = x.shape[-1]
    q = x @ p['wq']; k = x @ p['wk']; v = x @ p['wv']
    s = jnp.einsum('bqd,bkd->bqk', q, k) / math.sqrt(d)
    a = jax.nn.softmax(s, axis=-1)
    h = x + jnp.einsum('bqk,bkd->bqd', a, v) @ p['wo']
    ff = jax.nn.relu(h @ p['w1'] + p['b1']) @ p['w2'] + p['b2']
    enc = h + ff
    tok_logits = jnp.einsum('bsd,adt->bast', enc, tagger_w) + tagger_b[None, :, None, :]
    summed = jnp.sum(tok_logits, axis=2)                     # (B, A, T)
    return jax.nn.log_softmax(summed, axis=-1)


# ---------------------------------- main ------------------------------------ #

if __name__ == "__main__":
    B, S, V, D, F, T, A = 2, 8, 50, 32, 64, 5, 4   # batch, seq, vocab, model, ffn, targets, aspects

    key = jax.random.PRNGKey(0)
    ks = jax.random.split(key, 12)

    emb = _xavier(ks[0], (V, D))
    enc_params = dict(
        wq=_xavier(ks[1], (D, D)), wk=_xavier(ks[2], (D, D)),
        wv=_xavier(ks[3], (D, D)), wo=_xavier(ks[4], (D, D)),
        w1=_xavier(ks[5], (D, F)), b1=jnp.zeros((1, F), jnp.float32),
        w2=_xavier(ks[6], (F, D)), b2=jnp.zeros((1, D), jnp.float32),
    )
    tagger_w = _xavier(ks[7], (A, D, T))
    tagger_b = jax.random.uniform(ks[8], (A, T), jnp.float32, -0.1, 0.1)
    pos = _sinusoidal_pos(S, D)

    token_ids = jax.random.randint(ks[9], (B, S), 0, V)

    out = joint_aspect_tagger_forward(token_ids, emb, pos, enc_params, tagger_w, tagger_b)
    out = jax.block_until_ready(out)

    ref = _reference(token_ids, emb, pos, enc_params, tagger_w, tagger_b)
    assert out.shape == (B, A, T), out.shape
    # tolerance covers MXU f32 multi-pass rounding / summation-order differences
    # vs the XLA reference (the softmax itself uses exact division now).
    err = float(jnp.max(jnp.abs(out - ref)))
    assert jnp.allclose(out, ref, atol=2e-3, rtol=2e-3), err
    # TODO(synk): predict() (argmax over targets per aspect) and the
    # OutputLayerType.Convolutions tagger variant are not implemented; only the
    # forward() / LinearSum path is covered.
    print("KERNEL_OK")
</pallas_src>

<mosaic_0001>
module attributes {stable_mosaic.version = 11 : i64} {
  func.func @_joint_kernel(%arg0: i32, %arg1: memref<2x8x128xf32, #tpu.memory_space<vmem>>, %arg2: memref<128x384xf32, #tpu.memory_space<vmem>>, %arg3: memref<128x128xf32, #tpu.memory_space<vmem>>, %arg4: memref<128x128xf32, #tpu.memory_space<vmem>>, %arg5: memref<1x128xf32, #tpu.memory_space<vmem>>, %arg6: memref<128x128xf32, #tpu.memory_space<vmem>>, %arg7: memref<1x128xf32, #tpu.memory_space<vmem>>, %arg8: memref<128x512xf32, #tpu.memory_space<vmem>>, %arg9: memref<1x512xf32, #tpu.memory_space<vmem>>, %arg10: memref<2x4x128xf32, #tpu.memory_space<vmem>>) attributes {dimension_semantics = [#tpu.dimension_semantics<parallel>], iteration_bounds = array<i64: 1>, scalar_prefetch = 0 : i64, scratch_operands = 0 : i64, tpu.core_type = #tpu.core_type<tc>, window_params = [{transform_indices = @transform_0, window_bounds = array<i64: 2, 8, 128>}, {pipeline_mode = #tpu.pipeline_mode<synchronous>, transform_indices = @transform_1, window_bounds = array<i64: 128, 384>}, {pipeline_mode = #tpu.pipeline_mode<synchronous>, transform_indices = @transform_2, window_bounds = array<i64: 128, 128>}, {pipeline_mode = #tpu.pipeline_mode<synchronous>, transform_indices = @transform_3, window_bounds = array<i64: 128, 128>}, {pipeline_mode = #tpu.pipeline_mode<synchronous>, transform_indices = @transform_4, window_bounds = array<i64: 1, 128>}, {pipeline_mode = #tpu.pipeline_mode<synchronous>, transform_indices = @transform_5, window_bounds = array<i64: 128, 128>}, {pipeline_mode = #tpu.pipeline_mode<synchronous>, transform_indices = @transform_6, window_bounds = array<i64: 1, 128>}, {pipeline_mode = #tpu.pipeline_mode<synchronous>, transform_indices = @transform_7, window_bounds = array<i64: 128, 512>}, {pipeline_mode = #tpu.pipeline_mode<synchronous>, transform_indices = @transform_8, window_bounds = array<i64: 1, 512>}, {transform_indices = @transform_9, window_bounds = array<i64: 2, 4, 128>}]} {
    %c0 = arith.constant 0 : index
    %c0_0 = arith.constant 0 : index
    %c0_1 = arith.constant 0 : index
    %0 = vector.load %arg1[%c0, %c0_0, %c0_1] : memref<2x8x128xf32, #tpu.memory_space<vmem>>, vector<2x8x128xf32>
    %1 = vector.shape_cast %0 : vector<2x8x128xf32> to vector<16x128xf32>
    %c0_2 = arith.constant 0 : index
    %c0_3 = arith.constant 0 : index
    %2 = vector.load %arg2[%c0_2, %c0_3] : memref<128x384xf32, #tpu.memory_space<vmem>>, vector<128x384xf32>
    %cst = arith.constant dense<0.000000e+00> : vector<16x384xf32>
    %3 = tpu.matmul %1, %2, %cst {dimension_numbers = #tpu.dot_dimension_numbers<[1], [0], [0], [1], [0, 0, 1, 1], [], []>} : vector<16x128xf32>, vector<128x384xf32>, vector<16x384xf32> -> vector<16x384xf32>
    %4 = vector.extract_strided_slice %3 {offsets = [0, 0], sizes = [16, 128], strides = [1, 1]} : vector<16x384xf32> to vector<16x128xf32>
    %cst_4 = arith.constant 0.176776692 : f32
    %5 = vector.broadcast %cst_4 : f32 to vector<16x128xf32>
    %6 = arith.mulf %4, %5 : vector<16x128xf32>
    %7 = vector.shape_cast %6 : vector<16x128xf32> to vector<2x8x128xf32>
    %8 = vector.extract_strided_slice %3 {offsets = [0, 128], sizes = [16, 128], strides = [1, 1]} : vector<16x384xf32> to vector<16x128xf32>
    %9 = vector.shape_cast %8 : vector<16x128xf32> to vector<2x8x128xf32>
    %10 = vector.extract_strided_slice %3 {offsets = [0, 256], sizes = [16, 128], strides = [1, 1]} : vector<16x384xf32> to vector<16x128xf32>
    %11 = vector.shape_cast %10 : vector<16x128xf32> to vector<2x8x128xf32>
    "tpu.trace_start"() <{level = 10 : i32, message = "bqd,bkd->bqk"}> : () -> ()
    %cst_5 = arith.constant dense<0.000000e+00> : vector<2x8x8xf32>
    %12 = tpu.matmul %7, %9, %cst_5 {dimension_numbers = #tpu.dot_dimension_numbers<[2], [2], [1], [1], [0, 0, 0, 1, 1, 1], [0], [0]>} : vector<2x8x128xf32>, vector<2x8x128xf32>, vector<2x8x8xf32> -> vector<2x8x8xf32>
    "tpu.trace_stop"() : () -> ()
    %cst_6 = arith.constant dense<0xFF800000> : vector<2x8xf32>
    %13 = vector.multi_reduction <maximumf>, %12, %cst_6 [2] : vector<2x8x8xf32> to vector<2x8xf32>
    %14 = vector.shape_cast %13 : vector<2x8xf32> to vector<2x8x1xf32>
    %15 = vector.broadcast %14 : vector<2x8x1xf32> to vector<2x8x8xf32>
    %16 = arith.subf %12, %15 : vector<2x8x8xf32>
    %17 = math.exp %16 : vector<2x8x8xf32>
    %cst_7 = arith.constant dense<0.000000e+00> : vector<2x8xf32>
    %18 = vector.multi_reduction <add>, %17, %cst_7 [2] : vector<2x8x8xf32> to vector<2x8xf32>
    %19 = vector.shape_cast %18 : vector<2x8xf32> to vector<2x8x1xf32>
    %20 = vector.broadcast %19 : vector<2x8x1xf32> to vector<2x8x8xf32>
    %21 = arith.divf %17, %20 : vector<2x8x8xf32>
    "tpu.trace_start"() <{level = 10 : i32, message = "bqk,bkd->bqd"}> : () -> ()
    %cst_8 = arith.constant dense<0.000000e+00> : vector<2x8x128xf32>
    %22 = tpu.matmul %21, %11, %cst_8 {dimension_numbers = #tpu.dot_dimension_numbers<[2], [1], [1], [2], [0, 0, 0, 1, 1, 2], [0], [0]>} : vector<2x8x8xf32>, vector<2x8x128xf32>, vector<2x8x128xf32> -> vector<2x8x128xf32>
    "tpu.trace_stop"() : () -> ()
    %23 = vector.shape_cast %22 : vector<2x8x128xf32> to vector<16x128xf32>
    %c0_9 = arith.constant 0 : index
    %c0_10 = arith.constant 0 : index
    %24 = vector.load %arg3[%c0_9, %c0_10] : memref<128x128xf32, #tpu.memory_space<vmem>>, vector<128x128xf32>
    %cst_11 = arith.constant dense<0.000000e+00> : vector<16x128xf32>
    %25 = tpu.matmul %23, %24, %cst_11 {dimension_numbers = #tpu.dot_dimension_numbers<[1], [0], [0], [1], [0, 0, 1, 1], [], []>} : vector<16x128xf32>, vector<128x128xf32>, vector<16x128xf32> -> vector<16x128xf32>
    %26 = arith.addf %1, %25 : vector<16x128xf32>
    %c0_12 = arith.constant 0 : index
    %c0_13 = arith.constant 0 : index
    %27 = vector.load %arg4[%c0_12, %c0_13] : memref<128x128xf32, #tpu.memory_space<vmem>>, vector<128x128xf32>
    %cst_14 = arith.constant dense<0.000000e+00> : vector<16x128xf32>
    %28 = tpu.matmul %26, %27, %cst_14 {dimension_numbers = #tpu.dot_dimension_numbers<[1], [0], [0], [1], [0, 0, 1, 1], [], []>} : vector<16x128xf32>, vector<128x128xf32>, vector<16x128xf32> -> vector<16x128xf32>
    %c0_15 = arith.constant 0 : index
    %c0_16 = arith.constant 0 : index
    %29 = vector.load %arg5[%c0_15, %c0_16] : memref<1x128xf32, #tpu.memory_space<vmem>>, vector<1x128xf32>
    %30 = vector.broadcast %29 : vector<1x128xf32> to vector<16x128xf32>
    %31 = arith.addf %28, %30 : vector<16x128xf32>
    %cst_17 = arith.constant 0.000000e+00 : f32
    %32 = vector.broadcast %cst_17 : f32 to vector<16x128xf32>
    %33 = arith.maximumf %31, %32 : vector<16x128xf32>
    %c0_18 = arith.constant 0 : index
    %c0_19 = arith.constant 0 : index
    %34 = vector.load %arg6[%c0_18, %c0_19] : memref<128x128xf32, #tpu.memory_space<vmem>>, vector<128x128xf32>
    %cst_20 = arith.constant dense<0.000000e+00> : vector<16x128xf32>
    %35 = tpu.matmul %33, %34, %cst_20 {dimension_numbers = #tpu.dot_dimension_numbers<[1], [0], [0], [1], [0, 0, 1, 1], [], []>} : vector<16x128xf32>, vector<128x128xf32>, vector<16x128xf32> -> vector<16x128xf32>
    %36 = arith.addf %26, %35 : vector<16x128xf32>
    %c0_21 = arith.constant 0 : index
    %c0_22 = arith.constant 0 : index
    %37 = vector.load %arg7[%c0_21, %c0_22] : memref<1x128xf32, #tpu.memory_space<vmem>>, vector<1x128xf32>
    %38 = vector.broadcast %37 : vector<1x128xf32> to vector<16x128xf32>
    %39 = arith.addf %36, %38 : vector<16x128xf32>
    %40 = vector.shape_cast %39 : vector<16x128xf32> to vector<2x8x128xf32>
    %cst_23 = arith.constant dense<0.000000e+00> : vector<2x128xf32>
    %41 = vector.multi_reduction <add>, %40, %cst_23 [1] : vector<2x8x128xf32> to vector<2x128xf32>
    %c0_24 = arith.constant 0 : index
    %c0_25 = arith.constant 0 : index
    %42 = vector.load %arg8[%c0_24, %c0_25] : memref<128x512xf32, #tpu.memory_space<vmem>>, vector<128x512xf32>
    %cst_26 = arith.constant dense<0.000000e+00> : vector<2x512xf32>
    %43 = tpu.matmul %41, %42, %cst_26 {dimension_numbers = #tpu.dot_dimension_numbers<[1], [0], [0], [1], [0, 0, 1, 1], [], []>} : vector<2x128xf32>, vector<128x512xf32>, vector<2x512xf32> -> vector<2x512xf32>
    %c0_27 = arith.constant 0 : index
    %c0_28 = arith.constant 0 : index
    %44 = vector.load %arg9[%c0_27, %c0_28] : memref<1x512xf32, #tpu.memory_space<vmem>>, vector<1x512xf32>
    %cst_29 = arith.constant 8.000000e+00 : f32
    %45 = vector.broadcast %cst_29 : f32 to vector<1x512xf32>
    %46 = arith.mulf %45, %44 : vector<1x512xf32>
    %47 = vector.broadcast %46 : vector<1x512xf32> to vector<2x512xf32>
    %48 = arith.addf %43, %47 : vector<2x512xf32>
    %49 = vector.shape_cast %48 : vector<2x512xf32> to vector<2x4x128xf32>
    %50 = tpu.iota {dimensions = array<i32: 2>} : vector<1x1x128xi32>
    %c5_i32 = arith.constant 5 : i32
    %51 = vector.broadcast %c5_i32 : i32 to vector<1x1x128xi32>
    %52 = arith.cmpi slt, %50, %51 : vector<1x1x128xi32>
    %cst_30 = arith.constant 0xFF800000 : f32
    %53 = vector.shape_cast %52 : vector<1x1x128xi1> to vector<1x1x128xi1>
    %54 = vector.broadcast %53 : vector<1x1x128xi1> to vector<2x4x128xi1>
    %55 = vector.broadcast %cst_30 : f32 to vector<2x4x128xf32>
    %56 = arith.select %54, %49, %55 : vector<2x4x128xi1>, vector<2x4x128xf32>
    %cst_31 = arith.constant dense<0xFF800000> : vector<2x4xf32>
    %57 = vector.multi_reduction <maximumf>, %56, %cst_31 [2] : vector<2x4x128xf32> to vector<2x4xf32>
    %58 = vector.shape_cast %57 : vector<2x4xf32> to vector<2x4x1xf32>
    %59 = vector.broadcast %58 : vector<2x4x1xf32> to vector<2x4x128xf32>
    %60 = arith.subf %56, %59 : vector<2x4x128xf32>
    %61 = math.exp %60 : vector<2x4x128xf32>
    %cst_32 = arith.constant dense<0.000000e+00> : vector<2x4xf32>
    %62 = vector.multi_reduction <add>, %61, %cst_32 [2] : vector<2x4x128xf32> to vector<2x4xf32>
    %63 = vector.shape_cast %62 : vector<2x4xf32> to vector<2x4x1xf32>
    %64 = math.log %63 : vector<2x4x1xf32>
    %65 = arith.addf %58, %64 : vector<2x4x1xf32>
    %66 = vector.broadcast %65 : vector<2x4x1xf32> to vector<2x4x128xf32>
    %67 = arith.subf %56, %66 : vector<2x4x128xf32>
    %c0_33 = arith.constant 0 : index
    %c0_34 = arith.constant 0 : index
    %c0_35 = arith.constant 0 : index
    %68 = vector.load %arg10[%c0_33, %c0_34, %c0_35] : memref<2x4x128xf32, #tpu.memory_space<vmem>>, vector<2x4x128xf32>
    tpu.vector_store %arg10[%c0_33, %c0_34, %c0_35], %67 {strides = array<i32>} : memref<2x4x128xf32, #tpu.memory_space<vmem>>, vector<2x4x128xf32>,
    return
  }
  func.func @transform_0(%arg0: i32) -> (i32, i32, i32) {
    %c0_i32 = arith.constant 0 : i32
    %c0_i32_0 = arith.constant 0 : i32
    %c0_i32_1 = arith.constant 0 : i32
    return %arg0, %c0_i32, %c0_i32_0 : i32, i32, i32
  }
  func.func @transform_1(%arg0: i32) -> (i32, i32) {
    %c0_i32 = arith.constant 0 : i32
    %c0_i32_0 = arith.constant 0 : i32
    %c0_i32_1 = arith.constant 0 : i32
    return %c0_i32, %c0_i32_0 : i32, i32
  }
  func.func @transform_2(%arg0: i32) -> (i32, i32) {
    %c0_i32 = arith.constant 0 : i32
    %c0_i32_0 = arith.constant 0 : i32
    %c0_i32_1 = arith.constant 0 : i32
    return %c0_i32, %c0_i32_0 : i32, i32
  }
  func.func @transform_3(%arg0: i32) -> (i32, i32) {
    %c0_i32 = arith.constant 0 : i32
    %c0_i32_0 = arith.constant 0 : i32
    %c0_i32_1 = arith.constant 0 : i32
    return %c0_i32, %c0_i32_0 : i32, i32
  }
  func.func @transform_4(%arg0: i32) -> (i32, i32) {
    %c0_i32 = arith.constant 0 : i32
    %c0_i32_0 = arith.constant 0 : i32
    %c0_i32_1 = arith.constant 0 : i32
    return %c0_i32, %c0_i32_0 : i32, i32
  }
  func.func @transform_5(%arg0: i32) -> (i32, i32) {
    %c0_i32 = arith.constant 0 : i32
    %c0_i32_0 = arith.constant 0 : i32
    %c0_i32_1 = arith.constant 0 : i32
    return %c0_i32, %c0_i32_0 : i32, i32
  }
  func.func @transform_6(%arg0: i32) -> (i32, i32) {
    %c0_i32 = arith.constant 0 : i32
    %c0_i32_0 = arith.constant 0 : i32
    %c0_i32_1 = arith.constant 0 : i32
    return %c0_i32, %c0_i32_0 : i32, i32
  }
  func.func @transform_7(%arg0: i32) -> (i32, i32) {
    %c0_i32 = arith.constant 0 : i32
    %c0_i32_0 = arith.constant 0 : i32
    %c0_i32_1 = arith.constant 0 : i32
    return %c0_i32, %c0_i32_0 : i32, i32
  }
  func.func @transform_8(%arg0: i32) -> (i32, i32) {
    %c0_i32 = arith.constant 0 : i32
    %c0_i32_0 = arith.constant 0 : i32
    %c0_i32_1 = arith.constant 0 : i32
    return %c0_i32, %c0_i32_0 : i32, i32
  }
  func.func @transform_9(%arg0: i32) -> (i32, i32, i32) {
    %c0_i32 = arith.constant 0 : i32
    %c0_i32_0 = arith.constant 0 : i32
    %c0_i32_1 = arith.constant 0 : i32
    return %arg0, %c0_i32, %c0_i32_0 : i32, i32, i32
  }
}

module attributes {stable_mosaic.version = 11 : i64} {
  func.func @_joint_kernel(%arg0: i32, %arg1: memref<2x8x128xf32, #tpu.memory_space<vmem>>, %arg2: memref<128x384xf32, #tpu.memory_space<vmem>>, %arg3: memref<128x128xf32, #tpu.memory_space<vmem>>, %arg4: memref<128x128xf32, #tpu.memory_space<vmem>>, %arg5: memref<1x128xf32, #tpu.memory_space<vmem>>, %arg6: memref<128x128xf32, #tpu.memory_space<vmem>>, %arg7: memref<1x128xf32, #tpu.memory_space<vmem>>, %arg8: memref<128x512xf32, #tpu.memory_space<vmem>>, %arg9: memref<1x512xf32, #tpu.memory_space<vmem>>, %arg10: memref<2x4x128xf32, #tpu.memory_space<vmem>>) attributes {dimension_semantics = [#tpu.dimension_semantics<parallel>], iteration_bounds = array<i64: 1>, scalar_prefetch = 0 : i64, scratch_operands = 0 : i64, tpu.core_type = #tpu.core_type<tc>, window_params = [{transform_indices = @transform_0, window_bounds = array<i64: 2, 8, 128>}, {pipeline_mode = #tpu.pipeline_mode<synchronous>, transform_indices = @transform_1, window_bounds = array<i64: 128, 384>}, {pipeline_mode = #tpu.pipeline_mode<synchronous>, transform_indices = @transform_2, window_bounds = array<i64: 128, 128>}, {pipeline_mode = #tpu.pipeline_mode<synchronous>, transform_indices = @transform_3, window_bounds = array<i64: 128, 128>}, {pipeline_mode = #tpu.pipeline_mode<synchronous>, transform_indices = @transform_4, window_bounds = array<i64: 1, 128>}, {pipeline_mode = #tpu.pipeline_mode<synchronous>, transform_indices = @transform_5, window_bounds = array<i64: 128, 128>}, {pipeline_mode = #tpu.pipeline_mode<synchronous>, transform_indices = @transform_6, window_bounds = array<i64: 1, 128>}, {pipeline_mode = #tpu.pipeline_mode<synchronous>, transform_indices = @transform_7, window_bounds = array<i64: 128, 512>}, {pipeline_mode = #tpu.pipeline_mode<synchronous>, transform_indices = @transform_8, window_bounds = array<i64: 1, 512>}, {transform_indices = @transform_9, window_bounds = array<i64: 2, 4, 128>}]} {
    %c0 = arith.constant 0 : index
    %c0_0 = arith.constant 0 : index
    %c0_1 = arith.constant 0 : index
    %0 = vector.load %arg1[%c0, %c0_0, %c0_1] : memref<2x8x128xf32, #tpu.memory_space<vmem>>, vector<2x8x128xf32>
    %1 = vector.shape_cast %0 : vector<2x8x128xf32> to vector<16x128xf32>
    %c0_2 = arith.constant 0 : index
    %c0_3 = arith.constant 0 : index
    %2 = vector.load %arg2[%c0_2, %c0_3] : memref<128x384xf32, #tpu.memory_space<vmem>>, vector<128x384xf32>
    %cst = arith.constant dense<0.000000e+00> : vector<16x384xf32>
    %3 = tpu.matmul %1, %2, %cst {dimension_numbers = #tpu.dot_dimension_numbers<[1], [0], [0], [1], [0, 0, 1, 1], [], []>} : vector<16x128xf32>, vector<128x384xf32>, vector<16x384xf32> -> vector<16x384xf32>
    %4 = vector.extract_strided_slice %3 {offsets = [0, 0], sizes = [16, 128], strides = [1, 1]} : vector<16x384xf32> to vector<16x128xf32>
    %cst_4 = arith.constant 0.176776692 : f32
    %5 = vector.broadcast %cst_4 : f32 to vector<16x128xf32>
    %6 = arith.mulf %4, %5 : vector<16x128xf32>
    %7 = vector.shape_cast %6 : vector<16x128xf32> to vector<2x8x128xf32>
    %8 = vector.extract_strided_slice %3 {offsets = [0, 128], sizes = [16, 128], strides = [1, 1]} : vector<16x384xf32> to vector<16x128xf32>
    %9 = vector.shape_cast %8 : vector<16x128xf32> to vector<2x8x128xf32>
    %10 = vector.extract_strided_slice %3 {offsets = [0, 256], sizes = [16, 128], strides = [1, 1]} : vector<16x384xf32> to vector<16x128xf32>
    %11 = vector.shape_cast %10 : vector<16x128xf32> to vector<2x8x128xf32>
    "tpu.trace_start"() <{level = 10 : i32, message = "bqd,bkd->bqk"}> : () -> ()
    %cst_5 = arith.constant dense<0.000000e+00> : vector<2x8x8xf32>
    %12 = tpu.matmul %7, %9, %cst_5 {dimension_numbers = #tpu.dot_dimension_numbers<[2], [2], [1], [1], [0, 0, 0, 1, 1, 1], [0], [0]>} : vector<2x8x128xf32>, vector<2x8x128xf32>, vector<2x8x8xf32> -> vector<2x8x8xf32>
    "tpu.trace_stop"() : () -> ()
    %cst_6 = arith.constant dense<0xFF800000> : vector<2x8xf32>
    %13 = vector.multi_reduction <maximumf>, %12, %cst_6 [2] : vector<2x8x8xf32> to vector<2x8xf32>
    %14 = vector.shape_cast %13 : vector<2x8xf32> to vector<2x8x1xf32>
    %15 = vector.broadcast %14 : vector<2x8x1xf32> to vector<2x8x8xf32>
    %16 = arith.subf %12, %15 : vector<2x8x8xf32>
    %17 = math.exp %16 : vector<2x8x8xf32>
    %cst_7 = arith.constant dense<0.000000e+00> : vector<2x8xf32>
    %18 = vector.multi_reduction <add>, %17, %cst_7 [2] : vector<2x8x8xf32> to vector<2x8xf32>
    %19 = vector.shape_cast %18 : vector<2x8xf32> to vector<2x8x1xf32>
    %20 = vector.broadcast %19 : vector<2x8x1xf32> to vector<2x8x8xf32>
    %21 = arith.divf %17, %20 : vector<2x8x8xf32>
    "tpu.trace_start"() <{level = 10 : i32, message = "bqk,bkd->bqd"}> : () -> ()
    %cst_8 = arith.constant dense<0.000000e+00> : vector<2x8x128xf32>
    %22 = tpu.matmul %21, %11, %cst_8 {dimension_numbers = #tpu.dot_dimension_numbers<[2], [1], [1], [2], [0, 0, 0, 1, 1, 2], [0], [0]>} : vector<2x8x8xf32>, vector<2x8x128xf32>, vector<2x8x128xf32> -> vector<2x8x128xf32>
    "tpu.trace_stop"() : () -> ()
    %23 = vector.shape_cast %22 : vector<2x8x128xf32> to vector<16x128xf32>
    %c0_9 = arith.constant 0 : index
    %c0_10 = arith.constant 0 : index
    %24 = vector.load %arg3[%c0_9, %c0_10] : memref<128x128xf32, #tpu.memory_space<vmem>>, vector<128x128xf32>
    %cst_11 = arith.constant dense<0.000000e+00> : vector<16x128xf32>
    %25 = tpu.matmul %23, %24, %cst_11 {dimension_numbers = #tpu.dot_dimension_numbers<[1], [0], [0], [1], [0, 0, 1, 1], [], []>} : vector<16x128xf32>, vector<128x128xf32>, vector<16x128xf32> -> vector<16x128xf32>
    %26 = arith.addf %1, %25 : vector<16x128xf32>
    %c0_12 = arith.constant 0 : index
    %c0_13 = arith.constant 0 : index
    %27 = vector.load %arg4[%c0_12, %c0_13] : memref<128x128xf32, #tpu.memory_space<vmem>>, vector<128x128xf32>
    %cst_14 = arith.constant dense<0.000000e+00> : vector<16x128xf32>
    %28 = tpu.matmul %26, %27, %cst_14 {dimension_numbers = #tpu.dot_dimension_numbers<[1], [0], [0], [1], [0, 0, 1, 1], [], []>} : vector<16x128xf32>, vector<128x128xf32>, vector<16x128xf32> -> vector<16x128xf32>
    %c0_15 = arith.constant 0 : index
    %c0_16 = arith.constant 0 : index
    %29 = vector.load %arg5[%c0_15, %c0_16] : memref<1x128xf32, #tpu.memory_space<vmem>>, vector<1x128xf32>
    %30 = vector.broadcast %29 : vector<1x128xf32> to vector<16x128xf32>
    %31 = arith.addf %28, %30 : vector<16x128xf32>
    %cst_17 = arith.constant 0.000000e+00 : f32
    %32 = vector.broadcast %cst_17 : f32 to vector<16x128xf32>
    %33 = arith.maximumf %31, %32 : vector<16x128xf32>
    %c0_18 = arith.constant 0 : index
    %c0_19 = arith.constant 0 : index
    %34 = vector.load %arg6[%c0_18, %c0_19] : memref<128x128xf32, #tpu.memory_space<vmem>>, vector<128x128xf32>
    %cst_20 = arith.constant dense<0.000000e+00> : vector<16x128xf32>
    %35 = tpu.matmul %33, %34, %cst_20 {dimension_numbers = #tpu.dot_dimension_numbers<[1], [0], [0], [1], [0, 0, 1, 1], [], []>} : vector<16x128xf32>, vector<128x128xf32>, vector<16x128xf32> -> vector<16x128xf32>
    %36 = arith.addf %26, %35 : vector<16x128xf32>
    %c0_21 = arith.constant 0 : index
    %c0_22 = arith.constant 0 : index
    %37 = vector.load %arg7[%c0_21, %c0_22] : memref<1x128xf32, #tpu.memory_space<vmem>>, vector<1x128xf32>
    %38 = vector.broadcast %37 : vector<1x128xf32> to vector<16x128xf32>
    %39 = arith.addf %36, %38 : vector<16x128xf32>
    %40 = vector.shape_cast %39 : vector<16x128xf32> to vector<2x8x128xf32>
    %cst_23 = arith.constant dense<0.000000e+00> : vector<2x128xf32>
    %41 = vector.multi_reduction <add>, %40, %cst_23 [1] : vector<2x8x128xf32> to vector<2x128xf32>
    %c0_24 = arith.constant 0 : index
    %c0_25 = arith.constant 0 : index
    %42 = vector.load %arg8[%c0_24, %c0_25] : memref<128x512xf32, #tpu.memory_space<vmem>>, vector<128x512xf32>
    %cst_26 = arith.constant dense<0.000000e+00> : vector<2x512xf32>
    %43 = tpu.matmul %41, %42, %cst_26 {dimension_numbers = #tpu.dot_dimension_numbers<[1], [0], [0], [1], [0, 0, 1, 1], [], []>} : vector<2x128xf32>, vector<128x512xf32>, vector<2x512xf32> -> vector<2x512xf32>
    %c0_27 = arith.constant 0 : index
    %c0_28 = arith.constant 0 : index
    %44 = vector.load %arg9[%c0_27, %c0_28] : memref<1x512xf32, #tpu.memory_space<vmem>>, vector<1x512xf32>
    %cst_29 = arith.constant 8.000000e+00 : f32
    %45 = vector.broadcast %cst_29 : f32 to vector<1x512xf32>
    %46 = arith.mulf %45, %44 : vector<1x512xf32>
    %47 = vector.broadcast %46 : vector<1x512xf32> to vector<2x512xf32>
    %48 = arith.addf %43, %47 : vector<2x512xf32>
    %49 = vector.shape_cast %48 : vector<2x512xf32> to vector<2x4x128xf32>
    %50 = tpu.iota {dimensions = array<i32: 2>} : vector<1x1x128xi32>
    %c5_i32 = arith.constant 5 : i32
    %51 = vector.broadcast %c5_i32 : i32 to vector<1x1x128xi32>
    %52 = arith.cmpi slt, %50, %51 : vector<1x1x128xi32>
    %cst_30 = arith.constant 0xFF800000 : f32
    %53 = vector.shape_cast %52 : vector<1x1x128xi1> to vector<1x1x128xi1>
    %54 = vector.broadcast %53 : vector<1x1x128xi1> to vector<2x4x128xi1>
    %55 = vector.broadcast %cst_30 : f32 to vector<2x4x128xf32>
    %56 = arith.select %54, %49, %55 : vector<2x4x128xi1>, vector<2x4x128xf32>
    %cst_31 = arith.constant dense<0xFF800000> : vector<2x4xf32>
    %57 = vector.multi_reduction <maximumf>, %56, %cst_31 [2] : vector<2x4x128xf32> to vector<2x4xf32>
    %58 = vector.shape_cast %57 : vector<2x4xf32> to vector<2x4x1xf32>
    %59 = vector.broadcast %58 : vector<2x4x1xf32> to vector<2x4x128xf32>
    %60 = arith.subf %56, %59 : vector<2x4x128xf32>
    %61 = math.exp %60 : vector<2x4x128xf32>
    %cst_32 = arith.constant dense<0.000000e+00> : vector<2x4xf32>
    %62 = vector.multi_reduction <add>, %61, %cst_32 [2] : vector<2x4x128xf32> to vector<2x4xf32>
    %63 = vector.shape_cast %62 : vector<2x4xf32> to vector<2x4x1xf32>
    %64 = math.log %63 : vector<2x4x1xf32>
    %65 = arith.addf %58, %64 : vector<2x4x1xf32>
    %66 = vector.broadcast %65 : vector<2x4x1xf32> to vector<2x4x128xf32>
    %67 = arith.subf %56, %66 : vector<2x4x128xf32>
    %c0_33 = arith.constant 0 : index
    %c0_34 = arith.constant 0 : index
    %c0_35 = arith.constant 0 : index
    %68 = vector.load %arg10[%c0_33, %c0_34, %c0_35] : memref<2x4x128xf32, #tpu.memory_space<vmem>>, vector<2x4x128xf32>
    tpu.vector_store %arg10[%c0_33, %c0_34, %c0_35], %67 {strides = array<i32>} : memref<2x4x128xf32, #tpu.memory_space<vmem>>, vector<2x4x128xf32>,
    return
  }
  func.func @transform_0(%arg0: i32) -> (i32, i32, i32) {
    %c0_i32 = arith.constant 0 : i32
    %c0_i32_0 = arith.constant 0 : i32
    %c0_i32_1 = arith.constant 0 : i32
    return %arg0, %c0_i32, %c0_i32_0 : i32, i32, i32
  }
  func.func @transform_1(%arg0: i32) -> (i32, i32) {
    %c0_i32 = arith.constant 0 : i32
    %c0_i32_0 = arith.constant 0 : i32
    %c0_i32_1 = arith.constant 0 : i32
    return %c0_i32, %c0_i32_0 : i32, i32
  }
  func.func @transform_2(%arg0: i32) -> (i32, i32) {
    %c0_i32 = arith.constant 0 : i32
    %c0_i32_0 = arith.constant 0 : i32
    %c0_i32_1 = arith.constant 0 : i32
    return %c0_i32, %c0_i32_0 : i32, i32
  }
  func.func @transform_3(%arg0: i32) -> (i32, i32) {
    %c0_i32 = arith.constant 0 : i32
    %c0_i32_0 = arith.constant 0 : i32
    %c0_i32_1 = arith.constant 0 : i32
    return %c0_i32, %c0_i32_0 : i32, i32
  }
  func.func @transform_4(%arg0: i32) -> (i32, i32) {
    %c0_i32 = arith.constant 0 : i32
    %c0_i32_0 = arith.constant 0 : i32
    %c0_i32_1 = arith.constant 0 : i32
    return %c0_i32, %c0_i32_0 : i32, i32
  }
  func.func @transform_5(%arg0: i32) -> (i32, i32) {
    %c0_i32 = arith.constant 0 : i32
    %c0_i32_0 = arith.constant 0 : i32
    %c0_i32_1 = arith.constant 0 : i32
    return %c0_i32, %c0_i32_0 : i32, i32
  }
  func.func @transform_6(%arg0: i32) -> (i32, i32) {
    %c0_i32 = arith.constant 0 : i32
    %c0_i32_0 = arith.constant 0 : i32
    %c0_i32_1 = arith.constant 0 : i32
    return %c0_i32, %c0_i32_0 : i32, i32
  }
  func.func @transform_7(%arg0: i32) -> (i32, i32) {
    %c0_i32 = arith.constant 0 : i32
    %c0_i32_0 = arith.constant 0 : i32
    %c0_i32_1 = arith.constant 0 : i32
    return %c0_i32, %c0_i32_0 : i32, i32
  }
  func.func @transform_8(%arg0: i32) -> (i32, i32) {
    %c0_i32 = arith.constant 0 : i32
    %c0_i32_0 = arith.constant 0 : i32
    %c0_i32_1 = arith.constant 0 : i32
    return %c0_i32, %c0_i32_0 : i32, i32
  }
  func.func @transform_9(%arg0: i32) -> (i32, i32, i32) {
    %c0_i32 = arith.constant 0 : i32
    %c0_i32_0 = arith.constant 0 : i32
    %c0_i32_1 = arith.constant 0 : i32
    return %arg0, %c0_i32, %c0_i32_0 : i32, i32, i32
  }
}

</mosaic_0001>

<llo_original>
// kernel: tpu_custom_call.1
$region0: #{tpu_custom_call.1}
  #allocation0 [shape = 'u32[]', space=smem, size = 0x4, offset = 0x4, fixed_abs, tag = 'smem constant byte address 0x4 - core index']
  #allocation1 [shape = 'u32[144,128]{1,0:T(1,128)}', space=vmem, size = 0x12000, scoped, tag = 'internal scratch']
  %s0 = inlined_call_operand.hbm [shape: f32[2,8,128], index: 0, kind: input, shape index: {}]
  %s1 = inlined_call_operand.hbm [shape: f32[128,384], index: 1, kind: input, shape index: {}]
  %s2 = inlined_call_operand.hbm [shape: f32[128,128], index: 2, kind: input, shape index: {}]
  %s3 = inlined_call_operand.hbm [shape: f32[128,128], index: 3, kind: input, shape index: {}]
  %s4 = inlined_call_operand.vmem [shape: f32[1,128], index: 4, kind: input, shape index: {}]
  %s5 = inlined_call_operand.hbm [shape: f32[128,128], index: 5, kind: input, shape index: {}]
  %s6 = inlined_call_operand.vmem [shape: f32[1,128], index: 6, kind: input, shape index: {}]
  %s7 = inlined_call_operand.hbm [shape: f32[128,512], index: 7, kind: input, shape index: {}]
  %s8 = inlined_call_operand.vmem [shape: f32[1,512], index: 8, kind: input, shape index: {}]
  %s9 = inlined_call_operand.hbm [shape: f32[2,4,128], index: 9, kind: output, shape index: {}]
  %s10 = sld [smem:[#allocation0]]
  $region70: #{tpu_custom_call.1} parent=0
    _
  %s12 = ssub.s32 1, %s10
  %s13 = scalar_select 0, %s12, %s10
  $region1: #{tpu_custom_call.1} parent=0
    #allocation2 [shape = 'u8[8192]{0}', space=vmem, size = 0x2000, scoped, tag = 'input window, operand 0, single buffered']
    #allocation3 [shape = 's32[1]{0}', space=sflag, size = 0x4, scoped, tag = 'scoped memory for tpu_custom_call.1']
    #allocation4 [shape = 's32[1]{0}', space=sflag, size = 0x4, scoped, tag = 'scoped memory for tpu_custom_call.1']
    #allocation5 [shape = 'u8[196608]{0}', space=vmem, size = 0x30000, scoped, tag = 'input window, operand 1, single buffered']
    #allocation6 [shape = 's32[1]{0}', space=sflag, size = 0x4, scoped, tag = 'scoped memory for tpu_custom_call.1']
    #allocation7 [shape = 'u8[65536]{0}', space=vmem, size = 0x10000, scoped, tag = 'input window, operand 2, single buffered']
    #allocation8 [shape = 'u8[65536]{0}', space=vmem, size = 0x10000, scoped, tag = 'input window, operand 3, single buffered']
    #allocation9 [shape = 's32[1]{0}', space=sflag, size = 0x4, scoped, tag = 'scoped memory for tpu_custom_call.1']
    #allocation10 [shape = 'u8[65536]{0}', space=vmem, size = 0x10000, scoped, tag = 'input window, operand 5, single buffered']
    #allocation11 [shape = 'u8[262144]{0}', space=vmem, size = 0x40000, scoped, tag = 'input window, operand 7, single buffered']
    #allocation12 [shape = 's32[1]{0}', space=sflag, size = 0x4, scoped, tag = 'scoped memory for tpu_custom_call.1']
    #allocation13 [shape = 'u8[4096]{0}', space=vmem, size = 0x1000, scoped, tag = 'output window, operand 0, single buffered']
    %14 = vsyncpa [#allocation3], 0
    %15 = vsyncpa [#allocation6], 0
    %16 = vsyncpa [#allocation9], 0
    %17 = vsyncpa [#allocation12], 0
    %18 = vsyncpa [#allocation4], 0
    // Predicated region
    $region2: #{tpu_custom_call.1} parent=1 // pred_check
      _
    $region3: #{tpu_custom_call.1} parent=1 // pred_check_branch
      %20 = sbr.rel (0) target = $region5
    $region4: #{tpu_custom_call.1} parent=1 // pred_region
      %s22 = ssub.s32 256, 256
      %23 = vsyncadd [#allocation3], %s22
      %s24 = sshll.u32 [#allocation2], 4
      %s25 = int_to_ptr.vmem [resolvable:$true] %s24
      %30 = dma.hbm_to_vmem [thread:$0]  %s0, 256, %s25, [#allocation3], 128, 128, 8
    $region5: #{tpu_custom_call.1} parent=1 // pred_fallthru
      _
    // Predicated region
    $region6: #{tpu_custom_call.1} parent=1 // pred_check
      _
    $region7: #{tpu_custom_call.1} parent=1 // pred_check_branch
      %32 = sbr.rel (0) target = $region9
    $region8: #{tpu_custom_call.1} parent=1 // pred_region
      %s34 = ssub.s32 6144, 6144
      %35 = vsyncadd [#allocation6], %s34
      %s36 = sshll.u32 [#allocation5], 4
      %s37 = int_to_ptr.vmem [resolvable:$true] %s36
      %42 = dma.hbm_to_vmem [thread:$0]  %s1, 6144, %s37, [#allocation6], 384, 384, 24
    $region9: #{tpu_custom_call.1} parent=1 // pred_fallthru
      _
    // Predicated region
    $region10: #{tpu_custom_call.1} parent=1 // pred_check
      _
    $region11: #{tpu_custom_call.1} parent=1 // pred_check_branch
      %44 = sbr.rel (0) target = $region13
    $region12: #{tpu_custom_call.1} parent=1 // pred_region
      %s46 = ssub.s32 2048, 2048
      %47 = vsyncadd [#allocation6], %s46
      %s48 = sshll.u32 [#allocation7], 4
      %s49 = int_to_ptr.vmem [resolvable:$true] %s48
      %54 = dma.hbm_to_vmem [thread:$0]  %s2, 2048, %s49, [#allocation6], 128, 128, 8
    $region13: #{tpu_custom_call.1} parent=1 // pred_fallthru
      _
    // Predicated region
    $region14: #{tpu_custom_call.1} parent=1 // pred_check
      _
    $region15: #{tpu_custom_call.1} parent=1 // pred_check_branch
      %56 = sbr.rel (0) target = $region17
    $region16: #{tpu_custom_call.1} parent=1 // pred_region
      %s58 = ssub.s32 2048, 2048
      %59 = vsyncadd [#allocation9], %s58
      %s60 = sshll.u32 [#allocation8], 4
      %s61 = int_to_ptr.vmem [resolvable:$true] %s60
      %66 = dma.hbm_to_vmem [thread:$0]  %s3, 2048, %s61, [#allocation9], 128, 128, 8
    $region17: #{tpu_custom_call.1} parent=1 // pred_fallthru
      _
    // Predicated region
    $region18: #{tpu_custom_call.1} parent=1 // pred_check
      _
    $region19: #{tpu_custom_call.1} parent=1 // pred_check_branch
      %68 = sbr.rel (0) target = $region21
    $region20: #{tpu_custom_call.1} parent=1 // pred_region
      _
    $region21: #{tpu_custom_call.1} parent=1 // pred_fallthru
      _
    // Predicated region
    $region22: #{tpu_custom_call.1} parent=1 // pred_check
      _
    $region23: #{tpu_custom_call.1} parent=1 // pred_check_branch
      %70 = sbr.rel (0) target = $region25
    $region24: #{tpu_custom_call.1} parent=1 // pred_region
      %s72 = ssub.s32 2048, 2048
      %73 = vsyncadd [#allocation9], %s72
      %s74 = sshll.u32 [#allocation10], 4
      %s75 = int_to_ptr.vmem [resolvable:$true] %s74
      %80 = dma.hbm_to_vmem [thread:$0]  %s5, 2048, %s75, [#allocation9], 128, 128, 8
    $region25: #{tpu_custom_call.1} parent=1 // pred_fallthru
      _
    // Predicated region
    $region26: #{tpu_custom_call.1} parent=1 // pred_check
      _
    $region27: #{tpu_custom_call.1} parent=1 // pred_check_branch
      %82 = sbr.rel (0) target = $region29
    $region28: #{tpu_custom_call.1} parent=1 // pred_region
      _
    $region29: #{tpu_custom_call.1} parent=1 // pred_fallthru
      _
    // Predicated region
    $region30: #{tpu_custom_call.1} parent=1 // pred_check
      _
    $region31: #{tpu_custom_call.1} parent=1 // pred_check_branch
      %84 = sbr.rel (0) target = $region33
    $region32: #{tpu_custom_call.1} parent=1 // pred_region
      %s86 = ssub.s32 8192, 8192
      %87 = vsyncadd [#allocation12], %s86
      %s88 = sshll.u32 [#allocation11], 4
      %s89 = int_to_ptr.vmem [resolvable:$true] %s88
      %94 = dma.hbm_to_vmem [thread:$0]  %s7, 8192, %s89, [#allocation12], 512, 512, 32
    $region33: #{tpu_custom_call.1} parent=1 // pred_fallthru
      _
    // Predicated region
    $region34: #{tpu_custom_call.1} parent=1 // pred_check
      _
    $region35: #{tpu_custom_call.1} parent=1 // pred_check_branch
      %96 = sbr.rel (0) target = $region37
    $region36: #{tpu_custom_call.1} parent=1 // pred_region
      _
    $region37: #{tpu_custom_call.1} parent=1 // pred_fallthru
      _
    // Predicated region
    $region38: #{tpu_custom_call.1} parent=1 // pred_check
      _
    $region39: #{tpu_custom_call.1} parent=1 // pred_check_branch
      %98 = sbr.rel (0) target = $region41
    $region40: #{tpu_custom_call.1} parent=1 // pred_region
      %99 = dma.done [#allocation3], 256
    $region41: #{tpu_custom_call.1} parent=1 // pred_fallthru
      _
    // Predicated region
    $region42: #{tpu_custom_call.1} parent=1 // pred_check
      _
    $region43: #{tpu_custom_call.1} parent=1 // pred_check_branch
      %101 = sbr.rel (0) target = $region45
    $region44: #{tpu_custom_call.1} parent=1 // pred_region
      %102 = dma.done [#allocation6], 6144
    $region45: #{tpu_custom_call.1} parent=1 // pred_fallthru
      _
    // Predicated region
    $region46: #{tpu_custom_call.1} parent=1 // pred_check
      _
    $region47: #{tpu_custom_call.1} parent=1 // pred_check_branch
      %104 = sbr.rel (0) target = $region49
    $region48: #{tpu_custom_call.1} parent=1 // pred_region
      %105 = dma.done [#allocation6], 2048
    $region49: #{tpu_custom_call.1} parent=1 // pred_fallthru
      _
    // Predicated region
    $region50: #{tpu_custom_call.1} parent=1 // pred_check
      _
    $region51: #{tpu_custom_call.1} parent=1 // pred_check_branch
      %107 = sbr.rel (0) target = $region53
    $region52: #{tpu_custom_call.1} parent=1 // pred_region
      %108 = dma.done [#allocation9], 2048
    $region53: #{tpu_custom_call.1} parent=1 // pred_fallthru
      _
    // Predicated region
    $region54: #{tpu_custom_call.1} parent=1 // pred_check
      _
    $region55: #{tpu_custom_call.1} parent=1 // pred_check_branch
      %110 = sbr.rel (0) target = $region57
    $region56: #{tpu_custom_call.1} parent=1 // pred_region
      %111 = dma.done [#allocation9], 2048
    $region57: #{tpu_custom_call.1} parent=1 // pred_fallthru
      _
    // Predicated region
    $region58: #{tpu_custom_call.1} parent=1 // pred_check
      _
    $region59: #{tpu_custom_call.1} parent=1 // pred_check_branch
      %113 = sbr.rel (0) target = $region61
    $region60: #{tpu_custom_call.1} parent=1 // pred_region
      %114 = dma.done [#allocation12], 8192
    $region61: #{tpu_custom_call.1} parent=1 // pred_fallthru
      _
    %v115 = vld [vmem:[#allocation2] sm:$0xff]
    %v116 = vld [vmem:[#allocation2 + $0x8] sm:$0xff]
    %v117 = vld [vmem:[#allocation5] sm:$0xff]
    %v118 = vld [vmem:[#allocation5 + $0x8] sm:$0xff]
    %v119 = vld [vmem:[#allocation5 + $0x10] sm:$0xff]
    %v120 = vld [vmem:[#allocation5 + $0x18] sm:$0xff]
    %v121 = vld [vmem:[#allocation5 + $0x20] sm:$0xff]
    %v122 = vld [vmem:[#allocation5 + $0x28] sm:$0xff]
    %v123 = vld [vmem:[#allocation5 + $0x30] sm:$0xff]
    %v124 = vld [vmem:[#allocation5 + $0x38] sm:$0xff]
    %v125 = vld [vmem:[#allocation5 + $0x40] sm:$0xff]
    %v126 = vld [vmem:[#allocation5 + $0x48] sm:$0xff]
    %v127 = vld [vmem:[#allocation5 + $0x50] sm:$0xff]
    %v128 = vld [vmem:[#allocation5 + $0x58] sm:$0xff]
    %v129 = vld [vmem:[#allocation5 + $0x60] sm:$0xff]
    %v130 = vld [vmem:[#allocation5 + $0x68] sm:$0xff]
    %v131 = vld [vmem:[#allocation5 + $0x70] sm:$0xff]
    %v132 = vld [vmem:[#allocation5 + $0x78] sm:$0xff]
    %v133 = vld [vmem:[#allocation5 + $0x80] sm:$0xff]
    %v134 = vld [vmem:[#allocation5 + $0x88] sm:$0xff]
    %v135 = vld [vmem:[#allocation5 + $0x90] sm:$0xff]
    %v136 = vld [vmem:[#allocation5 + $0x98] sm:$0xff]
    %v137 = vld [vmem:[#allocation5 + $0xa0] sm:$0xff]
    %v138 = vld [vmem:[#allocation5 + $0xa8] sm:$0xff]
    %v139 = vld [vmem:[#allocation5 + $0xb0] sm:$0xff]
    %v140 = vld [vmem:[#allocation5 + $0xb8] sm:$0xff]
    %v141 = vld [vmem:[#allocation5 + $0xc0] sm:$0xff]
    %v142 = vld [vmem:[#allocation5 + $0xc8] sm:$0xff]
    %v143 = vld [vmem:[#allocation5 + $0xd0] sm:$0xff]
    %v144 = vld [vmem:[#allocation5 + $0xd8] sm:$0xff]
    %v145 = vld [vmem:[#allocation5 + $0xe0] sm:$0xff]
    %v146 = vld [vmem:[#allocation5 + $0xe8] sm:$0xff]
    %v147 = vld [vmem:[#allocation5 + $0xf0] sm:$0xff]
    %v148 = vld [vmem:[#allocation5 + $0xf8] sm:$0xff]
    %v149 = vld [vmem:[#allocation5 + $0x100] sm:$0xff]
    %v150 = vld [vmem:[#allocation5 + $0x108] sm:$0xff]
    %v151 = vld [vmem:[#allocation5 + $0x110] sm:$0xff]
    %v152 = vld [vmem:[#allocation5 + $0x118] sm:$0xff]
    %v153 = vld [vmem:[#allocation5 + $0x120] sm:$0xff]
    %v154 = vld [vmem:[#allocation5 + $0x128] sm:$0xff]
    %v155 = vld [vmem:[#allocation5 + $0x130] sm:$0xff]
    %v156 = vld [vmem:[#allocation5 + $0x138] sm:$0xff]
    %v157 = vld [vmem:[#allocation5 + $0x140] sm:$0xff]
    %v158 = vld [vmem:[#allocation5 + $0x148] sm:$0xff]
    %v159 = vld [vmem:[#allocation5 + $0x150] sm:$0xff]
    %v160 = vld [vmem:[#allocation5 + $0x158] sm:$0xff]
    %v161 = vld [vmem:[#allocation5 + $0x160] sm:$0xff]
    %v162 = vld [vmem:[#allocation5 + $0x168] sm:$0xff]
    %v163 = vld [vmem:[#allocation5 + $0x170] sm:$0xff]
    %v164 = vld [vmem:[#allocation5 + $0x178] sm:$0xff]
    %165 = vmatprep.subr.mxu0 %v118
    %166 = vmatpush1.msra.mxu0 %v117
    %167 = vmatprep.subr.mxu0 %v121
    %168 = vmatpush1.msra.mxu0 %v120
    %169 = vmatprep.subr.mxu0 %v124
    %170 = vmatpush1.msra.mxu0 %v123
    %171 = vmatprep.subr.mxu0 %v127
    %172 = vmatpush1.msra.mxu0 %v126
    %173 = vmatprep.subr.mxu0 %v130
    %174 = vmatpush1.msra.mxu0 %v129
    %175 = vmatprep.subr.mxu0 %v133
    %176 = vmatpush1.msra.mxu0 %v132
    %177 = vmatprep.subr.mxu0 %v136
    %178 = vmatpush1.msra.mxu0 %v135
    %179 = vmatprep.subr.mxu0 %v139
    %180 = vmatpush1.msra.mxu0 %v138
    %181 = vmatprep.subr.mxu0 %v142
    %182 = vmatpush1.msra.mxu0 %v141
    %183 = vmatprep.subr.mxu0 %v145
    %184 = vmatpush1.msra.mxu0 %v144
    %185 = vmatprep.subr.mxu0 %v148
    %186 = vmatpush1.msra.mxu0 %v147
    %187 = vmatprep.subr.mxu0 %v151
    %188 = vmatpush1.msra.mxu0 %v150
    %189 = vmatprep.subr.mxu0 %v154
    %190 = vmatpush1.msra.mxu0 %v153
    %191 = vmatprep.subr.mxu0 %v157
    %192 = vmatpush1.msra.mxu0 %v156
    %193 = vmatprep.subr.mxu0 %v160
    %194 = vmatpush1.msra.mxu0 %v159
    %195 = vmatprep.subr.mxu0 %v163
    %196 = vmatpush1.msra.mxu0 %v162
    %197 = vmatprep.subr.mxu0 0.0
    %198 = vmatpush1.msra.mxu0 0.0
    %199 = vmatprep.subr.mxu0 0.0
    %200 = vmatpush1.msra.mxu0 0.0
    %201 = vmatprep.subr.mxu0 0.0
    %202 = vmatpush1.msra.mxu0 0.0
    %203 = vmatprep.subr.mxu0 0.0
    %204 = vmatpush1.msra.mxu0 0.0
    %205 = vmatprep.subr.mxu0 0.0
    %206 = vmatpush1.msra.mxu0 0.0
    %207 = vmatprep.subr.mxu0 0.0
    %208 = vmatpush1.msra.mxu0 0.0
    %209 = vmatprep.subr.mxu0 0.0
    %210 = vmatpush1.msra.mxu0 0.0
    %211 = vmatprep.subr.mxu0 0.0
    %212 = vmatpush1.msra.mxu0 0.0
    %213 = vmatprep.subr.mxu0 0.0
    %214 = vmatpush1.msra.mxu0 0.0
    %215 = vmatprep.subr.mxu0 0.0
    %216 = vmatpush1.msra.mxu0 0.0
    %217 = vmatprep.subr.mxu0 0.0
    %218 = vmatpush1.msra.mxu0 0.0
    %219 = vmatprep.subr.mxu0 0.0
    %220 = vmatpush1.msra.mxu0 0.0
    %221 = vmatprep.subr.mxu0 0.0
    %222 = vmatpush1.msra.mxu0 0.0
    %223 = vmatprep.subr.mxu0 0.0
    %224 = vmatpush1.msra.mxu0 0.0
    %225 = vmatprep.subr.mxu0 0.0
    %226 = vmatpush1.msra.mxu0 0.0
    %227 = vmatprep.subr.mxu0 0.0
    %228 = vmatpush1.msra.mxu0 0.0
    %229 = vmatprep.mubr.f32.mxu0 0.0
    %230 = vmatmul.mubr.f32.gmra.mrb[0].mxu0 %v115
    %v231 = vpop.f32.mrb[0].mxu0
    %v232 = vadd.f32 0.0, %v231
    %v233 = vpop.f32.mrb[0].mxu0
    %v234 = vadd.f32 0.0, %v233
    %235 = vmatprep.mubr.f32.mxu0 0.0
    %236 = vmatmul.mubr.f32.gmra.mrb[0].mxu0 %v116
    %v237 = vpop.f32.mrb[0].mxu0
    %v238 = vadd.f32 0.0, %v237
    %v239 = vpop.f32.mrb[0].mxu0
    %v240 = vadd.f32 0.0, %v239
    %241 = vdwg.mxu0
    %242 = vmatprep.subr.mxu0 0.0
    %243 = vmatpush1.msra.mxu0 %v119
    %244 = vmatprep.subr.mxu0 0.0
    %245 = vmatpush1.msra.mxu0 %v122
    %246 = vmatprep.subr.mxu0 0.0
    %247 = vmatpush1.msra.mxu0 %v125
    %248 = vmatprep.subr.mxu0 0.0
    %249 = vmatpush1.msra.mxu0 %v128
    %250 = vmatprep.subr.mxu0 0.0
    %251 = vmatpush1.msra.mxu0 %v131
    %252 = vmatprep.subr.mxu0 0.0
    %253 = vmatpush1.msra.mxu0 %v134
    %254 = vmatprep.subr.mxu0 0.0
    %255 = vmatpush1.msra.mxu0 %v137
    %256 = vmatprep.subr.mxu0 0.0
    %257 = vmatpush1.msra.mxu0 %v140
    %258 = vmatprep.subr.mxu0 0.0
    %259 = vmatpush1.msra.mxu0 %v143
    %260 = vmatprep.subr.mxu0 0.0
    %261 = vmatpush1.msra.mxu0 %v146
    %262 = vmatprep.subr.mxu0 0.0
    %263 = vmatpush1.msra.mxu0 %v149
    %264 = vmatprep.subr.mxu0 0.0
    %265 = vmatpush1.msra.mxu0 %v152
    %266 = vmatprep.subr.mxu0 0.0
    %267 = vmatpush1.msra.mxu0 %v155
    %268 = vmatprep.subr.mxu0 0.0
    %269 = vmatpush1.msra.mxu0 %v158
    %270 = vmatprep.subr.mxu0 0.0
    %271 = vmatpush1.msra.mxu0 %v161
    %272 = vmatprep.subr.mxu0 0.0
    %273 = vmatpush1.msra.mxu0 %v164
    %274 = vmatprep.subr.mxu0 0.0
    %275 = vmatpush1.msra.mxu0 0.0
    %276 = vmatprep.subr.mxu0 0.0
    %277 = vmatpush1.msra.mxu0 0.0
    %278 = vmatprep.subr.mxu0 0.0
    %279 = vmatpush1.msra.mxu0 0.0
    %280 = vmatprep.subr.mxu0 0.0
    %281 = vmatpush1.msra.mxu0 0.0
    %282 = vmatprep.subr.mxu0 0.0
    %283 = vmatpush1.msra.mxu0 0.0
    %284 = vmatprep.subr.mxu0 0.0
    %285 = vmatpush1.msra.mxu0 0.0
    %286 = vmatprep.subr.mxu0 0.0
    %287 = vmatpush1.msra.mxu0 0.0
    %288 = vmatprep.subr.mxu0 0.0
    %289 = vmatpush1.msra.mxu0 0.0
    %290 = vmatprep.subr.mxu0 0.0
    %291 = vmatpush1.msra.mxu0 0.0
    %292 = vmatprep.subr.mxu0 0.0
    %293 = vmatpush1.msra.mxu0 0.0
    %294 = vmatprep.subr.mxu0 0.0
    %295 = vmatpush1.msra.mxu0 0.0
    %296 = vmatprep.subr.mxu0 0.0
    %297 = vmatpush1.msra.mxu0 0.0
    %298 = vmatprep.subr.mxu0 0.0
    %299 = vmatpush1.msra.mxu0 0.0
    %300 = vmatprep.subr.mxu0 0.0
    %301 = vmatpush1.msra.mxu0 0.0
    %302 = vmatprep.subr.mxu0 0.0
    %303 = vmatpush1.msra.mxu0 0.0
    %304 = vmatprep.subr.mxu0 0.0
    %305 = vmatpush1.msra.mxu0 0.0
    %306 = vmatprep.mubr.f32.mxu0 0.0
    %307 = vmatmul.mubr.f32.gmra.mrb[0].mxu0 %v115
    %v308 = vpop.f32.mrb[0].mxu0
    %v309 = vadd.f32 0.0, %v308
    %v310 = vpop.f32.mrb[0].mxu0
    %311 = vmatprep.mubr.f32.mxu0 0.0
    %312 = vmatmul.mubr.f32.gmra.mrb[0].mxu0 %v116
    %v313 = vpop.f32.mrb[0].mxu0
    %v314 = vadd.f32 0.0, %v313
    %v315 = vpop.f32.mrb[0].mxu0
    %316 = vdwg.mxu0
    %v317 = vmul.f32 %v232, 0.17677669
    %v318 = vmul.f32 %v238, 0.17677669
    %319 = vmatprep.subr.mxu0 0.0
    %320 = vmatpush1.xpose.msra.mxu0 %v234
    %321 = vmatprep.subr.mxu0 0.0
    %322 = vmatpush1.xpose.msra.mxu0 0.0
    %323 = vmatprep.subr.mxu0 0.0
    %324 = vmatpush1.xpose.msra.mxu0 0.0
    %325 = vmatprep.subr.mxu0 0.0
    %326 = vmatpush1.xpose.msra.mxu0 0.0
    %327 = vmatprep.subr.mxu0 0.0
    %328 = vmatpush1.xpose.msra.mxu0 0.0
    %329 = vmatprep.subr.mxu0 0.0
    %330 = vmatpush1.xpose.msra.mxu0 0.0
    %331 = vmatprep.subr.mxu0 0.0
    %332 = vmatpush1.xpose.msra.mxu0 0.0
    %333 = vmatprep.subr.mxu0 0.0
    %334 = vmatpush1.xpose.msra.mxu0 0.0
    %335 = vmatprep.subr.mxu0 0.0
    %336 = vmatpush1.xpose.msra.mxu0 0.0
    %337 = vmatprep.subr.mxu0 0.0
    %338 = vmatpush1.xpose.msra.mxu0 0.0
    %339 = vmatprep.subr.mxu0 0.0
    %340 = vmatpush1.xpose.msra.mxu0 0.0
    %341 = vmatprep.subr.mxu0 0.0
    %342 = vmatpush1.xpose.msra.mxu0 0.0
    %343 = vmatprep.subr.mxu0 0.0
    %344 = vmatpush1.xpose.msra.mxu0 0.0
    %345 = vmatprep.subr.mxu0 0.0
    %346 = vmatpush1.xpose.msra.mxu0 0.0
    %347 = vmatprep.subr.mxu0 0.0
    %348 = vmatpush1.xpose.msra.mxu0 0.0
    %349 = vmatprep.subr.mxu0 0.0
    %350 = vmatpush1.xpose.msra.mxu0 0.0
    %351 = vmatprep.subr.mxu0 0.0
    %352 = vmatpush1.xpose.msra.mxu0 0.0
    %353 = vmatprep.subr.mxu0 0.0
    %354 = vmatpush1.xpose.msra.mxu0 0.0
    %355 = vmatprep.subr.mxu0 0.0
    %356 = vmatpush1.xpose.msra.mxu0 0.0
    %357 = vmatprep.subr.mxu0 0.0
    %358 = vmatpush1.xpose.msra.mxu0 0.0
    %359 = vmatprep.subr.mxu0 0.0
    %360 = vmatpush1.xpose.msra.mxu0 0.0
    %361 = vmatprep.subr.mxu0 0.0
    %362 = vmatpush1.xpose.msra.mxu0 0.0
    %363 = vmatprep.subr.mxu0 0.0
    %364 = vmatpush1.xpose.msra.mxu0 0.0
    %365 = vmatprep.subr.mxu0 0.0
    %366 = vmatpush1.xpose.msra.mxu0 0.0
    %367 = vmatprep.subr.mxu0 0.0
    %368 = vmatpush1.xpose.msra.mxu0 0.0
    %369 = vmatprep.subr.mxu0 0.0
    %370 = vmatpush1.xpose.msra.mxu0 0.0
    %371 = vmatprep.subr.mxu0 0.0
    %372 = vmatpush1.xpose.msra.mxu0 0.0
    %373 = vmatprep.subr.mxu0 0.0
    %374 = vmatpush1.xpose.msra.mxu0 0.0
    %375 = vmatprep.subr.mxu0 0.0
    %376 = vmatpush1.xpose.msra.mxu0 0.0
    %377 = vmatprep.subr.mxu0 0.0
    %378 = vmatpush1.xpose.msra.mxu0 0.0
    %379 = vmatprep.subr.mxu0 0.0
    %380 = vmatpush1.xpose.msra.mxu0 0.0
    %381 = vmatprep.subr.mxu0 0.0
    %382 = vmatpush1.xpose.msra.mxu0 0.0
    %383 = vmatprep.mubr.f32.mxu0 0.0
    %384 = vmatmul.mubr.f32.gmra.mrb[0].mxu0 %v317
    %v385 = vpop.f32.mrb[0].mxu0
    %v386 = vadd.f32 0.0, %v385
    %v387 = vpop.f32.mrb[0].mxu0
    %388 = vdwg.mxu0
    %389 = vmatprep.subr.mxu0 0.0
    %390 = vmatpush1.xpose.msra.mxu0 %v240
    %391 = vmatprep.subr.mxu0 0.0
    %392 = vmatpush1.xpose.msra.mxu0 0.0
    %393 = vmatprep.subr.mxu0 0.0
    %394 = vmatpush1.xpose.msra.mxu0 0.0
    %395 = vmatprep.subr.mxu0 0.0
    %396 = vmatpush1.xpose.msra.mxu0 0.0
    %397 = vmatprep.subr.mxu0 0.0
    %398 = vmatpush1.xpose.msra.mxu0 0.0
    %399 = vmatprep.subr.mxu0 0.0
    %400 = vmatpush1.xpose.msra.mxu0 0.0
    %401 = vmatprep.subr.mxu0 0.0
    %402 = vmatpush1.xpose.msra.mxu0 0.0
    %403 = vmatprep.subr.mxu0 0.0
    %404 = vmatpush1.xpose.msra.mxu0 0.0
    %405 = vmatprep.subr.mxu0 0.0
    %406 = vmatpush1.xpose.msra.mxu0 0.0
    %407 = vmatprep.subr.mxu0 0.0
    %408 = vmatpush1.xpose.msra.mxu0 0.0
    %409 = vmatprep.subr.mxu0 0.0
    %410 = vmatpush1.xpose.msra.mxu0 0.0
    %411 = vmatprep.subr.mxu0 0.0
    %412 = vmatpush1.xpose.msra.mxu0 0.0
    %413 = vmatprep.subr.mxu0 0.0
    %414 = vmatpush1.xpose.msra.mxu0 0.0
    %415 = vmatprep.subr.mxu0 0.0
    %416 = vmatpush1.xpose.msra.mxu0 0.0
    %417 = vmatprep.subr.mxu0 0.0
    %418 = vmatpush1.xpose.msra.mxu0 0.0
    %419 = vmatprep.subr.mxu0 0.0
    %420 = vmatpush1.xpose.msra.mxu0 0.0
    %421 = vmatprep.subr.mxu0 0.0
    %422 = vmatpush1.xpose.msra.mxu0 0.0
    %423 = vmatprep.subr.mxu0 0.0
    %424 = vmatpush1.xpose.msra.mxu0 0.0
    %425 = vmatprep.subr.mxu0 0.0
    %426 = vmatpush1.xpose.msra.mxu0 0.0
    %427 = vmatprep.subr.mxu0 0.0
    %428 = vmatpush1.xpose.msra.mxu0 0.0
    %429 = vmatprep.subr.mxu0 0.0
    %430 = vmatpush1.xpose.msra.mxu0 0.0
    %431 = vmatprep.subr.mxu0 0.0
    %432 = vmatpush1.xpose.msra.mxu0 0.0
    %433 = vmatprep.subr.mxu0 0.0
    %434 = vmatpush1.xpose.msra.mxu0 0.0
    %435 = vmatprep.subr.mxu0 0.0
    %436 = vmatpush1.xpose.msra.mxu0 0.0
    %437 = vmatprep.subr.mxu0 0.0
    %438 = vmatpush1.xpose.msra.mxu0 0.0
    %439 = vmatprep.subr.mxu0 0.0
    %440 = vmatpush1.xpose.msra.mxu0 0.0
    %441 = vmatprep.subr.mxu0 0.0
    %442 = vmatpush1.xpose.msra.mxu0 0.0
    %443 = vmatprep.subr.mxu0 0.0
    %444 = vmatpush1.xpose.msra.mxu0 0.0
    %445 = vmatprep.subr.mxu0 0.0
    %446 = vmatpush1.xpose.msra.mxu0 0.0
    %447 = vmatprep.subr.mxu0 0.0
    %448 = vmatpush1.xpose.msra.mxu0 0.0
    %449 = vmatprep.subr.mxu0 0.0
    %450 = vmatpush1.xpose.msra.mxu0 0.0
    %451 = vmatprep.subr.mxu0 0.0
    %452 = vmatpush1.xpose.msra.mxu0 0.0
    %453 = vmatprep.mubr.f32.mxu0 0.0
    %454 = vmatmul.mubr.f32.gmra.mrb[0].mxu0 %v318
    %v455 = vpop.f32.mrb[0].mxu0
    %v456 = vadd.f32 0.0, %v455
    %v457 = vpop.f32.mrb[0].mxu0
    %458 = vdwg.mxu0
    %vm459 = vcmask 64512
    %v460 = vsel %vm459, %v386, -inf
    %461 = vmax.xlane.f32.xlu0 %v460
    %v462 = vpop.xlane.xlu0 %461
    %v463 = vsel %vm459, %v456, -inf
    %464 = vmax.xlane.f32.xlu0 %v463
    %v465 = vpop.xlane.xlu0 %464
    %v466 = vsub.f32 %v386, %v462
    %v467 = vsub.f32 %v456, %v465
    %v468 = vmul.f32 %v466, 1.442695
    %v469 = vpow.pop %v468
    %v470 = vmul.f32 %v467, 1.442695
    %v471 = vpow.pop %v470
    %v472 = vsel %vm459, %v469, 0.0
    %473 = vadd.xlane.f32.xlu0 %v472
    %v474 = vpop.xlane.xlu0 %473
    %v475 = vsel %vm459, %v471, 0.0
    %476 = vadd.xlane.f32.xlu0 %v475
    %v477 = vpop.xlane.xlu0 %476
    %v478 = vrcp.pop %v474
    %v479 = vmul.f32 %v469, %v478
    %v480 = vrcp.pop %v477
    %v481 = vmul.f32 %v471, %v480
    %v483 = vsel %vm459, %v479, 0
    %485 = vmatprep.subr.mxu0 0.0
    %486 = vmatpush1.msra.mxu0 %v309
    %487 = vmatprep.subr.mxu0 0.0
    %488 = vmatpush1.msra.mxu0 0.0
    %489 = vmatprep.subr.mxu0 0.0
    %490 = vmatpush1.msra.mxu0 0.0
    %491 = vmatprep.subr.mxu0 0.0
    %492 = vmatpush1.msra.mxu0 0.0
    %493 = vmatprep.subr.mxu0 0.0
    %494 = vmatpush1.msra.mxu0 0.0
    %495 = vmatprep.subr.mxu0 0.0
    %496 = vmatpush1.msra.mxu0 0.0
    %497 = vmatprep.subr.mxu0 0.0
    %498 = vmatpush1.msra.mxu0 0.0
    %499 = vmatprep.subr.mxu0 0.0
    %500 = vmatpush1.msra.mxu0 0.0
    %501 = vmatprep.subr.mxu0 0.0
    %502 = vmatpush1.msra.mxu0 0.0
    %503 = vmatprep.subr.mxu0 0.0
    %504 = vmatpush1.msra.mxu0 0.0
    %505 = vmatprep.subr.mxu0 0.0
    %506 = vmatpush1.msra.mxu0 0.0
    %507 = vmatprep.subr.mxu0 0.0
    %508 = vmatpush1.msra.mxu0 0.0
    %509 = vmatprep.subr.mxu0 0.0
    %510 = vmatpush1.msra.mxu0 0.0
    %511 = vmatprep.subr.mxu0 0.0
    %512 = vmatpush1.msra.mxu0 0.0
    %513 = vmatprep.subr.mxu0 0.0
    %514 = vmatpush1.msra.mxu0 0.0
    %515 = vmatprep.subr.mxu0 0.0
    %516 = vmatpush1.msra.mxu0 0.0
    %517 = vmatprep.subr.mxu0 0.0
    %518 = vmatpush1.msra.mxu0 0.0
    %519 = vmatprep.subr.mxu0 0.0
    %520 = vmatpush1.msra.mxu0 0.0
    %521 = vmatprep.subr.mxu0 0.0
    %522 = vmatpush1.msra.mxu0 0.0
    %523 = vmatprep.subr.mxu0 0.0
    %524 = vmatpush1.msra.mxu0 0.0
    %525 = vmatprep.subr.mxu0 0.0
    %526 = vmatpush1.msra.mxu0 0.0
    %527 = vmatprep.subr.mxu0 0.0
    %528 = vmatpush1.msra.mxu0 0.0
    %529 = vmatprep.subr.mxu0 0.0
    %530 = vmatpush1.msra.mxu0 0.0
    %531 = vmatprep.subr.mxu0 0.0
    %532 = vmatpush1.msra.mxu0 0.0
    %533 = vmatprep.subr.mxu0 0.0
    %534 = vmatpush1.msra.mxu0 0.0
    %535 = vmatprep.subr.mxu0 0.0
    %536 = vmatpush1.msra.mxu0 0.0
    %537 = vmatprep.subr.mxu0 0.0
    %538 = vmatpush1.msra.mxu0 0.0
    %539 = vmatprep.subr.mxu0 0.0
    %540 = vmatpush1.msra.mxu0 0.0
    %541 = vmatprep.subr.mxu0 0.0
    %542 = vmatpush1.msra.mxu0 0.0
    %543 = vmatprep.subr.mxu0 0.0
    %544 = vmatpush1.msra.mxu0 0.0
    %545 = vmatprep.subr.mxu0 0.0
    %546 = vmatpush1.msra.mxu0 0.0
    %547 = vmatprep.subr.mxu0 0.0
    %548 = vmatpush1.msra.mxu0 0.0
    %549 = vmatprep.mubr.f32.mxu0 0.0
    %550 = vmatmul.mubr.f32.gmra.mrb[0].mxu0 %v483
    %v551 = vpop.f32.mrb[0].mxu0
    %v552 = vadd.f32 0.0, %v551
    %v553 = vpop.f32.mrb[0].mxu0
    %554 = vdwg.mxu0
    %v556 = vsel %vm459, %v481, 0
    %558 = vmatprep.subr.mxu0 0.0
    %559 = vmatpush1.msra.mxu0 %v314
    %560 = vmatprep.subr.mxu0 0.0
    %561 = vmatpush1.msra.mxu0 0.0
    %562 = vmatprep.subr.mxu0 0.0
    %563 = vmatpush1.msra.mxu0 0.0
    %564 = vmatprep.subr.mxu0 0.0
    %565 = vmatpush1.msra.mxu0 0.0
    %566 = vmatprep.subr.mxu0 0.0
    %567 = vmatpush1.msra.mxu0 0.0
    %568 = vmatprep.subr.mxu0 0.0
    %569 = vmatpush1.msra.mxu0 0.0
    %570 = vmatprep.subr.mxu0 0.0
    %571 = vmatpush1.msra.mxu0 0.0
    %572 = vmatprep.subr.mxu0 0.0
    %573 = vmatpush1.msra.mxu0 0.0
    %574 = vmatprep.subr.mxu0 0.0
    %575 = vmatpush1.msra.mxu0 0.0
    %576 = vmatprep.subr.mxu0 0.0
    %577 = vmatpush1.msra.mxu0 0.0
    %578 = vmatprep.subr.mxu0 0.0
    %579 = vmatpush1.msra.mxu0 0.0
    %580 = vmatprep.subr.mxu0 0.0
    %581 = vmatpush1.msra.mxu0 0.0
    %582 = vmatprep.subr.mxu0 0.0
    %583 = vmatpush1.msra.mxu0 0.0
    %584 = vmatprep.subr.mxu0 0.0
    %585 = vmatpush1.msra.mxu0 0.0
    %586 = vmatprep.subr.mxu0 0.0
    %587 = vmatpush1.msra.mxu0 0.0
    %588 = vmatprep.subr.mxu0 0.0
    %589 = vmatpush1.msra.mxu0 0.0
    %590 = vmatprep.subr.mxu0 0.0
    %591 = vmatpush1.msra.mxu0 0.0
    %592 = vmatprep.subr.mxu0 0.0
    %593 = vmatpush1.msra.mxu0 0.0
    %594 = vmatprep.subr.mxu0 0.0
    %595 = vmatpush1.msra.mxu0 0.0
    %596 = vmatprep.subr.mxu0 0.0
    %597 = vmatpush1.msra.mxu0 0.0
    %598 = vmatprep.subr.mxu0 0.0
    %599 = vmatpush1.msra.mxu0 0.0
    %600 = vmatprep.subr.mxu0 0.0
    %601 = vmatpush1.msra.mxu0 0.0
    %602 = vmatprep.subr.mxu0 0.0
    %603 = vmatpush1.msra.mxu0 0.0
    %604 = vmatprep.subr.mxu0 0.0
    %605 = vmatpush1.msra.mxu0 0.0
    %606 = vmatprep.subr.mxu0 0.0
    %607 = vmatpush1.msra.mxu0 0.0
    %608 = vmatprep.subr.mxu0 0.0
    %609 = vmatpush1.msra.mxu0 0.0
    %610 = vmatprep.subr.mxu0 0.0
    %611 = vmatpush1.msra.mxu0 0.0
    %612 = vmatprep.subr.mxu0 0.0
    %613 = vmatpush1.msra.mxu0 0.0
    %614 = vmatprep.subr.mxu0 0.0
    %615 = vmatpush1.msra.mxu0 0.0
    %616 = vmatprep.subr.mxu0 0.0
    %617 = vmatpush1.msra.mxu0 0.0
    %618 = vmatprep.subr.mxu0 0.0
    %619 = vmatpush1.msra.mxu0 0.0
    %620 = vmatprep.subr.mxu0 0.0
    %621 = vmatpush1.msra.mxu0 0.0
    %622 = vmatprep.mubr.f32.mxu0 0.0
    %623 = vmatmul.mubr.f32.gmra.mrb[0].mxu0 %v556
    %v624 = vpop.f32.mrb[0].mxu0
    %v625 = vadd.f32 0.0, %v624
    %v626 = vpop.f32.mrb[0].mxu0
    %627 = vdwg.mxu0
    %v628 = vld [vmem:[#allocation7] sm:$0xff]
    %v629 = vld [vmem:[#allocation7 + $0x8] sm:$0xff]
    %v630 = vld [vmem:[#allocation7 + $0x10] sm:$0xff]
    %v631 = vld [vmem:[#allocation7 + $0x18] sm:$0xff]
    %v632 = vld [vmem:[#allocation7 + $0x20] sm:$0xff]
    %v633 = vld [vmem:[#allocation7 + $0x28] sm:$0xff]
    %v634 = vld [vmem:[#allocation7 + $0x30] sm:$0xff]
    %v635 = vld [vmem:[#allocation7 + $0x38] sm:$0xff]
    %v636 = vld [vmem:[#allocation7 + $0x40] sm:$0xff]
    %v637 = vld [vmem:[#allocation7 + $0x48] sm:$0xff]
    %v638 = vld [vmem:[#allocation7 + $0x50] sm:$0xff]
    %v639 = vld [vmem:[#allocation7 + $0x58] sm:$0xff]
    %v640 = vld [vmem:[#allocation7 + $0x60] sm:$0xff]
    %v641 = vld [vmem:[#allocation7 + $0x68] sm:$0xff]
    %v642 = vld [vmem:[#allocation7 + $0x70] sm:$0xff]
    %v643 = vld [vmem:[#allocation7 + $0x78] sm:$0xff]
    %644 = vmatprep.subr.mxu0 0.0
    %645 = vmatpush1.msra.mxu0 %v628
    %646 = vmatprep.subr.mxu0 0.0
    %647 = vmatpush1.msra.mxu0 %v629
    %648 = vmatprep.subr.mxu0 0.0
    %649 = vmatpush1.msra.mxu0 %v630
    %650 = vmatprep.subr.mxu0 0.0
    %651 = vmatpush1.msra.mxu0 %v631
    %652 = vmatprep.subr.mxu0 0.0
    %653 = vmatpush1.msra.mxu0 %v632
    %654 = vmatprep.subr.mxu0 0.0
    %655 = vmatpush1.msra.mxu0 %v633
    %656 = vmatprep.subr.mxu0 0.0
    %657 = vmatpush1.msra.mxu0 %v634
    %658 = vmatprep.subr.mxu0 0.0
    %659 = vmatpush1.msra.mxu0 %v635
    %660 = vmatprep.subr.mxu0 0.0
    %661 = vmatpush1.msra.mxu0 %v636
    %662 = vmatprep.subr.mxu0 0.0
    %663 = vmatpush1.msra.mxu0 %v637
    %664 = vmatprep.subr.mxu0 0.0
    %665 = vmatpush1.msra.mxu0 %v638
    %666 = vmatprep.subr.mxu0 0.0
    %667 = vmatpush1.msra.mxu0 %v639
    %668 = vmatprep.subr.mxu0 0.0
    %669 = vmatpush1.msra.mxu0 %v640
    %670 = vmatprep.subr.mxu0 0.0
    %671 = vmatpush1.msra.mxu0 %v641
    %672 = vmatprep.subr.mxu0 0.0
    %673 = vmatpush1.msra.mxu0 %v642
    %674 = vmatprep.subr.mxu0 0.0
    %675 = vmatpush1.msra.mxu0 %v643
    %676 = vmatprep.subr.mxu0 0.0
    %677 = vmatpush1.msra.mxu0 0.0
    %678 = vmatprep.subr.mxu0 0.0
    %679 = vmatpush1.msra.mxu0 0.0
    %680 = vmatprep.subr.mxu0 0.0
    %681 = vmatpush1.msra.mxu0 0.0
    %682 = vmatprep.subr.mxu0 0.0
    %683 = vmatpush1.msra.mxu0 0.0
    %684 = vmatprep.subr.mxu0 0.0
    %685 = vmatpush1.msra.mxu0 0.0
    %686 = vmatprep.subr.mxu0 0.0
    %687 = vmatpush1.msra.mxu0 0.0
    %688 = vmatprep.subr.mxu0 0.0
    %689 = vmatpush1.msra.mxu0 0.0
    %690 = vmatprep.subr.mxu0 0.0
    %691 = vmatpush1.msra.mxu0 0.0
    %692 = vmatprep.subr.mxu0 0.0
    %693 = vmatpush1.msra.mxu0 0.0
    %694 = vmatprep.subr.mxu0 0.0
    %695 = vmatpush1.msra.mxu0 0.0
    %696 = vmatprep.subr.mxu0 0.0
    %697 = vmatpush1.msra.mxu0 0.0
    %698 = vmatprep.subr.mxu0 0.0
    %699 = vmatpush1.msra.mxu0 0.0
    %700 = vmatprep.subr.mxu0 0.0
    %701 = vmatpush1.msra.mxu0 0.0
    %702 = vmatprep.subr.mxu0 0.0
    %703 = vmatpush1.msra.mxu0 0.0
    %704 = vmatprep.subr.mxu0 0.0
    %705 = vmatpush1.msra.mxu0 0.0
    %706 = vmatprep.subr.mxu0 0.0
    %707 = vmatpush1.msra.mxu0 0.0
    %708 = vmatprep.mubr.f32.mxu0 0.0
    %709 = vmatmul.mubr.f32.gmra.mrb[0].mxu0 %v552
    %v710 = vpop.f32.mrb[0].mxu0
    %v711 = vadd.f32 0.0, %v710
    %v712 = vpop.f32.mrb[0].mxu0
    %713 = vmatprep.mubr.f32.mxu0 0.0
    %714 = vmatmul.mubr.f32.gmra.mrb[0].mxu0 %v625
    %v715 = vpop.f32.mrb[0].mxu0
    %v716 = vadd.f32 0.0, %v715
    %v717 = vpop.f32.mrb[0].mxu0
    %718 = vdwg.mxu0
    %v719 = vadd.f32 %v115, %v711
    %v720 = vadd.f32 %v116, %v716
    %v721 = vld [vmem:[#allocation8] sm:$0xff]
    %v722 = vld [vmem:[#allocation8 + $0x8] sm:$0xff]
    %v723 = vld [vmem:[#allocation8 + $0x10] sm:$0xff]
    %v724 = vld [vmem:[#allocation8 + $0x18] sm:$0xff]
    %v725 = vld [vmem:[#allocation8 + $0x20] sm:$0xff]
    %v726 = vld [vmem:[#allocation8 + $0x28] sm:$0xff]
    %v727 = vld [vmem:[#allocation8 + $0x30] sm:$0xff]
    %v728 = vld [vmem:[#allocation8 + $0x38] sm:$0xff]
    %v729 = vld [vmem:[#allocation8 + $0x40] sm:$0xff]
    %v730 = vld [vmem:[#allocation8 + $0x48] sm:$0xff]
    %v731 = vld [vmem:[#allocation8 + $0x50] sm:$0xff]
    %v732 = vld [vmem:[#allocation8 + $0x58] sm:$0xff]
    %v733 = vld [vmem:[#allocation8 + $0x60] sm:$0xff]
    %v734 = vld [vmem:[#allocation8 + $0x68] sm:$0xff]
    %v735 = vld [vmem:[#allocation8 + $0x70] sm:$0xff]
    %v736 = vld [vmem:[#allocation8 + $0x78] sm:$0xff]
    %v737 = vld [vmem:[%s4] sm:$0x1]
    %v739 = vlaneseq
    %v740 = vshrl.u32 %v739, 7
    %v741 = vsub.s32 0, %v740
    %v742 = vrot.slane %v737, %v741
    %744 = vmatprep.subr.mxu0 0.0
    %745 = vmatpush1.msra.mxu0 %v721
    %746 = vmatprep.subr.mxu0 0.0
    %747 = vmatpush1.msra.mxu0 %v722
    %748 = vmatprep.subr.mxu0 0.0
    %749 = vmatpush1.msra.mxu0 %v723
    %750 = vmatprep.subr.mxu0 0.0
    %751 = vmatpush1.msra.mxu0 %v724
    %752 = vmatprep.subr.mxu0 0.0
    %753 = vmatpush1.msra.mxu0 %v725
    %754 = vmatprep.subr.mxu0 0.0
    %755 = vmatpush1.msra.mxu0 %v726
    %756 = vmatprep.subr.mxu0 0.0
    %757 = vmatpush1.msra.mxu0 %v727
    %758 = vmatprep.subr.mxu0 0.0
    %759 = vmatpush1.msra.mxu0 %v728
    %760 = vmatprep.subr.mxu0 0.0
    %761 = vmatpush1.msra.mxu0 %v729
    %762 = vmatprep.subr.mxu0 0.0
    %763 = vmatpush1.msra.mxu0 %v730
    %764 = vmatprep.subr.mxu0 0.0
    %765 = vmatpush1.msra.mxu0 %v731
    %766 = vmatprep.subr.mxu0 0.0
    %767 = vmatpush1.msra.mxu0 %v732
    %768 = vmatprep.subr.mxu0 0.0
    %769 = vmatpush1.msra.mxu0 %v733
    %770 = vmatprep.subr.mxu0 0.0
    %771 = vmatpush1.msra.mxu0 %v734
    %772 = vmatprep.subr.mxu0 0.0
    %773 = vmatpush1.msra.mxu0 %v735
    %774 = vmatprep.subr.mxu0 0.0
    %775 = vmatpush1.msra.mxu0 %v736
    %776 = vmatprep.subr.mxu0 0.0
    %777 = vmatpush1.msra.mxu0 0.0
    %778 = vmatprep.subr.mxu0 0.0
    %779 = vmatpush1.msra.mxu0 0.0
    %780 = vmatprep.subr.mxu0 0.0
    %781 = vmatpush1.msra.mxu0 0.0
    %782 = vmatprep.subr.mxu0 0.0
    %783 = vmatpush1.msra.mxu0 0.0
    %784 = vmatprep.subr.mxu0 0.0
    %785 = vmatpush1.msra.mxu0 0.0
    %786 = vmatprep.subr.mxu0 0.0
    %787 = vmatpush1.msra.mxu0 0.0
    %788 = vmatprep.subr.mxu0 0.0
    %789 = vmatpush1.msra.mxu0 0.0
    %790 = vmatprep.subr.mxu0 0.0
    %791 = vmatpush1.msra.mxu0 0.0
    %792 = vmatprep.subr.mxu0 0.0
    %793 = vmatpush1.msra.mxu0 0.0
    %794 = vmatprep.subr.mxu0 0.0
    %795 = vmatpush1.msra.mxu0 0.0
    %796 = vmatprep.subr.mxu0 0.0
    %797 = vmatpush1.msra.mxu0 0.0
    %798 = vmatprep.subr.mxu0 0.0
    %799 = vmatpush1.msra.mxu0 0.0
    %800 = vmatprep.subr.mxu0 0.0
    %801 = vmatpush1.msra.mxu0 0.0
    %802 = vmatprep.subr.mxu0 0.0
    %803 = vmatpush1.msra.mxu0 0.0
    %804 = vmatprep.subr.mxu0 0.0
    %805 = vmatpush1.msra.mxu0 0.0
    %806 = vmatprep.subr.mxu0 0.0
    %807 = vmatpush1.msra.mxu0 0.0
    %808 = vmatprep.mubr.f32.mxu0 0.0
    %809 = vmatmul.mubr.f32.gmra.mrb[0].mxu0 %v719
    %v810 = vpop.f32.mrb[0].mxu0
    %v811 = vadd.f32 %v742, %v810
    %v812 = vpop.f32.mrb[0].mxu0
    %813 = vmatprep.mubr.f32.mxu0 0.0
    %814 = vmatmul.mubr.f32.gmra.mrb[0].mxu0 %v720
    %v815 = vpop.f32.mrb[0].mxu0
    %v816 = vadd.f32 %v742, %v815
    %v817 = vpop.f32.mrb[0].mxu0
    %818 = vdwg.mxu0
    %v819 = vmax.f32 %v811, 0.0
    %v820 = vmax.f32 %v816, 0.0
    %v821 = vld [vmem:[#allocation10] sm:$0xff]
    %v822 = vld [vmem:[#allocation10 + $0x8] sm:$0xff]
    %v823 = vld [vmem:[#allocation10 + $0x10] sm:$0xff]
    %v824 = vld [vmem:[#allocation10 + $0x18] sm:$0xff]
    %v825 = vld [vmem:[#allocation10 + $0x20] sm:$0xff]
    %v826 = vld [vmem:[#allocation10 + $0x28] sm:$0xff]
    %v827 = vld [vmem:[#allocation10 + $0x30] sm:$0xff]
    %v828 = vld [vmem:[#allocation10 + $0x38] sm:$0xff]
    %v829 = vld [vmem:[#allocation10 + $0x40] sm:$0xff]
    %v830 = vld [vmem:[#allocation10 + $0x48] sm:$0xff]
    %v831 = vld [vmem:[#allocation10 + $0x50] sm:$0xff]
    %v832 = vld [vmem:[#allocation10 + $0x58] sm:$0xff]
    %v833 = vld [vmem:[#allocation10 + $0x60] sm:$0xff]
    %v834 = vld [vmem:[#allocation10 + $0x68] sm:$0xff]
    %v835 = vld [vmem:[#allocation10 + $0x70] sm:$0xff]
    %v836 = vld [vmem:[#allocation10 + $0x78] sm:$0xff]
    %837 = vmatprep.subr.mxu0 0.0
    %838 = vmatpush1.msra.mxu0 %v821
    %839 = vmatprep.subr.mxu0 0.0
    %840 = vmatpush1.msra.mxu0 %v822
    %841 = vmatprep.subr.mxu0 0.0
    %842 = vmatpush1.msra.mxu0 %v823
    %843 = vmatprep.subr.mxu0 0.0
    %844 = vmatpush1.msra.mxu0 %v824
    %845 = vmatprep.subr.mxu0 0.0
    %846 = vmatpush1.msra.mxu0 %v825
    %847 = vmatprep.subr.mxu0 0.0
    %848 = vmatpush1.msra.mxu0 %v826
    %849 = vmatprep.subr.mxu0 0.0
    %850 = vmatpush1.msra.mxu0 %v827
    %851 = vmatprep.subr.mxu0 0.0
    %852 = vmatpush1.msra.mxu0 %v828
    %853 = vmatprep.subr.mxu0 0.0
    %854 = vmatpush1.msra.mxu0 %v829
    %855 = vmatprep.subr.mxu0 0.0
    %856 = vmatpush1.msra.mxu0 %v830
    %857 = vmatprep.subr.mxu0 0.0
    %858 = vmatpush1.msra.mxu0 %v831
    %859 = vmatprep.subr.mxu0 0.0
    %860 = vmatpush1.msra.mxu0 %v832
    %861 = vmatprep.subr.mxu0 0.0
    %862 = vmatpush1.msra.mxu0 %v833
    %863 = vmatprep.subr.mxu0 0.0
    %864 = vmatpush1.msra.mxu0 %v834
    %865 = vmatprep.subr.mxu0 0.0
    %866 = vmatpush1.msra.mxu0 %v835
    %867 = vmatprep.subr.mxu0 0.0
    %868 = vmatpush1.msra.mxu0 %v836
    %869 = vmatprep.subr.mxu0 0.0
    %870 = vmatpush1.msra.mxu0 0.0
    %871 = vmatprep.subr.mxu0 0.0
    %872 = vmatpush1.msra.mxu0 0.0
    %873 = vmatprep.subr.mxu0 0.0
    %874 = vmatpush1.msra.mxu0 0.0
    %875 = vmatprep.subr.mxu0 0.0
    %876 = vmatpush1.msra.mxu0 0.0
    %877 = vmatprep.subr.mxu0 0.0
    %878 = vmatpush1.msra.mxu0 0.0
    %879 = vmatprep.subr.mxu0 0.0
    %880 = vmatpush1.msra.mxu0 0.0
    %881 = vmatprep.subr.mxu0 0.0
    %882 = vmatpush1.msra.mxu0 0.0
    %883 = vmatprep.subr.mxu0 0.0
    %884 = vmatpush1.msra.mxu0 0.0
    %885 = vmatprep.subr.mxu0 0.0
    %886 = vmatpush1.msra.mxu0 0.0
    %887 = vmatprep.subr.mxu0 0.0
    %888 = vmatpush1.msra.mxu0 0.0
    %889 = vmatprep.subr.mxu0 0.0
    %890 = vmatpush1.msra.mxu0 0.0
    %891 = vmatprep.subr.mxu0 0.0
    %892 = vmatpush1.msra.mxu0 0.0
    %893 = vmatprep.subr.mxu0 0.0
    %894 = vmatpush1.msra.mxu0 0.0
    %895 = vmatprep.subr.mxu0 0.0
    %896 = vmatpush1.msra.mxu0 0.0
    %897 = vmatprep.subr.mxu0 0.0
    %898 = vmatpush1.msra.mxu0 0.0
    %899 = vmatprep.subr.mxu0 0.0
    %900 = vmatpush1.msra.mxu0 0.0
    %901 = vmatprep.mubr.f32.mxu0 0.0
    %902 = vmatmul.mubr.f32.gmra.mrb[0].mxu0 %v819
    %v903 = vpop.f32.mrb[0].mxu0
    %v904 = vadd.f32 0.0, %v903
    %v905 = vpop.f32.mrb[0].mxu0
    %906 = vmatprep.mubr.f32.mxu0 0.0
    %907 = vmatmul.mubr.f32.gmra.mrb[0].mxu0 %v820
    %v908 = vpop.f32.mrb[0].mxu0
    %v909 = vadd.f32 0.0, %v908
    %v910 = vpop.f32.mrb[0].mxu0
    %911 = vdwg.mxu0
    %v912 = vadd.f32 %v719, %v904
    %v913 = vadd.f32 %v720, %v909
    %v914 = vld [vmem:[%s6] sm:$0x1]
    %v916 = vlaneseq
    %v917 = vshrl.u32 %v916, 7
    %v918 = vsub.s32 0, %v917
    %v919 = vrot.slane %v914, %v918
    %v921 = vadd.f32 %v912, %v919
    %v922 = vadd.f32 %v913, %v919
    %v923 = vrot.slane %v921, 4
    %v924 = vadd.f32 %v921, %v923
    %v925 = vrot.slane %v924, 2
    %v926 = vadd.f32 %v924, %v925
    %v927 = vrot.slane %v926, 1
    %v928 = vadd.f32 %v926, %v927
    %v929 = vrot.slane %v922, 4
    %v930 = vadd.f32 %v922, %v929
    %v931 = vrot.slane %v930, 2
    %v932 = vadd.f32 %v930, %v931
    %v933 = vrot.slane %v932, 1
    %v934 = vadd.f32 %v932, %v933
    %v935 = vld [vmem:[#allocation11] sm:$0xff]
    %v936 = vld [vmem:[#allocation11 + $0x8] sm:$0xff]
    %v937 = vld [vmem:[#allocation11 + $0x10] sm:$0xff]
    %v938 = vld [vmem:[#allocation11 + $0x18] sm:$0xff]
    %v939 = vld [vmem:[#allocation11 + $0x20] sm:$0xff]
    %v940 = vld [vmem:[#allocation11 + $0x28] sm:$0xff]
    %v941 = vld [vmem:[#allocation11 + $0x30] sm:$0xff]
    %v942 = vld [vmem:[#allocation11 + $0x38] sm:$0xff]
    %v943 = vld [vmem:[#allocation11 + $0x40] sm:$0xff]
    %v944 = vld [vmem:[#allocation11 + $0x48] sm:$0xff]
    %v945 = vld [vmem:[#allocation11 + $0x50] sm:$0xff]
    %v946 = vld [vmem:[#allocation11 + $0x58] sm:$0xff]
    %v947 = vld [vmem:[#allocation11 + $0x60] sm:$0xff]
    %v948 = vld [vmem:[#allocation11 + $0x68] sm:$0xff]
    %v949 = vld [vmem:[#allocation11 + $0x70] sm:$0xff]
    %v950 = vld [vmem:[#allocation11 + $0x78] sm:$0xff]
    %v951 = vld [vmem:[#allocation11 + $0x80] sm:$0xff]
    %v952 = vld [vmem:[#allocation11 + $0x88] sm:$0xff]
    %v953 = vld [vmem:[#allocation11 + $0x90] sm:$0xff]
    %v954 = vld [vmem:[#allocation11 + $0x98] sm:$0xff]
    %v955 = vld [vmem:[#allocation11 + $0xa0] sm:$0xff]
    %v956 = vld [vmem:[#allocation11 + $0xa8] sm:$0xff]
    %v957 = vld [vmem:[#allocation11 + $0xb0] sm:$0xff]
    %v958 = vld [vmem:[#allocation11 + $0xb8] sm:$0xff]
    %v959 = vld [vmem:[#allocation11 + $0xc0] sm:$0xff]
    %v960 = vld [vmem:[#allocation11 + $0xc8] sm:$0xff]
    %v961 = vld [vmem:[#allocation11 + $0xd0] sm:$0xff]
    %v962 = vld [vmem:[#allocation11 + $0xd8] sm:$0xff]
    %v963 = vld [vmem:[#allocation11 + $0xe0] sm:$0xff]
    %v964 = vld [vmem:[#allocation11 + $0xe8] sm:$0xff]
    %v965 = vld [vmem:[#allocation11 + $0xf0] sm:$0xff]
    %v966 = vld [vmem:[#allocation11 + $0xf8] sm:$0xff]
    %v967 = vld [vmem:[#allocation11 + $0x100] sm:$0xff]
    %v968 = vld [vmem:[#allocation11 + $0x108] sm:$0xff]
    %v969 = vld [vmem:[#allocation11 + $0x110] sm:$0xff]
    %v970 = vld [vmem:[#allocation11 + $0x118] sm:$0xff]
    %v971 = vld [vmem:[#allocation11 + $0x120] sm:$0xff]
    %v972 = vld [vmem:[#allocation11 + $0x128] sm:$0xff]
    %v973 = vld [vmem:[#allocation11 + $0x130] sm:$0xff]
    %v974 = vld [vmem:[#allocation11 + $0x138] sm:$0xff]
    %v975 = vld [vmem:[#allocation11 + $0x140] sm:$0xff]
    %v976 = vld [vmem:[#allocation11 + $0x148] sm:$0xff]
    %v977 = vld [vmem:[#allocation11 + $0x150] sm:$0xff]
    %v978 = vld [vmem:[#allocation11 + $0x158] sm:$0xff]
    %v979 = vld [vmem:[#allocation11 + $0x160] sm:$0xff]
    %v980 = vld [vmem:[#allocation11 + $0x168] sm:$0xff]
    %v981 = vld [vmem:[#allocation11 + $0x170] sm:$0xff]
    %v982 = vld [vmem:[#allocation11 + $0x178] sm:$0xff]
    %v983 = vld [vmem:[#allocation11 + $0x180] sm:$0xff]
    %v984 = vld [vmem:[#allocation11 + $0x188] sm:$0xff]
    %v985 = vld [vmem:[#allocation11 + $0x190] sm:$0xff]
    %v986 = vld [vmem:[#allocation11 + $0x198] sm:$0xff]
    %v987 = vld [vmem:[#allocation11 + $0x1a0] sm:$0xff]
    %v988 = vld [vmem:[#allocation11 + $0x1a8] sm:$0xff]
    %v989 = vld [vmem:[#allocation11 + $0x1b0] sm:$0xff]
    %v990 = vld [vmem:[#allocation11 + $0x1b8] sm:$0xff]
    %v991 = vld [vmem:[#allocation11 + $0x1c0] sm:$0xff]
    %v992 = vld [vmem:[#allocation11 + $0x1c8] sm:$0xff]
    %v993 = vld [vmem:[#allocation11 + $0x1d0] sm:$0xff]
    %v994 = vld [vmem:[#allocation11 + $0x1d8] sm:$0xff]
    %v995 = vld [vmem:[#allocation11 + $0x1e0] sm:$0xff]
    %v996 = vld [vmem:[#allocation11 + $0x1e8] sm:$0xff]
    %v997 = vld [vmem:[#allocation11 + $0x1f0] sm:$0xff]
    %v998 = vld [vmem:[#allocation11 + $0x1f8] sm:$0xff]
    %v999 = vld [vmem:[%s8] sm:$0xf]
    %v1000 = vmul.f32 %v999, 8.0
    %v1002 = vlaneseq
    %v1003 = vshrl.u32 %v1002, 7
    %v1004 = vsub.s32 0, %v1003
    %v1005 = vrot.slane %v1000, %v1004
    %v1006 = vlaneseq
    %v1007 = vshrl.u32 %v1006, 7
    %v1008 = vsub.s32 1, %v1007
    %v1009 = vrot.slane %v1000, %v1008
    %v1010 = vlaneseq
    %v1011 = vshrl.u32 %v1010, 7
    %v1012 = vsub.s32 2, %v1011
    %v1013 = vrot.slane %v1000, %v1012
    %v1014 = vlaneseq
    %v1015 = vshrl.u32 %v1014, 7
    %v1016 = vsub.s32 3, %v1015
    %v1017 = vrot.slane %v1000, %v1016
    %vm1024 = vcmask 1041409
    %v1025 = vsel %vm1024, %v934, %v928
    %1027 = vmatprep.subr.mxu0 %v936
    %1028 = vmatpush1.msra.mxu0 %v935
    %1029 = vmatprep.subr.mxu0 %v940
    %1030 = vmatpush1.msra.mxu0 %v939
    %1031 = vmatprep.subr.mxu0 %v944
    %1032 = vmatpush1.msra.mxu0 %v943
    %1033 = vmatprep.subr.mxu0 %v948
    %1034 = vmatpush1.msra.mxu0 %v947
    %1035 = vmatprep.subr.mxu0 %v952
    %1036 = vmatpush1.msra.mxu0 %v951
    %1037 = vmatprep.subr.mxu0 %v956
    %1038 = vmatpush1.msra.mxu0 %v955
    %1039 = vmatprep.subr.mxu0 %v960
    %1040 = vmatpush1.msra.mxu0 %v959
    %1041 = vmatprep.subr.mxu0 %v964
    %1042 = vmatpush1.msra.mxu0 %v963
    %1043 = vmatprep.subr.mxu0 %v968
    %1044 = vmatpush1.msra.mxu0 %v967
    %1045 = vmatprep.subr.mxu0 %v972
    %1046 = vmatpush1.msra.mxu0 %v971
    %1047 = vmatprep.subr.mxu0 %v976
    %1048 = vmatpush1.msra.mxu0 %v975
    %1049 = vmatprep.subr.mxu0 %v980
    %1050 = vmatpush1.msra.mxu0 %v979
    %1051 = vmatprep.subr.mxu0 %v984
    %1052 = vmatpush1.msra.mxu0 %v983
    %1053 = vmatprep.subr.mxu0 %v988
    %1054 = vmatpush1.msra.mxu0 %v987
    %1055 = vmatprep.subr.mxu0 %v992
    %1056 = vmatpush1.msra.mxu0 %v991
    %1057 = vmatprep.subr.mxu0 %v996
    %1058 = vmatpush1.msra.mxu0 %v995
    %1059 = vmatprep.subr.mxu0 0.0
    %1060 = vmatpush1.msra.mxu0 0.0
    %1061 = vmatprep.subr.mxu0 0.0
    %1062 = vmatpush1.msra.mxu0 0.0
    %1063 = vmatprep.subr.mxu0 0.0
    %1064 = vmatpush1.msra.mxu0 0.0
    %1065 = vmatprep.subr.mxu0 0.0
    %1066 = vmatpush1.msra.mxu0 0.0
    %1067 = vmatprep.subr.mxu0 0.0
    %1068 = vmatpush1.msra.mxu0 0.0
    %1069 = vmatprep.subr.mxu0 0.0
    %1070 = vmatpush1.msra.mxu0 0.0
    %1071 = vmatprep.subr.mxu0 0.0
    %1072 = vmatpush1.msra.mxu0 0.0
    %1073 = vmatprep.subr.mxu0 0.0
    %1074 = vmatpush1.msra.mxu0 0.0
    %1075 = vmatprep.subr.mxu0 0.0
    %1076 = vmatpush1.msra.mxu0 0.0
    %1077 = vmatprep.subr.mxu0 0.0
    %1078 = vmatpush1.msra.mxu0 0.0
    %1079 = vmatprep.subr.mxu0 0.0
    %1080 = vmatpush1.msra.mxu0 0.0
    %1081 = vmatprep.subr.mxu0 0.0
    %1082 = vmatpush1.msra.mxu0 0.0
    %1083 = vmatprep.subr.mxu0 0.0
    %1084 = vmatpush1.msra.mxu0 0.0
    %1085 = vmatprep.subr.mxu0 0.0
    %1086 = vmatpush1.msra.mxu0 0.0
    %1087 = vmatprep.subr.mxu0 0.0
    %1088 = vmatpush1.msra.mxu0 0.0
    %1089 = vmatprep.subr.mxu0 0.0
    %1090 = vmatpush1.msra.mxu0 0.0
    %1091 = vmatprep.mubr.f32.mxu0 0.0
    %1092 = vmatmul.mubr.f32.gmra.mrb[0].mxu0 %v1025
    %v1093 = vpop.f32.mrb[0].mxu0
    %v1094 = vadd.f32 %v1005, %v1093
    %v1095 = vpop.f32.mrb[0].mxu0
    %v1096 = vadd.f32 %v1009, %v1095
    %1097 = vdwg.mxu0
    %1098 = vmatprep.subr.mxu0 %v938
    %1099 = vmatpush1.msra.mxu0 %v937
    %1100 = vmatprep.subr.mxu0 %v942
    %1101 = vmatpush1.msra.mxu0 %v941
    %1102 = vmatprep.subr.mxu0 %v946
    %1103 = vmatpush1.msra.mxu0 %v945
    %1104 = vmatprep.subr.mxu0 %v950
    %1105 = vmatpush1.msra.mxu0 %v949
    %1106 = vmatprep.subr.mxu0 %v954
    %1107 = vmatpush1.msra.mxu0 %v953
    %1108 = vmatprep.subr.mxu0 %v958
    %1109 = vmatpush1.msra.mxu0 %v957
    %1110 = vmatprep.subr.mxu0 %v962
    %1111 = vmatpush1.msra.mxu0 %v961
    %1112 = vmatprep.subr.mxu0 %v966
    %1113 = vmatpush1.msra.mxu0 %v965
    %1114 = vmatprep.subr.mxu0 %v970
    %1115 = vmatpush1.msra.mxu0 %v969
    %1116 = vmatprep.subr.mxu0 %v974
    %1117 = vmatpush1.msra.mxu0 %v973
    %1118 = vmatprep.subr.mxu0 %v978
    %1119 = vmatpush1.msra.mxu0 %v977
    %1120 = vmatprep.subr.mxu0 %v982
    %1121 = vmatpush1.msra.mxu0 %v981
    %1122 = vmatprep.subr.mxu0 %v986
    %1123 = vmatpush1.msra.mxu0 %v985
    %1124 = vmatprep.subr.mxu0 %v990
    %1125 = vmatpush1.msra.mxu0 %v989
    %1126 = vmatprep.subr.mxu0 %v994
    %1127 = vmatpush1.msra.mxu0 %v993
    %1128 = vmatprep.subr.mxu0 %v998
    %1129 = vmatpush1.msra.mxu0 %v997
    %1130 = vmatprep.subr.mxu0 0.0
    %1131 = vmatpush1.msra.mxu0 0.0
    %1132 = vmatprep.subr.mxu0 0.0
    %1133 = vmatpush1.msra.mxu0 0.0
    %1134 = vmatprep.subr.mxu0 0.0
    %1135 = vmatpush1.msra.mxu0 0.0
    %1136 = vmatprep.subr.mxu0 0.0
    %1137 = vmatpush1.msra.mxu0 0.0
    %1138 = vmatprep.subr.mxu0 0.0
    %1139 = vmatpush1.msra.mxu0 0.0
    %1140 = vmatprep.subr.mxu0 0.0
    %1141 = vmatpush1.msra.mxu0 0.0
    %1142 = vmatprep.subr.mxu0 0.0
    %1143 = vmatpush1.msra.mxu0 0.0
    %1144 = vmatprep.subr.mxu0 0.0
    %1145 = vmatpush1.msra.mxu0 0.0
    %1146 = vmatprep.subr.mxu0 0.0
    %1147 = vmatpush1.msra.mxu0 0.0
    %1148 = vmatprep.subr.mxu0 0.0
    %1149 = vmatpush1.msra.mxu0 0.0
    %1150 = vmatprep.subr.mxu0 0.0
    %1151 = vmatpush1.msra.mxu0 0.0
    %1152 = vmatprep.subr.mxu0 0.0
    %1153 = vmatpush1.msra.mxu0 0.0
    %1154 = vmatprep.subr.mxu0 0.0
    %1155 = vmatpush1.msra.mxu0 0.0
    %1156 = vmatprep.subr.mxu0 0.0
    %1157 = vmatpush1.msra.mxu0 0.0
    %1158 = vmatprep.subr.mxu0 0.0
    %1159 = vmatpush1.msra.mxu0 0.0
    %1160 = vmatprep.subr.mxu0 0.0
    %1161 = vmatpush1.msra.mxu0 0.0
    %1162 = vmatprep.mubr.f32.mxu0 0.0
    %1163 = vmatmul.mubr.f32.gmra.mrb[0].mxu0 %v1025
    %v1164 = vpop.f32.mrb[0].mxu0
    %v1165 = vadd.f32 %v1013, %v1164
    %v1166 = vpop.f32.mrb[0].mxu0
    %v1167 = vadd.f32 %v1017, %v1166
    %1168 = vdwg.mxu0
    %v1169 = vcombine.low %v1094, %v1165
    %v1171 = vunpack.c.l.s4 1983009808
    %v1172 = vunpack.c.0.s8 %v1171
    %v1173 = vlaneseq
    %v1174 = vshrl.u32 %v1173, 7
    %v1175 = vsub.s32 %v1172, %v1174
    %v1176 = vrot.slane %v1169, %v1175
    %v1177 = vcombine.low %v1096, %v1167
    %v1179 = vunpack.c.l.s4 1983009808
    %v1180 = vunpack.c.0.s8 %v1179
    %v1181 = vlaneseq
    %v1182 = vshrl.u32 %v1181, 7
    %v1183 = vsub.s32 %v1180, %v1182
    %v1184 = vrot.slane %v1177, %v1183
    %v1185 = vcombine.low %v1176, %v1184
    %v1187 = vunpack.c.l.s4 1934713408
    %v1188 = vunpack.c.0.s8 %v1187
    %v1189 = vlaneseq
    %v1190 = vshrl.u32 %v1189, 7
    %v1191 = vsub.s32 %v1188, %v1190
    %v1192 = vrot.slane %v1185, %v1191
    %v1193 = vcombine.high %v1192, 0.0
    %v1194 = vlaneseq
    %v1195 = vand.u32 %v1194, 127
    %vm1196 = vcmp.lt.s32.totalorder %v1195, 5
    %v1197 = vsel %vm1196, 1, 0
    %vm1198 = vcmp.eq.s32.totalorder %v1197, 1
    %v1199 = vsel %vm1198, %v1192, -inf
    %v1200 = vsel %vm1198, %v1193, -inf
    %vm1201 = vcmask 1043456
    %v1202 = vsel %vm1201, %v1199, -inf
    %1203 = vmax.xlane.f32.xlu0 %v1202
    %v1204 = vpop.xlane.xlu0 %1203
    %v1205 = vsel %vm1201, %v1200, -inf
    %1206 = vmax.xlane.f32.xlu0 %v1205
    %v1207 = vpop.xlane.xlu0 %1206
    %v1208 = vsub.f32 %v1199, %v1204
    %v1209 = vsub.f32 %v1200, %v1207
    %v1210 = vmul.f32 %v1208, 1.442695
    %v1211 = vpow.pop %v1210
    %v1212 = vmul.f32 %v1209, 1.442695
    %v1213 = vpow.pop %v1212
    %v1214 = vsel %vm1201, %v1211, 0.0
    %1215 = vadd.xlane.f32.xlu0 %v1214
    %v1216 = vpop.xlane.xlu0 %1215
    %v1217 = vsel %vm1201, %v1213, 0.0
    %1218 = vadd.xlane.f32.xlu0 %v1217
    %v1219 = vpop.xlane.xlu0 %1218
    %v1220 = vlog2.pop %v1216
    %v1221 = vmul.f32 %v1220, 0.6931472
    %v1222 = vlog2.pop %v1219
    %v1223 = vmul.f32 %v1222, 0.6931472
    %v1224 = vadd.f32 %v1204, %v1221
    %v1225 = vadd.f32 %v1207, %v1223
    %v1226 = vsub.f32 %v1199, %v1224
    %v1227 = vsub.f32 %v1200, %v1225
    %1228 = vst [vmem:[#allocation13] sm:$0xf] %v1226
    %1229 = vst [vmem:[#allocation13 + $0x4] sm:$0xf] %v1227
    // Predicated region
    $region62: #{tpu_custom_call.1} parent=1 // pred_check
      _
    $region63: #{tpu_custom_call.1} parent=1 // pred_check_branch
      %1231 = sbr.rel (0) target = $region65
    $region64: #{tpu_custom_call.1} parent=1 // pred_region
      %s1233 = ssub.s32 128, 128
      %1234 = vsyncadd [#allocation4], %s1233
      %s1235 = sshll.u32 [#allocation13], 4
      %s1236 = int_to_ptr.vmem [resolvable:$true] %s1235
      %1241 = dma.vmem_to_hbm [thread:$0]  %s1236, 128, %s9, [#allocation4], 64, 64, 4
    $region65: #{tpu_custom_call.1} parent=1 // pred_fallthru
      _
    // Predicated region
    $region66: #{tpu_custom_call.1} parent=1 // pred_check
      _
    $region67: #{tpu_custom_call.1} parent=1 // pred_check_branch
      %1243 = sbr.rel (0) target = $region69
    $region68: #{tpu_custom_call.1} parent=1 // pred_region
      %1244 = dma.done [#allocation4], 128
    $region69: #{tpu_custom_call.1} parent=1 // pred_fallthru
      _
    %1245 = vsyncpa [#allocation3], 1
    %1246 = vsyncpa [#allocation6], 1
    %1247 = vsyncpa [#allocation9], 1
    %1248 = vsyncpa [#allocation12], 1
    %1249 = vsyncpa [#allocation4], 1

// kernel: tpu_custom_call.1
$region0: #{tpu_custom_call.1}
  #allocation0 [shape = 'u32[]', space=smem, size = 0x4, offset = 0x4, fixed_abs, tag = 'smem constant byte address 0x4 - core index']
  #allocation1 [shape = 'u32[144,128]{1,0:T(1,128)}', space=vmem, size = 0x12000, scoped, tag = 'internal scratch']
  %s0 = inlined_call_operand.hbm [shape: f32[2,8,128], index: 0, kind: input, shape index: {}]
  %s1 = inlined_call_operand.hbm [shape: f32[128,384], index: 1, kind: input, shape index: {}]
  %s2 = inlined_call_operand.hbm [shape: f32[128,128], index: 2, kind: input, shape index: {}]
  %s3 = inlined_call_operand.hbm [shape: f32[128,128], index: 3, kind: input, shape index: {}]
  %s4 = inlined_call_operand.vmem [shape: f32[1,128], index: 4, kind: input, shape index: {}]
  %s5 = inlined_call_operand.hbm [shape: f32[128,128], index: 5, kind: input, shape index: {}]
  %s6 = inlined_call_operand.vmem [shape: f32[1,128], index: 6, kind: input, shape index: {}]
  %s7 = inlined_call_operand.hbm [shape: f32[128,512], index: 7, kind: input, shape index: {}]
  %s8 = inlined_call_operand.vmem [shape: f32[1,512], index: 8, kind: input, shape index: {}]
  %s9 = inlined_call_operand.hbm [shape: f32[2,4,128], index: 9, kind: output, shape index: {}]
  %s10 = sld [smem:[#allocation0]]
  $region70: #{tpu_custom_call.1} parent=0
    _
  %s12 = ssub.s32 1, %s10
  %s13 = scalar_select 0, %s12, %s10
  $region1: #{tpu_custom_call.1} parent=0
    #allocation2 [shape = 'u8[8192]{0}', space=vmem, size = 0x2000, scoped, tag = 'input window, operand 0, single buffered']
    #allocation3 [shape = 's32[1]{0}', space=sflag, size = 0x4, scoped, tag = 'scoped memory for tpu_custom_call.1']
    #allocation4 [shape = 's32[1]{0}', space=sflag, size = 0x4, scoped, tag = 'scoped memory for tpu_custom_call.1']
    #allocation5 [shape = 'u8[196608]{0}', space=vmem, size = 0x30000, scoped, tag = 'input window, operand 1, single buffered']
    #allocation6 [shape = 's32[1]{0}', space=sflag, size = 0x4, scoped, tag = 'scoped memory for tpu_custom_call.1']
    #allocation7 [shape = 'u8[65536]{0}', space=vmem, size = 0x10000, scoped, tag = 'input window, operand 2, single buffered']
    #allocation8 [shape = 'u8[65536]{0}', space=vmem, size = 0x10000, scoped, tag = 'input window, operand 3, single buffered']
    #allocation9 [shape = 's32[1]{0}', space=sflag, size = 0x4, scoped, tag = 'scoped memory for tpu_custom_call.1']
    #allocation10 [shape = 'u8[65536]{0}', space=vmem, size = 0x10000, scoped, tag = 'input window, operand 5, single buffered']
    #allocation11 [shape = 'u8[262144]{0}', space=vmem, size = 0x40000, scoped, tag = 'input window, operand 7, single buffered']
    #allocation12 [shape = 's32[1]{0}', space=sflag, size = 0x4, scoped, tag = 'scoped memory for tpu_custom_call.1']
    #allocation13 [shape = 'u8[4096]{0}', space=vmem, size = 0x1000, scoped, tag = 'output window, operand 0, single buffered']
    %14 = vsyncpa [#allocation3], 0
    %15 = vsyncpa [#allocation6], 0
    %16 = vsyncpa [#allocation9], 0
    %17 = vsyncpa [#allocation12], 0
    %18 = vsyncpa [#allocation4], 0
    // Predicated region
    $region2: #{tpu_custom_call.1} parent=1 // pred_check
      _
    $region3: #{tpu_custom_call.1} parent=1 // pred_check_branch
      %20 = sbr.rel (0) target = $region5
    $region4: #{tpu_custom_call.1} parent=1 // pred_region
      %s22 = ssub.s32 256, 256
      %23 = vsyncadd [#allocation3], %s22
      %s24 = sshll.u32 [#allocation2], 4
      %s25 = int_to_ptr.vmem [resolvable:$true] %s24
      %30 = dma.hbm_to_vmem [thread:$0]  %s0, 256, %s25, [#allocation3], 128, 128, 8
    $region5: #{tpu_custom_call.1} parent=1 // pred_fallthru
      _
    // Predicated region
    $region6: #{tpu_custom_call.1} parent=1 // pred_check
      _
    $region7: #{tpu_custom_call.1} parent=1 // pred_check_branch
      %32 = sbr.rel (0) target = $region9
    $region8: #{tpu_custom_call.1} parent=1 // pred_region
      %s34 = ssub.s32 6144, 6144
      %35 = vsyncadd [#allocation6], %s34
      %s36 = sshll.u32 [#allocation5], 4
      %s37 = int_to_ptr.vmem [resolvable:$true] %s36
      %42 = dma.hbm_to_vmem [thread:$0]  %s1, 6144, %s37, [#allocation6], 384, 384, 24
    $region9: #{tpu_custom_call.1} parent=1 // pred_fallthru
      _
    // Predicated region
    $region10: #{tpu_custom_call.1} parent=1 // pred_check
      _
    $region11: #{tpu_custom_call.1} parent=1 // pred_check_branch
      %44 = sbr.rel (0) target = $region13
    $region12: #{tpu_custom_call.1} parent=1 // pred_region
      %s46 = ssub.s32 2048, 2048
      %47 = vsyncadd [#allocation6], %s46
      %s48 = sshll.u32 [#allocation7], 4
      %s49 = int_to_ptr.vmem [resolvable:$true] %s48
      %54 = dma.hbm_to_vmem [thread:$0]  %s2, 2048, %s49, [#allocation6], 128, 128, 8
    $region13: #{tpu_custom_call.1} parent=1 // pred_fallthru
      _
    // Predicated region
    $region14: #{tpu_custom_call.1} parent=1 // pred_check
      _
    $region15: #{tpu_custom_call.1} parent=1 // pred_check_branch
      %56 = sbr.rel (0) target = $region17
    $region16: #{tpu_custom_call.1} parent=1 // pred_region
      %s58 = ssub.s32 2048, 2048
      %59 = vsyncadd [#allocation9], %s58
      %s60 = sshll.u32 [#allocation8], 4
      %s61 = int_to_ptr.vmem [resolvable:$true] %s60
      %66 = dma.hbm_to_vmem [thread:$0]  %s3, 2048, %s61, [#allocation9], 128, 128, 8
    $region17: #{tpu_custom_call.1} parent=1 // pred_fallthru
      _
    // Predicated region
    $region18: #{tpu_custom_call.1} parent=1 // pred_check
      _
    $region19: #{tpu_custom_call.1} parent=1 // pred_check_branch
      %68 = sbr.rel (0) target = $region21
    $region20: #{tpu_custom_call.1} parent=1 // pred_region
      _
    $region21: #{tpu_custom_call.1} parent=1 // pred_fallthru
      _
    // Predicated region
    $region22: #{tpu_custom_call.1} parent=1 // pred_check
      _
    $region23: #{tpu_custom_call.1} parent=1 // pred_check_branch
      %70 = sbr.rel (0) target = $region25
    $region24: #{tpu_custom_call.1} parent=1 // pred_region
      %s72 = ssub.s32 2048, 2048
      %73 = vsyncadd [#allocation9], %s72
      %s74 = sshll.u32 [#allocation10], 4
      %s75 = int_to_ptr.vmem [resolvable:$true] %s74
      %80 = dma.hbm_to_vmem [thread:$0]  %s5, 2048, %s75, [#allocation9], 128, 128, 8
    $region25: #{tpu_custom_call.1} parent=1 // pred_fallthru
      _
    // Predicated region
    $region26: #{tpu_custom_call.1} parent=1 // pred_check
      _
    $region27: #{tpu_custom_call.1} parent=1 // pred_check_branch
      %82 = sbr.rel (0) target = $region29
    $region28: #{tpu_custom_call.1} parent=1 // pred_region
      _
    $region29: #{tpu_custom_call.1} parent=1 // pred_fallthru
      _
    // Predicated region
    $region30: #{tpu_custom_call.1} parent=1 // pred_check
      _
    $region31: #{tpu_custom_call.1} parent=1 // pred_check_branch
      %84 = sbr.rel (0) target = $region33
    $region32: #{tpu_custom_call.1} parent=1 // pred_region
      %s86 = ssub.s32 8192, 8192
      %87 = vsyncadd [#allocation12], %s86
      %s88 = sshll.u32 [#allocation11], 4
      %s89 = int_to_ptr.vmem [resolvable:$true] %s88
      %94 = dma.hbm_to_vmem [thread:$0]  %s7, 8192, %s89, [#allocation12], 512, 512, 32
    $region33: #{tpu_custom_call.1} parent=1 // pred_fallthru
      _
    // Predicated region
    $region34: #{tpu_custom_call.1} parent=1 // pred_check
      _
    $region35: #{tpu_custom_call.1} parent=1 // pred_check_branch
      %96 = sbr.rel (0) target = $region37
    $region36: #{tpu_custom_call.1} parent=1 // pred_region
      _
    $region37: #{tpu_custom_call.1} parent=1 // pred_fallthru
      _
    // Predicated region
    $region38: #{tpu_custom_call.1} parent=1 // pred_check
      _
    $region39: #{tpu_custom_call.1} parent=1 // pred_check_branch
      %98 = sbr.rel (0) target = $region41
    $region40: #{tpu_custom_call.1} parent=1 // pred_region
      %99 = dma.done [#allocation3], 256
    $region41: #{tpu_custom_call.1} parent=1 // pred_fallthru
      _
    // Predicated region
    $region42: #{tpu_custom_call.1} parent=1 // pred_check
      _
    $region43: #{tpu_custom_call.1} parent=1 // pred_check_branch
      %101 = sbr.rel (0) target = $region45
    $region44: #{tpu_custom_call.1} parent=1 // pred_region
      %102 = dma.done [#allocation6], 6144
    $region45: #{tpu_custom_call.1} parent=1 // pred_fallthru
      _
    // Predicated region
    $region46: #{tpu_custom_call.1} parent=1 // pred_check
      _
    $region47: #{tpu_custom_call.1} parent=1 // pred_check_branch
      %104 = sbr.rel (0) target = $region49
    $region48: #{tpu_custom_call.1} parent=1 // pred_region
      %105 = dma.done [#allocation6], 2048
    $region49: #{tpu_custom_call.1} parent=1 // pred_fallthru
      _
    // Predicated region
    $region50: #{tpu_custom_call.1} parent=1 // pred_check
      _
    $region51: #{tpu_custom_call.1} parent=1 // pred_check_branch
      %107 = sbr.rel (0) target = $region53
    $region52: #{tpu_custom_call.1} parent=1 // pred_region
      %108 = dma.done [#allocation9], 2048
    $region53: #{tpu_custom_call.1} parent=1 // pred_fallthru
      _
    // Predicated region
    $region54: #{tpu_custom_call.1} parent=1 // pred_check
      _
    $region55: #{tpu_custom_call.1} parent=1 // pred_check_branch
      %110 = sbr.rel (0) target = $region57
    $region56: #{tpu_custom_call.1} parent=1 // pred_region
      %111 = dma.done [#allocation9], 2048
    $region57: #{tpu_custom_call.1} parent=1 // pred_fallthru
      _
    // Predicated region
    $region58: #{tpu_custom_call.1} parent=1 // pred_check
      _
    $region59: #{tpu_custom_call.1} parent=1 // pred_check_branch
      %113 = sbr.rel (0) target = $region61
    $region60: #{tpu_custom_call.1} parent=1 // pred_region
      %114 = dma.done [#allocation12], 8192
    $region61: #{tpu_custom_call.1} parent=1 // pred_fallthru
      _
    %v115 = vld [vmem:[#allocation2] sm:$0xff]
    %v116 = vld [vmem:[#allocation2 + $0x8] sm:$0xff]
    %v117 = vld [vmem:[#allocation5] sm:$0xff]
    %v118 = vld [vmem:[#allocation5 + $0x8] sm:$0xff]
    %v119 = vld [vmem:[#allocation5 + $0x10] sm:$0xff]
    %v120 = vld [vmem:[#allocation5 + $0x18] sm:$0xff]
    %v121 = vld [vmem:[#allocation5 + $0x20] sm:$0xff]
    %v122 = vld [vmem:[#allocation5 + $0x28] sm:$0xff]
    %v123 = vld [vmem:[#allocation5 + $0x30] sm:$0xff]
    %v124 = vld [vmem:[#allocation5 + $0x38] sm:$0xff]
    %v125 = vld [vmem:[#allocation5 + $0x40] sm:$0xff]
    %v126 = vld [vmem:[#allocation5 + $0x48] sm:$0xff]
    %v127 = vld [vmem:[#allocation5 + $0x50] sm:$0xff]
    %v128 = vld [vmem:[#allocation5 + $0x58] sm:$0xff]
    %v129 = vld [vmem:[#allocation5 + $0x60] sm:$0xff]
    %v130 = vld [vmem:[#allocation5 + $0x68] sm:$0xff]
    %v131 = vld [vmem:[#allocation5 + $0x70] sm:$0xff]
    %v132 = vld [vmem:[#allocation5 + $0x78] sm:$0xff]
    %v133 = vld [vmem:[#allocation5 + $0x80] sm:$0xff]
    %v134 = vld [vmem:[#allocation5 + $0x88] sm:$0xff]
    %v135 = vld [vmem:[#allocation5 + $0x90] sm:$0xff]
    %v136 = vld [vmem:[#allocation5 + $0x98] sm:$0xff]
    %v137 = vld [vmem:[#allocation5 + $0xa0] sm:$0xff]
    %v138 = vld [vmem:[#allocation5 + $0xa8] sm:$0xff]
    %v139 = vld [vmem:[#allocation5 + $0xb0] sm:$0xff]
    %v140 = vld [vmem:[#allocation5 + $0xb8] sm:$0xff]
    %v141 = vld [vmem:[#allocation5 + $0xc0] sm:$0xff]
    %v142 = vld [vmem:[#allocation5 + $0xc8] sm:$0xff]
    %v143 = vld [vmem:[#allocation5 + $0xd0] sm:$0xff]
    %v144 = vld [vmem:[#allocation5 + $0xd8] sm:$0xff]
    %v145 = vld [vmem:[#allocation5 + $0xe0] sm:$0xff]
    %v146 = vld [vmem:[#allocation5 + $0xe8] sm:$0xff]
    %v147 = vld [vmem:[#allocation5 + $0xf0] sm:$0xff]
    %v148 = vld [vmem:[#allocation5 + $0xf8] sm:$0xff]
    %v149 = vld [vmem:[#allocation5 + $0x100] sm:$0xff]
    %v150 = vld [vmem:[#allocation5 + $0x108] sm:$0xff]
    %v151 = vld [vmem:[#allocation5 + $0x110] sm:$0xff]
    %v152 = vld [vmem:[#allocation5 + $0x118] sm:$0xff]
    %v153 = vld [vmem:[#allocation5 + $0x120] sm:$0xff]
    %v154 = vld [vmem:[#allocation5 + $0x128] sm:$0xff]
    %v155 = vld [vmem:[#allocation5 + $0x130] sm:$0xff]
    %v156 = vld [vmem:[#allocation5 + $0x138] sm:$0xff]
    %v157 = vld [vmem:[#allocation5 + $0x140] sm:$0xff]
    %v158 = vld [vmem:[#allocation5 + $0x148] sm:$0xff]
    %v159 = vld [vmem:[#allocation5 + $0x150] sm:$0xff]
    %v160 = vld [vmem:[#allocation5 + $0x158] sm:$0xff]
    %v161 = vld [vmem:[#allocation5 + $0x160] sm:$0xff]
    %v162 = vld [vmem:[#allocation5 + $0x168] sm:$0xff]
    %v163 = vld [vmem:[#allocation5 + $0x170] sm:$0xff]
    %v164 = vld [vmem:[#allocation5 + $0x178] sm:$0xff]
    %165 = vmatprep.subr.mxu0 %v118
    %166 = vmatpush1.msra.mxu0 %v117
    %167 = vmatprep.subr.mxu0 %v121
    %168 = vmatpush1.msra.mxu0 %v120
    %169 = vmatprep.subr.mxu0 %v124
    %170 = vmatpush1.msra.mxu0 %v123
    %171 = vmatprep.subr.mxu0 %v127
    %172 = vmatpush1.msra.mxu0 %v126
    %173 = vmatprep.subr.mxu0 %v130
    %174 = vmatpush1.msra.mxu0 %v129
    %175 = vmatprep.subr.mxu0 %v133
    %176 = vmatpush1.msra.mxu0 %v132
    %177 = vmatprep.subr.mxu0 %v136
    %178 = vmatpush1.msra.mxu0 %v135
    %179 = vmatprep.subr.mxu0 %v139
    %180 = vmatpush1.msra.mxu0 %v138
    %181 = vmatprep.subr.mxu0 %v142
    %182 = vmatpush1.msra.mxu0 %v141
    %183 = vmatprep.subr.mxu0 %v145
    %184 = vmatpush1.msra.mxu0 %v144
    %185 = vmatprep.subr.mxu0 %v148
    %186 = vmatpush1.msra.mxu0 %v147
    %187 = vmatprep.subr.mxu0 %v151
    %188 = vmatpush1.msra.mxu0 %v150
    %189 = vmatprep.subr.mxu0 %v154
    %190 = vmatpush1.msra.mxu0 %v153
    %191 = vmatprep.subr.mxu0 %v157
    %192 = vmatpush1.msra.mxu0 %v156
    %193 = vmatprep.subr.mxu0 %v160
    %194 = vmatpush1.msra.mxu0 %v159
    %195 = vmatprep.subr.mxu0 %v163
    %196 = vmatpush1.msra.mxu0 %v162
    %197 = vmatprep.subr.mxu0 0.0
    %198 = vmatpush1.msra.mxu0 0.0
    %199 = vmatprep.subr.mxu0 0.0
    %200 = vmatpush1.msra.mxu0 0.0
    %201 = vmatprep.subr.mxu0 0.0
    %202 = vmatpush1.msra.mxu0 0.0
    %203 = vmatprep.subr.mxu0 0.0
    %204 = vmatpush1.msra.mxu0 0.0
    %205 = vmatprep.subr.mxu0 0.0
    %206 = vmatpush1.msra.mxu0 0.0
    %207 = vmatprep.subr.mxu0 0.0
    %208 = vmatpush1.msra.mxu0 0.0
    %209 = vmatprep.subr.mxu0 0.0
    %210 = vmatpush1.msra.mxu0 0.0
    %211 = vmatprep.subr.mxu0 0.0
    %212 = vmatpush1.msra.mxu0 0.0
    %213 = vmatprep.subr.mxu0 0.0
    %214 = vmatpush1.msra.mxu0 0.0
    %215 = vmatprep.subr.mxu0 0.0
    %216 = vmatpush1.msra.mxu0 0.0
    %217 = vmatprep.subr.mxu0 0.0
    %218 = vmatpush1.msra.mxu0 0.0
    %219 = vmatprep.subr.mxu0 0.0
    %220 = vmatpush1.msra.mxu0 0.0
    %221 = vmatprep.subr.mxu0 0.0
    %222 = vmatpush1.msra.mxu0 0.0
    %223 = vmatprep.subr.mxu0 0.0
    %224 = vmatpush1.msra.mxu0 0.0
    %225 = vmatprep.subr.mxu0 0.0
    %226 = vmatpush1.msra.mxu0 0.0
    %227 = vmatprep.subr.mxu0 0.0
    %228 = vmatpush1.msra.mxu0 0.0
    %229 = vmatprep.mubr.f32.mxu0 0.0
    %230 = vmatmul.mubr.f32.gmra.mrb[0].mxu0 %v115
    %v231 = vpop.f32.mrb[0].mxu0
    %v232 = vadd.f32 0.0, %v231
    %v233 = vpop.f32.mrb[0].mxu0
    %v234 = vadd.f32 0.0, %v233
    %235 = vmatprep.mubr.f32.mxu0 0.0
    %236 = vmatmul.mubr.f32.gmra.mrb[0].mxu0 %v116
    %v237 = vpop.f32.mrb[0].mxu0
    %v238 = vadd.f32 0.0, %v237
    %v239 = vpop.f32.mrb[0].mxu0
    %v240 = vadd.f32 0.0, %v239
    %241 = vdwg.mxu0
    %242 = vmatprep.subr.mxu0 0.0
    %243 = vmatpush1.msra.mxu0 %v119
    %244 = vmatprep.subr.mxu0 0.0
    %245 = vmatpush1.msra.mxu0 %v122
    %246 = vmatprep.subr.mxu0 0.0
    %247 = vmatpush1.msra.mxu0 %v125
    %248 = vmatprep.subr.mxu0 0.0
    %249 = vmatpush1.msra.mxu0 %v128
    %250 = vmatprep.subr.mxu0 0.0
    %251 = vmatpush1.msra.mxu0 %v131
    %252 = vmatprep.subr.mxu0 0.0
    %253 = vmatpush1.msra.mxu0 %v134
    %254 = vmatprep.subr.mxu0 0.0
    %255 = vmatpush1.msra.mxu0 %v137
    %256 = vmatprep.subr.mxu0 0.0
    %257 = vmatpush1.msra.mxu0 %v140
    %258 = vmatprep.subr.mxu0 0.0
    %259 = vmatpush1.msra.mxu0 %v143
    %260 = vmatprep.subr.mxu0 0.0
    %261 = vmatpush1.msra.mxu0 %v146
    %262 = vmatprep.subr.mxu0 0.0
    %263 = vmatpush1.msra.mxu0 %v149
    %264 = vmatprep.subr.mxu0 0.0
    %265 = vmatpush1.msra.mxu0 %v152
    %266 = vmatprep.subr.mxu0 0.0
    %267 = vmatpush1.msra.mxu0 %v155
    %268 = vmatprep.subr.mxu0 0.0
    %269 = vmatpush1.msra.mxu0 %v158
    %270 = vmatprep.subr.mxu0 0.0
    %271 = vmatpush1.msra.mxu0 %v161
    %272 = vmatprep.subr.mxu0 0.0
    %273 = vmatpush1.msra.mxu0 %v164
    %274 = vmatprep.subr.mxu0 0.0
    %275 = vmatpush1.msra.mxu0 0.0
    %276 = vmatprep.subr.mxu0 0.0
    %277 = vmatpush1.msra.mxu0 0.0
    %278 = vmatprep.subr.mxu0 0.0
    %279 = vmatpush1.msra.mxu0 0.0
    %280 = vmatprep.subr.mxu0 0.0
    %281 = vmatpush1.msra.mxu0 0.0
    %282 = vmatprep.subr.mxu0 0.0
    %283 = vmatpush1.msra.mxu0 0.0
    %284 = vmatprep.subr.mxu0 0.0
    %285 = vmatpush1.msra.mxu0 0.0
    %286 = vmatprep.subr.mxu0 0.0
    %287 = vmatpush1.msra.mxu0 0.0
    %288 = vmatprep.subr.mxu0 0.0
    %289 = vmatpush1.msra.mxu0 0.0
    %290 = vmatprep.subr.mxu0 0.0
    %291 = vmatpush1.msra.mxu0 0.0
    %292 = vmatprep.subr.mxu0 0.0
    %293 = vmatpush1.msra.mxu0 0.0
    %294 = vmatprep.subr.mxu0 0.0
    %295 = vmatpush1.msra.mxu0 0.0
    %296 = vmatprep.subr.mxu0 0.0
    %297 = vmatpush1.msra.mxu0 0.0
    %298 = vmatprep.subr.mxu0 0.0
    %299 = vmatpush1.msra.mxu0 0.0
    %300 = vmatprep.subr.mxu0 0.0
    %301 = vmatpush1.msra.mxu0 0.0
    %302 = vmatprep.subr.mxu0 0.0
    %303 = vmatpush1.msra.mxu0 0.0
    %304 = vmatprep.subr.mxu0 0.0
    %305 = vmatpush1.msra.mxu0 0.0
    %306 = vmatprep.mubr.f32.mxu0 0.0
    %307 = vmatmul.mubr.f32.gmra.mrb[0].mxu0 %v115
    %v308 = vpop.f32.mrb[0].mxu0
    %v309 = vadd.f32 0.0, %v308
    %v310 = vpop.f32.mrb[0].mxu0
    %311 = vmatprep.mubr.f32.mxu0 0.0
    %312 = vmatmul.mubr.f32.gmra.mrb[0].mxu0 %v116
    %v313 = vpop.f32.mrb[0].mxu0
    %v314 = vadd.f32 0.0, %v313
    %v315 = vpop.f32.mrb[0].mxu0
    %316 = vdwg.mxu0
    %v317 = vmul.f32 %v232, 0.17677669
    %v318 = vmul.f32 %v238, 0.17677669
    %319 = vmatprep.subr.mxu0 0.0
    %320 = vmatpush1.xpose.msra.mxu0 %v234
    %321 = vmatprep.subr.mxu0 0.0
    %322 = vmatpush1.xpose.msra.mxu0 0.0
    %323 = vmatprep.subr.mxu0 0.0
    %324 = vmatpush1.xpose.msra.mxu0 0.0
    %325 = vmatprep.subr.mxu0 0.0
    %326 = vmatpush1.xpose.msra.mxu0 0.0
    %327 = vmatprep.subr.mxu0 0.0
    %328 = vmatpush1.xpose.msra.mxu0 0.0
    %329 = vmatprep.subr.mxu0 0.0
    %330 = vmatpush1.xpose.msra.mxu0 0.0
    %331 = vmatprep.subr.mxu0 0.0
    %332 = vmatpush1.xpose.msra.mxu0 0.0
    %333 = vmatprep.subr.mxu0 0.0
    %334 = vmatpush1.xpose.msra.mxu0 0.0
    %335 = vmatprep.subr.mxu0 0.0
    %336 = vmatpush1.xpose.msra.mxu0 0.0
    %337 = vmatprep.subr.mxu0 0.0
    %338 = vmatpush1.xpose.msra.mxu0 0.0
    %339 = vmatprep.subr.mxu0 0.0
    %340 = vmatpush1.xpose.msra.mxu0 0.0
    %341 = vmatprep.subr.mxu0 0.0
    %342 = vmatpush1.xpose.msra.mxu0 0.0
    %343 = vmatprep.subr.mxu0 0.0
    %344 = vmatpush1.xpose.msra.mxu0 0.0
    %345 = vmatprep.subr.mxu0 0.0
    %346 = vmatpush1.xpose.msra.mxu0 0.0
    %347 = vmatprep.subr.mxu0 0.0
    %348 = vmatpush1.xpose.msra.mxu0 0.0
    %349 = vmatprep.subr.mxu0 0.0
    %350 = vmatpush1.xpose.msra.mxu0 0.0
    %351 = vmatprep.subr.mxu0 0.0
    %352 = vmatpush1.xpose.msra.mxu0 0.0
    %353 = vmatprep.subr.mxu0 0.0
    %354 = vmatpush1.xpose.msra.mxu0 0.0
    %355 = vmatprep.subr.mxu0 0.0
    %356 = vmatpush1.xpose.msra.mxu0 0.0
    %357 = vmatprep.subr.mxu0 0.0
    %358 = vmatpush1.xpose.msra.mxu0 0.0
    %359 = vmatprep.subr.mxu0 0.0
    %360 = vmatpush1.xpose.msra.mxu0 0.0
    %361 = vmatprep.subr.mxu0 0.0
    %362 = vmatpush1.xpose.msra.mxu0 0.0
    %363 = vmatprep.subr.mxu0 0.0
    %364 = vmatpush1.xpose.msra.mxu0 0.0
    %365 = vmatprep.subr.mxu0 0.0
    %366 = vmatpush1.xpose.msra.mxu0 0.0
    %367 = vmatprep.subr.mxu0 0.0
    %368 = vmatpush1.xpose.msra.mxu0 0.0
    %369 = vmatprep.subr.mxu0 0.0
    %370 = vmatpush1.xpose.msra.mxu0 0.0
    %371 = vmatprep.subr.mxu0 0.0
    %372 = vmatpush1.xpose.msra.mxu0 0.0
    %373 = vmatprep.subr.mxu0 0.0
    %374 = vmatpush1.xpose.msra.mxu0 0.0
    %375 = vmatprep.subr.mxu0 0.0
    %376 = vmatpush1.xpose.msra.mxu0 0.0
    %377 = vmatprep.subr.mxu0 0.0
    %378 = vmatpush1.xpose.msra.mxu0 0.0
    %379 = vmatprep.subr.mxu0 0.0
    %380 = vmatpush1.xpose.msra.mxu0 0.0
    %381 = vmatprep.subr.mxu0 0.0
    %382 = vmatpush1.xpose.msra.mxu0 0.0
    %383 = vmatprep.mubr.f32.mxu0 0.0
    %384 = vmatmul.mubr.f32.gmra.mrb[0].mxu0 %v317
    %v385 = vpop.f32.mrb[0].mxu0
    %v386 = vadd.f32 0.0, %v385
    %v387 = vpop.f32.mrb[0].mxu0
    %388 = vdwg.mxu0
    %389 = vmatprep.subr.mxu0 0.0
    %390 = vmatpush1.xpose.msra.mxu0 %v240
    %391 = vmatprep.subr.mxu0 0.0
    %392 = vmatpush1.xpose.msra.mxu0 0.0
    %393 = vmatprep.subr.mxu0 0.0
    %394 = vmatpush1.xpose.msra.mxu0 0.0
    %395 = vmatprep.subr.mxu0 0.0
    %396 = vmatpush1.xpose.msra.mxu0 0.0
    %397 = vmatprep.subr.mxu0 0.0
    %398 = vmatpush1.xpose.msra.mxu0 0.0
    %399 = vmatprep.subr.mxu0 0.0
    %400 = vmatpush1.xpose.msra.mxu0 0.0
    %401 = vmatprep.subr.mxu0 0.0
    %402 = vmatpush1.xpose.msra.mxu0 0.0
    %403 = vmatprep.subr.mxu0 0.0
    %404 = vmatpush1.xpose.msra.mxu0 0.0
    %405 = vmatprep.subr.mxu0 0.0
    %406 = vmatpush1.xpose.msra.mxu0 0.0
    %407 = vmatprep.subr.mxu0 0.0
    %408 = vmatpush1.xpose.msra.mxu0 0.0
    %409 = vmatprep.subr.mxu0 0.0
    %410 = vmatpush1.xpose.msra.mxu0 0.0
    %411 = vmatprep.subr.mxu0 0.0
    %412 = vmatpush1.xpose.msra.mxu0 0.0
    %413 = vmatprep.subr.mxu0 0.0
    %414 = vmatpush1.xpose.msra.mxu0 0.0
    %415 = vmatprep.subr.mxu0 0.0
    %416 = vmatpush1.xpose.msra.mxu0 0.0
    %417 = vmatprep.subr.mxu0 0.0
    %418 = vmatpush1.xpose.msra.mxu0 0.0
    %419 = vmatprep.subr.mxu0 0.0
    %420 = vmatpush1.xpose.msra.mxu0 0.0
    %421 = vmatprep.subr.mxu0 0.0
    %422 = vmatpush1.xpose.msra.mxu0 0.0
    %423 = vmatprep.subr.mxu0 0.0
    %424 = vmatpush1.xpose.msra.mxu0 0.0
    %425 = vmatprep.subr.mxu0 0.0
    %426 = vmatpush1.xpose.msra.mxu0 0.0
    %427 = vmatprep.subr.mxu0 0.0
    %428 = vmatpush1.xpose.msra.mxu0 0.0
    %429 = vmatprep.subr.mxu0 0.0
    %430 = vmatpush1.xpose.msra.mxu0 0.0
    %431 = vmatprep.subr.mxu0 0.0
    %432 = vmatpush1.xpose.msra.mxu0 0.0
    %433 = vmatprep.subr.mxu0 0.0
    %434 = vmatpush1.xpose.msra.mxu0 0.0
    %435 = vmatprep.subr.mxu0 0.0
    %436 = vmatpush1.xpose.msra.mxu0 0.0
    %437 = vmatprep.subr.mxu0 0.0
    %438 = vmatpush1.xpose.msra.mxu0 0.0
    %439 = vmatprep.subr.mxu0 0.0
    %440 = vmatpush1.xpose.msra.mxu0 0.0
    %441 = vmatprep.subr.mxu0 0.0
    %442 = vmatpush1.xpose.msra.mxu0 0.0
    %443 = vmatprep.subr.mxu0 0.0
    %444 = vmatpush1.xpose.msra.mxu0 0.0
    %445 = vmatprep.subr.mxu0 0.0
    %446 = vmatpush1.xpose.msra.mxu0 0.0
    %447 = vmatprep.subr.mxu0 0.0
    %448 = vmatpush1.xpose.msra.mxu0 0.0
    %449 = vmatprep.subr.mxu0 0.0
    %450 = vmatpush1.xpose.msra.mxu0 0.0
    %451 = vmatprep.subr.mxu0 0.0
    %452 = vmatpush1.xpose.msra.mxu0 0.0
    %453 = vmatprep.mubr.f32.mxu0 0.0
    %454 = vmatmul.mubr.f32.gmra.mrb[0].mxu0 %v318
    %v455 = vpop.f32.mrb[0].mxu0
    %v456 = vadd.f32 0.0, %v455
    %v457 = vpop.f32.mrb[0].mxu0
    %458 = vdwg.mxu0
    %vm459 = vcmask 64512
    %v460 = vsel %vm459, %v386, -inf
    %461 = vmax.xlane.f32.xlu0 %v460
    %v462 = vpop.xlane.xlu0 %461
    %v463 = vsel %vm459, %v456, -inf
    %464 = vmax.xlane.f32.xlu0 %v463
    %v465 = vpop.xlane.xlu0 %464
    %v466 = vsub.f32 %v386, %v462
    %v467 = vsub.f32 %v456, %v465
    %v468 = vmul.f32 %v466, 1.442695
    %v469 = vpow.pop %v468
    %v470 = vmul.f32 %v467, 1.442695
    %v471 = vpow.pop %v470
    %v472 = vsel %vm459, %v469, 0.0
    %473 = vadd.xlane.f32.xlu0 %v472
    %v474 = vpop.xlane.xlu0 %473
    %v475 = vsel %vm459, %v471, 0.0
    %476 = vadd.xlane.f32.xlu0 %v475
    %v477 = vpop.xlane.xlu0 %476
    %v478 = vrcp.pop %v474
    %v479 = vmul.f32 %v469, %v478
    %v480 = vrcp.pop %v477
    %v481 = vmul.f32 %v471, %v480
    %v483 = vsel %vm459, %v479, 0
    %485 = vmatprep.subr.mxu0 0.0
    %486 = vmatpush1.msra.mxu0 %v309
    %487 = vmatprep.subr.mxu0 0.0
    %488 = vmatpush1.msra.mxu0 0.0
    %489 = vmatprep.subr.mxu0 0.0
    %490 = vmatpush1.msra.mxu0 0.0
    %491 = vmatprep.subr.mxu0 0.0
    %492 = vmatpush1.msra.mxu0 0.0
    %493 = vmatprep.subr.mxu0 0.0
    %494 = vmatpush1.msra.mxu0 0.0
    %495 = vmatprep.subr.mxu0 0.0
    %496 = vmatpush1.msra.mxu0 0.0
    %497 = vmatprep.subr.mxu0 0.0
    %498 = vmatpush1.msra.mxu0 0.0
    %499 = vmatprep.subr.mxu0 0.0
    %500 = vmatpush1.msra.mxu0 0.0
    %501 = vmatprep.subr.mxu0 0.0
    %502 = vmatpush1.msra.mxu0 0.0
    %503 = vmatprep.subr.mxu0 0.0
    %504 = vmatpush1.msra.mxu0 0.0
    %505 = vmatprep.subr.mxu0 0.0
    %506 = vmatpush1.msra.mxu0 0.0
    %507 = vmatprep.subr.mxu0 0.0
    %508 = vmatpush1.msra.mxu0 0.0
    %509 = vmatprep.subr.mxu0 0.0
    %510 = vmatpush1.msra.mxu0 0.0
    %511 = vmatprep.subr.mxu0 0.0
    %512 = vmatpush1.msra.mxu0 0.0
    %513 = vmatprep.subr.mxu0 0.0
    %514 = vmatpush1.msra.mxu0 0.0
    %515 = vmatprep.subr.mxu0 0.0
    %516 = vmatpush1.msra.mxu0 0.0
    %517 = vmatprep.subr.mxu0 0.0
    %518 = vmatpush1.msra.mxu0 0.0
    %519 = vmatprep.subr.mxu0 0.0
    %520 = vmatpush1.msra.mxu0 0.0
    %521 = vmatprep.subr.mxu0 0.0
    %522 = vmatpush1.msra.mxu0 0.0
    %523 = vmatprep.subr.mxu0 0.0
    %524 = vmatpush1.msra.mxu0 0.0
    %525 = vmatprep.subr.mxu0 0.0
    %526 = vmatpush1.msra.mxu0 0.0
    %527 = vmatprep.subr.mxu0 0.0
    %528 = vmatpush1.msra.mxu0 0.0
    %529 = vmatprep.subr.mxu0 0.0
    %530 = vmatpush1.msra.mxu0 0.0
    %531 = vmatprep.subr.mxu0 0.0
    %532 = vmatpush1.msra.mxu0 0.0
    %533 = vmatprep.subr.mxu0 0.0
    %534 = vmatpush1.msra.mxu0 0.0
    %535 = vmatprep.subr.mxu0 0.0
    %536 = vmatpush1.msra.mxu0 0.0
    %537 = vmatprep.subr.mxu0 0.0
    %538 = vmatpush1.msra.mxu0 0.0
    %539 = vmatprep.subr.mxu0 0.0
    %540 = vmatpush1.msra.mxu0 0.0
    %541 = vmatprep.subr.mxu0 0.0
    %542 = vmatpush1.msra.mxu0 0.0
    %543 = vmatprep.subr.mxu0 0.0
    %544 = vmatpush1.msra.mxu0 0.0
    %545 = vmatprep.subr.mxu0 0.0
    %546 = vmatpush1.msra.mxu0 0.0
    %547 = vmatprep.subr.mxu0 0.0
    %548 = vmatpush1.msra.mxu0 0.0
    %549 = vmatprep.mubr.f32.mxu0 0.0
    %550 = vmatmul.mubr.f32.gmra.mrb[0].mxu0 %v483
    %v551 = vpop.f32.mrb[0].mxu0
    %v552 = vadd.f32 0.0, %v551
    %v553 = vpop.f32.mrb[0].mxu0
    %554 = vdwg.mxu0
    %v556 = vsel %vm459, %v481, 0
    %558 = vmatprep.subr.mxu0 0.0
    %559 = vmatpush1.msra.mxu0 %v314
    %560 = vmatprep.subr.mxu0 0.0
    %561 = vmatpush1.msra.mxu0 0.0
    %562 = vmatprep.subr.mxu0 0.0
    %563 = vmatpush1.msra.mxu0 0.0
    %564 = vmatprep.subr.mxu0 0.0
    %565 = vmatpush1.msra.mxu0 0.0
    %566 = vmatprep.subr.mxu0 0.0
    %567 = vmatpush1.msra.mxu0 0.0
    %568 = vmatprep.subr.mxu0 0.0
    %569 = vmatpush1.msra.mxu0 0.0
    %570 = vmatprep.subr.mxu0 0.0
    %571 = vmatpush1.msra.mxu0 0.0
    %572 = vmatprep.subr.mxu0 0.0
    %573 = vmatpush1.msra.mxu0 0.0
    %574 = vmatprep.subr.mxu0 0.0
    %575 = vmatpush1.msra.mxu0 0.0
    %576 = vmatprep.subr.mxu0 0.0
    %577 = vmatpush1.msra.mxu0 0.0
    %578 = vmatprep.subr.mxu0 0.0
    %579 = vmatpush1.msra.mxu0 0.0
    %580 = vmatprep.subr.mxu0 0.0
    %581 = vmatpush1.msra.mxu0 0.0
    %582 = vmatprep.subr.mxu0 0.0
    %583 = vmatpush1.msra.mxu0 0.0
    %584 = vmatprep.subr.mxu0 0.0
    %585 = vmatpush1.msra.mxu0 0.0
    %586 = vmatprep.subr.mxu0 0.0
    %587 = vmatpush1.msra.mxu0 0.0
    %588 = vmatprep.subr.mxu0 0.0
    %589 = vmatpush1.msra.mxu0 0.0
    %590 = vmatprep.subr.mxu0 0.0
    %591 = vmatpush1.msra.mxu0 0.0
    %592 = vmatprep.subr.mxu0 0.0
    %593 = vmatpush1.msra.mxu0 0.0
    %594 = vmatprep.subr.mxu0 0.0
    %595 = vmatpush1.msra.mxu0 0.0
    %596 = vmatprep.subr.mxu0 0.0
    %597 = vmatpush1.msra.mxu0 0.0
    %598 = vmatprep.subr.mxu0 0.0
    %599 = vmatpush1.msra.mxu0 0.0
    %600 = vmatprep.subr.mxu0 0.0
    %601 = vmatpush1.msra.mxu0 0.0
    %602 = vmatprep.subr.mxu0 0.0
    %603 = vmatpush1.msra.mxu0 0.0
    %604 = vmatprep.subr.mxu0 0.0
    %605 = vmatpush1.msra.mxu0 0.0
    %606 = vmatprep.subr.mxu0 0.0
    %607 = vmatpush1.msra.mxu0 0.0
    %608 = vmatprep.subr.mxu0 0.0
    %609 = vmatpush1.msra.mxu0 0.0
    %610 = vmatprep.subr.mxu0 0.0
    %611 = vmatpush1.msra.mxu0 0.0
    %612 = vmatprep.subr.mxu0 0.0
    %613 = vmatpush1.msra.mxu0 0.0
    %614 = vmatprep.subr.mxu0 0.0
    %615 = vmatpush1.msra.mxu0 0.0
    %616 = vmatprep.subr.mxu0 0.0
    %617 = vmatpush1.msra.mxu0 0.0
    %618 = vmatprep.subr.mxu0 0.0
    %619 = vmatpush1.msra.mxu0 0.0
    %620 = vmatprep.subr.mxu0 0.0
    %621 = vmatpush1.msra.mxu0 0.0
    %622 = vmatprep.mubr.f32.mxu0 0.0
    %623 = vmatmul.mubr.f32.gmra.mrb[0].mxu0 %v556
    %v624 = vpop.f32.mrb[0].mxu0
    %v625 = vadd.f32 0.0, %v624
    %v626 = vpop.f32.mrb[0].mxu0
    %627 = vdwg.mxu0
    %v628 = vld [vmem:[#allocation7] sm:$0xff]
    %v629 = vld [vmem:[#allocation7 + $0x8] sm:$0xff]
    %v630 = vld [vmem:[#allocation7 + $0x10] sm:$0xff]
    %v631 = vld [vmem:[#allocation7 + $0x18] sm:$0xff]
    %v632 = vld [vmem:[#allocation7 + $0x20] sm:$0xff]
    %v633 = vld [vmem:[#allocation7 + $0x28] sm:$0xff]
    %v634 = vld [vmem:[#allocation7 + $0x30] sm:$0xff]
    %v635 = vld [vmem:[#allocation7 + $0x38] sm:$0xff]
    %v636 = vld [vmem:[#allocation7 + $0x40] sm:$0xff]
    %v637 = vld [vmem:[#allocation7 + $0x48] sm:$0xff]
    %v638 = vld [vmem:[#allocation7 + $0x50] sm:$0xff]
    %v639 = vld [vmem:[#allocation7 + $0x58] sm:$0xff]
    %v640 = vld [vmem:[#allocation7 + $0x60] sm:$0xff]
    %v641 = vld [vmem:[#allocation7 + $0x68] sm:$0xff]
    %v642 = vld [vmem:[#allocation7 + $0x70] sm:$0xff]
    %v643 = vld [vmem:[#allocation7 + $0x78] sm:$0xff]
    %644 = vmatprep.subr.mxu0 0.0
    %645 = vmatpush1.msra.mxu0 %v628
    %646 = vmatprep.subr.mxu0 0.0
    %647 = vmatpush1.msra.mxu0 %v629
    %648 = vmatprep.subr.mxu0 0.0
    %649 = vmatpush1.msra.mxu0 %v630
    %650 = vmatprep.subr.mxu0 0.0
    %651 = vmatpush1.msra.mxu0 %v631
    %652 = vmatprep.subr.mxu0 0.0
    %653 = vmatpush1.msra.mxu0 %v632
    %654 = vmatprep.subr.mxu0 0.0
    %655 = vmatpush1.msra.mxu0 %v633
    %656 = vmatprep.subr.mxu0 0.0
    %657 = vmatpush1.msra.mxu0 %v634
    %658 = vmatprep.subr.mxu0 0.0
    %659 = vmatpush1.msra.mxu0 %v635
    %660 = vmatprep.subr.mxu0 0.0
    %661 = vmatpush1.msra.mxu0 %v636
    %662 = vmatprep.subr.mxu0 0.0
    %663 = vmatpush1.msra.mxu0 %v637
    %664 = vmatprep.subr.mxu0 0.0
    %665 = vmatpush1.msra.mxu0 %v638
    %666 = vmatprep.subr.mxu0 0.0
    %667 = vmatpush1.msra.mxu0 %v639
    %668 = vmatprep.subr.mxu0 0.0
    %669 = vmatpush1.msra.mxu0 %v640
    %670 = vmatprep.subr.mxu0 0.0
    %671 = vmatpush1.msra.mxu0 %v641
    %672 = vmatprep.subr.mxu0 0.0
    %673 = vmatpush1.msra.mxu0 %v642
    %674 = vmatprep.subr.mxu0 0.0
    %675 = vmatpush1.msra.mxu0 %v643
    %676 = vmatprep.subr.mxu0 0.0
    %677 = vmatpush1.msra.mxu0 0.0
    %678 = vmatprep.subr.mxu0 0.0
    %679 = vmatpush1.msra.mxu0 0.0
    %680 = vmatprep.subr.mxu0 0.0
    %681 = vmatpush1.msra.mxu0 0.0
    %682 = vmatprep.subr.mxu0 0.0
    %683 = vmatpush1.msra.mxu0 0.0
    %684 = vmatprep.subr.mxu0 0.0
    %685 = vmatpush1.msra.mxu0 0.0
    %686 = vmatprep.subr.mxu0 0.0
    %687 = vmatpush1.msra.mxu0 0.0
    %688 = vmatprep.subr.mxu0 0.0
    %689 = vmatpush1.msra.mxu0 0.0
    %690 = vmatprep.subr.mxu0 0.0
    %691 = vmatpush1.msra.mxu0 0.0
    %692 = vmatprep.subr.mxu0 0.0
    %693 = vmatpush1.msra.mxu0 0.0
    %694 = vmatprep.subr.mxu0 0.0
    %695 = vmatpush1.msra.mxu0 0.0
    %696 = vmatprep.subr.mxu0 0.0
    %697 = vmatpush1.msra.mxu0 0.0
    %698 = vmatprep.subr.mxu0 0.0
    %699 = vmatpush1.msra.mxu0 0.0
    %700 = vmatprep.subr.mxu0 0.0
    %701 = vmatpush1.msra.mxu0 0.0
    %702 = vmatprep.subr.mxu0 0.0
    %703 = vmatpush1.msra.mxu0 0.0
    %704 = vmatprep.subr.mxu0 0.0
    %705 = vmatpush1.msra.mxu0 0.0
    %706 = vmatprep.subr.mxu0 0.0
    %707 = vmatpush1.msra.mxu0 0.0
    %708 = vmatprep.mubr.f32.mxu0 0.0
    %709 = vmatmul.mubr.f32.gmra.mrb[0].mxu0 %v552
    %v710 = vpop.f32.mrb[0].mxu0
    %v711 = vadd.f32 0.0, %v710
    %v712 = vpop.f32.mrb[0].mxu0
    %713 = vmatprep.mubr.f32.mxu0 0.0
    %714 = vmatmul.mubr.f32.gmra.mrb[0].mxu0 %v625
    %v715 = vpop.f32.mrb[0].mxu0
    %v716 = vadd.f32 0.0, %v715
    %v717 = vpop.f32.mrb[0].mxu0
    %718 = vdwg.mxu0
    %v719 = vadd.f32 %v115, %v711
    %v720 = vadd.f32 %v116, %v716
    %v721 = vld [vmem:[#allocation8] sm:$0xff]
    %v722 = vld [vmem:[#allocation8 + $0x8] sm:$0xff]
    %v723 = vld [vmem:[#allocation8 + $0x10] sm:$0xff]
    %v724 = vld [vmem:[#allocation8 + $0x18] sm:$0xff]
    %v725 = vld [vmem:[#allocation8 + $0x20] sm:$0xff]
    %v726 = vld [vmem:[#allocation8 + $0x28] sm:$0xff]
    %v727 = vld [vmem:[#allocation8 + $0x30] sm:$0xff]
    %v728 = vld [vmem:[#allocation8 + $0x38] sm:$0xff]
    %v729 = vld [vmem:[#allocation8 + $0x40] sm:$0xff]
    %v730 = vld [vmem:[#allocation8 + $0x48] sm:$0xff]
    %v731 = vld [vmem:[#allocation8 + $0x50] sm:$0xff]
    %v732 = vld [vmem:[#allocation8 + $0x58] sm:$0xff]
    %v733 = vld [vmem:[#allocation8 + $0x60] sm:$0xff]
    %v734 = vld [vmem:[#allocation8 + $0x68] sm:$0xff]
    %v735 = vld [vmem:[#allocation8 + $0x70] sm:$0xff]
    %v736 = vld [vmem:[#allocation8 + $0x78] sm:$0xff]
    %v737 = vld [vmem:[%s4] sm:$0x1]
    %v739 = vlaneseq
    %v740 = vshrl.u32 %v739, 7
    %v741 = vsub.s32 0, %v740
    %v742 = vrot.slane %v737, %v741
    %744 = vmatprep.subr.mxu0 0.0
    %745 = vmatpush1.msra.mxu0 %v721
    %746 = vmatprep.subr.mxu0 0.0
    %747 = vmatpush1.msra.mxu0 %v722
    %748 = vmatprep.subr.mxu0 0.0
    %749 = vmatpush1.msra.mxu0 %v723
    %750 = vmatprep.subr.mxu0 0.0
    %751 = vmatpush1.msra.mxu0 %v724
    %752 = vmatprep.subr.mxu0 0.0
    %753 = vmatpush1.msra.mxu0 %v725
    %754 = vmatprep.subr.mxu0 0.0
    %755 = vmatpush1.msra.mxu0 %v726
    %756 = vmatprep.subr.mxu0 0.0
    %757 = vmatpush1.msra.mxu0 %v727
    %758 = vmatprep.subr.mxu0 0.0
    %759 = vmatpush1.msra.mxu0 %v728
    %760 = vmatprep.subr.mxu0 0.0
    %761 = vmatpush1.msra.mxu0 %v729
    %762 = vmatprep.subr.mxu0 0.0
    %763 = vmatpush1.msra.mxu0 %v730
    %764 = vmatprep.subr.mxu0 0.0
    %765 = vmatpush1.msra.mxu0 %v731
    %766 = vmatprep.subr.mxu0 0.0
    %767 = vmatpush1.msra.mxu0 %v732
    %768 = vmatprep.subr.mxu0 0.0
    %769 = vmatpush1.msra.mxu0 %v733
    %770 = vmatprep.subr.mxu0 0.0
    %771 = vmatpush1.msra.mxu0 %v734
    %772 = vmatprep.subr.mxu0 0.0
    %773 = vmatpush1.msra.mxu0 %v735
    %774 = vmatprep.subr.mxu0 0.0
    %775 = vmatpush1.msra.mxu0 %v736
    %776 = vmatprep.subr.mxu0 0.0
    %777 = vmatpush1.msra.mxu0 0.0
    %778 = vmatprep.subr.mxu0 0.0
    %779 = vmatpush1.msra.mxu0 0.0
    %780 = vmatprep.subr.mxu0 0.0
    %781 = vmatpush1.msra.mxu0 0.0
    %782 = vmatprep.subr.mxu0 0.0
    %783 = vmatpush1.msra.mxu0 0.0
    %784 = vmatprep.subr.mxu0 0.0
    %785 = vmatpush1.msra.mxu0 0.0
    %786 = vmatprep.subr.mxu0 0.0
    %787 = vmatpush1.msra.mxu0 0.0
    %788 = vmatprep.subr.mxu0 0.0
    %789 = vmatpush1.msra.mxu0 0.0
    %790 = vmatprep.subr.mxu0 0.0
    %791 = vmatpush1.msra.mxu0 0.0
    %792 = vmatprep.subr.mxu0 0.0
    %793 = vmatpush1.msra.mxu0 0.0
    %794 = vmatprep.subr.mxu0 0.0
    %795 = vmatpush1.msra.mxu0 0.0
    %796 = vmatprep.subr.mxu0 0.0
    %797 = vmatpush1.msra.mxu0 0.0
    %798 = vmatprep.subr.mxu0 0.0
    %799 = vmatpush1.msra.mxu0 0.0
    %800 = vmatprep.subr.mxu0 0.0
    %801 = vmatpush1.msra.mxu0 0.0
    %802 = vmatprep.subr.mxu0 0.0
    %803 = vmatpush1.msra.mxu0 0.0
    %804 = vmatprep.subr.mxu0 0.0
    %805 = vmatpush1.msra.mxu0 0.0
    %806 = vmatprep.subr.mxu0 0.0
    %807 = vmatpush1.msra.mxu0 0.0
    %808 = vmatprep.mubr.f32.mxu0 0.0
    %809 = vmatmul.mubr.f32.gmra.mrb[0].mxu0 %v719
    %v810 = vpop.f32.mrb[0].mxu0
    %v811 = vadd.f32 %v742, %v810
    %v812 = vpop.f32.mrb[0].mxu0
    %813 = vmatprep.mubr.f32.mxu0 0.0
    %814 = vmatmul.mubr.f32.gmra.mrb[0].mxu0 %v720
    %v815 = vpop.f32.mrb[0].mxu0
    %v816 = vadd.f32 %v742, %v815
    %v817 = vpop.f32.mrb[0].mxu0
    %818 = vdwg.mxu0
    %v819 = vmax.f32 %v811, 0.0
    %v820 = vmax.f32 %v816, 0.0
    %v821 = vld [vmem:[#allocation10] sm:$0xff]
    %v822 = vld [vmem:[#allocation10 + $0x8] sm:$0xff]
    %v823 = vld [vmem:[#allocation10 + $0x10] sm:$0xff]
    %v824 = vld [vmem:[#allocation10 + $0x18] sm:$0xff]
    %v825 = vld [vmem:[#allocation10 + $0x20] sm:$0xff]
    %v826 = vld [vmem:[#allocation10 + $0x28] sm:$0xff]
    %v827 = vld [vmem:[#allocation10 + $0x30] sm:$0xff]
    %v828 = vld [vmem:[#allocation10 + $0x38] sm:$0xff]
    %v829 = vld [vmem:[#allocation10 + $0x40] sm:$0xff]
    %v830 = vld [vmem:[#allocation10 + $0x48] sm:$0xff]
    %v831 = vld [vmem:[#allocation10 + $0x50] sm:$0xff]
    %v832 = vld [vmem:[#allocation10 + $0x58] sm:$0xff]
    %v833 = vld [vmem:[#allocation10 + $0x60] sm:$0xff]
    %v834 = vld [vmem:[#allocation10 + $0x68] sm:$0xff]
    %v835 = vld [vmem:[#allocation10 + $0x70] sm:$0xff]
    %v836 = vld [vmem:[#allocation10 + $0x78] sm:$0xff]
    %837 = vmatprep.subr.mxu0 0.0
    %838 = vmatpush1.msra.mxu0 %v821
    %839 = vmatprep.subr.mxu0 0.0
    %840 = vmatpush1.msra.mxu0 %v822
    %841 = vmatprep.subr.mxu0 0.0
    %842 = vmatpush1.msra.mxu0 %v823
    %843 = vmatprep.subr.mxu0 0.0
    %844 = vmatpush1.msra.mxu0 %v824
    %845 = vmatprep.subr.mxu0 0.0
    %846 = vmatpush1.msra.mxu0 %v825
    %847 = vmatprep.subr.mxu0 0.0
    %848 = vmatpush1.msra.mxu0 %v826
    %849 = vmatprep.subr.mxu0 0.0
    %850 = vmatpush1.msra.mxu0 %v827
    %851 = vmatprep.subr.mxu0 0.0
    %852 = vmatpush1.msra.mxu0 %v828
    %853 = vmatprep.subr.mxu0 0.0
    %854 = vmatpush1.msra.mxu0 %v829
    %855 = vmatprep.subr.mxu0 0.0
    %856 = vmatpush1.msra.mxu0 %v830
    %857 = vmatprep.subr.mxu0 0.0
    %858 = vmatpush1.msra.mxu0 %v831
    %859 = vmatprep.subr.mxu0 0.0
    %860 = vmatpush1.msra.mxu0 %v832
    %861 = vmatprep.subr.mxu0 0.0
    %862 = vmatpush1.msra.mxu0 %v833
    %863 = vmatprep.subr.mxu0 0.0
    %864 = vmatpush1.msra.mxu0 %v834
    %865 = vmatprep.subr.mxu0 0.0
    %866 = vmatpush1.msra.mxu0 %v835
    %867 = vmatprep.subr.mxu0 0.0
    %868 = vmatpush1.msra.mxu0 %v836
    %869 = vmatprep.subr.mxu0 0.0
    %870 = vmatpush1.msra.mxu0 0.0
    %871 = vmatprep.subr.mxu0 0.0
    %872 = vmatpush1.msra.mxu0 0.0
    %873 = vmatprep.subr.mxu0 0.0
    %874 = vmatpush1.msra.mxu0 0.0
    %875 = vmatprep.subr.mxu0 0.0
    %876 = vmatpush1.msra.mxu0 0.0
    %877 = vmatprep.subr.mxu0 0.0
    %878 = vmatpush1.msra.mxu0 0.0
    %879 = vmatprep.subr.mxu0 0.0
    %880 = vmatpush1.msra.mxu0 0.0
    %881 = vmatprep.subr.mxu0 0.0
    %882 = vmatpush1.msra.mxu0 0.0
    %883 = vmatprep.subr.mxu0 0.0
    %884 = vmatpush1.msra.mxu0 0.0
    %885 = vmatprep.subr.mxu0 0.0
    %886 = vmatpush1.msra.mxu0 0.0
    %887 = vmatprep.subr.mxu0 0.0
    %888 = vmatpush1.msra.mxu0 0.0
    %889 = vmatprep.subr.mxu0 0.0
    %890 = vmatpush1.msra.mxu0 0.0
    %891 = vmatprep.subr.mxu0 0.0
    %892 = vmatpush1.msra.mxu0 0.0
    %893 = vmatprep.subr.mxu0 0.0
    %894 = vmatpush1.msra.mxu0 0.0
    %895 = vmatprep.subr.mxu0 0.0
    %896 = vmatpush1.msra.mxu0 0.0
    %897 = vmatprep.subr.mxu0 0.0
    %898 = vmatpush1.msra.mxu0 0.0
    %899 = vmatprep.subr.mxu0 0.0
    %900 = vmatpush1.msra.mxu0 0.0
    %901 = vmatprep.mubr.f32.mxu0 0.0
    %902 = vmatmul.mubr.f32.gmra.mrb[0].mxu0 %v819
    %v903 = vpop.f32.mrb[0].mxu0
    %v904 = vadd.f32 0.0, %v903
    %v905 = vpop.f32.mrb[0].mxu0
    %906 = vmatprep.mubr.f32.mxu0 0.0
    %907 = vmatmul.mubr.f32.gmra.mrb[0].mxu0 %v820
    %v908 = vpop.f32.mrb[0].mxu0
    %v909 = vadd.f32 0.0, %v908
    %v910 = vpop.f32.mrb[0].mxu0
    %911 = vdwg.mxu0
    %v912 = vadd.f32 %v719, %v904
    %v913 = vadd.f32 %v720, %v909
    %v914 = vld [vmem:[%s6] sm:$0x1]
    %v916 = vlaneseq
    %v917 = vshrl.u32 %v916, 7
    %v918 = vsub.s32 0, %v917
    %v919 = vrot.slane %v914, %v918
    %v921 = vadd.f32 %v912, %v919
    %v922 = vadd.f32 %v913, %v919
    %v923 = vrot.slane %v921, 4
    %v924 = vadd.f32 %v921, %v923
    %v925 = vrot.slane %v924, 2
    %v926 = vadd.f32 %v924, %v925
    %v927 = vrot.slane %v926, 1
    %v928 = vadd.f32 %v926, %v927
    %v929 = vrot.slane %v922, 4
    %v930 = vadd.f32 %v922, %v929
    %v931 = vrot.slane %v930, 2
    %v932 = vadd.f32 %v930, %v931
    %v933 = vrot.slane %v932, 1
    %v934 = vadd.f32 %v932, %v933
    %v935 = vld [vmem:[#allocation11] sm:$0xff]
    %v936 = vld [vmem:[#allocation11 + $0x8] sm:$0xff]
    %v937 = vld [vmem:[#allocation11 + $0x10] sm:$0xff]
    %v938 = vld [vmem:[#allocation11 + $0x18] sm:$0xff]
    %v939 = vld [vmem:[#allocation11 + $0x20] sm:$0xff]
    %v940 = vld [vmem:[#allocation11 + $0x28] sm:$0xff]
    %v941 = vld [vmem:[#allocation11 + $0x30] sm:$0xff]
    %v942 = vld [vmem:[#allocation11 + $0x38] sm:$0xff]
    %v943 = vld [vmem:[#allocation11 + $0x40] sm:$0xff]
    %v944 = vld [vmem:[#allocation11 + $0x48] sm:$0xff]
    %v945 = vld [vmem:[#allocation11 + $0x50] sm:$0xff]
    %v946 = vld [vmem:[#allocation11 + $0x58] sm:$0xff]
    %v947 = vld [vmem:[#allocation11 + $0x60] sm:$0xff]
    %v948 = vld [vmem:[#allocation11 + $0x68] sm:$0xff]
    %v949 = vld [vmem:[#allocation11 + $0x70] sm:$0xff]
    %v950 = vld [vmem:[#allocation11 + $0x78] sm:$0xff]
    %v951 = vld [vmem:[#allocation11 + $0x80] sm:$0xff]
    %v952 = vld [vmem:[#allocation11 + $0x88] sm:$0xff]
    %v953 = vld [vmem:[#allocation11 + $0x90] sm:$0xff]
    %v954 = vld [vmem:[#allocation11 + $0x98] sm:$0xff]
    %v955 = vld [vmem:[#allocation11 + $0xa0] sm:$0xff]
    %v956 = vld [vmem:[#allocation11 + $0xa8] sm:$0xff]
    %v957 = vld [vmem:[#allocation11 + $0xb0] sm:$0xff]
    %v958 = vld [vmem:[#allocation11 + $0xb8] sm:$0xff]
    %v959 = vld [vmem:[#allocation11 + $0xc0] sm:$0xff]
    %v960 = vld [vmem:[#allocation11 + $0xc8] sm:$0xff]
    %v961 = vld [vmem:[#allocation11 + $0xd0] sm:$0xff]
    %v962 = vld [vmem:[#allocation11 + $0xd8] sm:$0xff]
    %v963 = vld [vmem:[#allocation11 + $0xe0] sm:$0xff]
    %v964 = vld [vmem:[#allocation11 + $0xe8] sm:$0xff]
    %v965 = vld [vmem:[#allocation11 + $0xf0] sm:$0xff]
    %v966 = vld [vmem:[#allocation11 + $0xf8] sm:$0xff]
    %v967 = vld [vmem:[#allocation11 + $0x100] sm:$0xff]
    %v968 = vld [vmem:[#allocation11 + $0x108] sm:$0xff]
    %v969 = vld [vmem:[#allocation11 + $0x110] sm:$0xff]
    %v970 = vld [vmem:[#allocation11 + $0x118] sm:$0xff]
    %v971 = vld [vmem:[#allocation11 + $0x120] sm:$0xff]
    %v972 = vld [vmem:[#allocation11 + $0x128] sm:$0xff]
    %v973 = vld [vmem:[#allocation11 + $0x130] sm:$0xff]
    %v974 = vld [vmem:[#allocation11 + $0x138] sm:$0xff]
    %v975 = vld [vmem:[#allocation11 + $0x140] sm:$0xff]
    %v976 = vld [vmem:[#allocation11 + $0x148] sm:$0xff]
    %v977 = vld [vmem:[#allocation11 + $0x150] sm:$0xff]
    %v978 = vld [vmem:[#allocation11 + $0x158] sm:$0xff]
    %v979 = vld [vmem:[#allocation11 + $0x160] sm:$0xff]
    %v980 = vld [vmem:[#allocation11 + $0x168] sm:$0xff]
    %v981 = vld [vmem:[#allocation11 + $0x170] sm:$0xff]
    %v982 = vld [vmem:[#allocation11 + $0x178] sm:$0xff]
    %v983 = vld [vmem:[#allocation11 + $0x180] sm:$0xff]
    %v984 = vld [vmem:[#allocation11 + $0x188] sm:$0xff]
    %v985 = vld [vmem:[#allocation11 + $0x190] sm:$0xff]
    %v986 = vld [vmem:[#allocation11 + $0x198] sm:$0xff]
    %v987 = vld [vmem:[#allocation11 + $0x1a0] sm:$0xff]
    %v988 = vld [vmem:[#allocation11 + $0x1a8] sm:$0xff]
    %v989 = vld [vmem:[#allocation11 + $0x1b0] sm:$0xff]
    %v990 = vld [vmem:[#allocation11 + $0x1b8] sm:$0xff]
    %v991 = vld [vmem:[#allocation11 + $0x1c0] sm:$0xff]
    %v992 = vld [vmem:[#allocation11 + $0x1c8] sm:$0xff]
    %v993 = vld [vmem:[#allocation11 + $0x1d0] sm:$0xff]
    %v994 = vld [vmem:[#allocation11 + $0x1d8] sm:$0xff]
    %v995 = vld [vmem:[#allocation11 + $0x1e0] sm:$0xff]
    %v996 = vld [vmem:[#allocation11 + $0x1e8] sm:$0xff]
    %v997 = vld [vmem:[#allocation11 + $0x1f0] sm:$0xff]
    %v998 = vld [vmem:[#allocation11 + $0x1f8] sm:$0xff]
    %v999 = vld [vmem:[%s8] sm:$0xf]
    %v1000 = vmul.f32 %v999, 8.0
    %v1002 = vlaneseq
    %v1003 = vshrl.u32 %v1002, 7
    %v1004 = vsub.s32 0, %v1003
    %v1005 = vrot.slane %v1000, %v1004
    %v1006 = vlaneseq
    %v1007 = vshrl.u32 %v1006, 7
    %v1008 = vsub.s32 1, %v1007
    %v1009 = vrot.slane %v1000, %v1008
    %v1010 = vlaneseq
    %v1011 = vshrl.u32 %v1010, 7
    %v1012 = vsub.s32 2, %v1011
    %v1013 = vrot.slane %v1000, %v1012
    %v1014 = vlaneseq
    %v1015 = vshrl.u32 %v1014, 7
    %v1016 = vsub.s32 3, %v1015
    %v1017 = vrot.slane %v1000, %v1016
    %vm1024 = vcmask 1041409
    %v1025 = vsel %vm1024, %v934, %v928
    %1027 = vmatprep.subr.mxu0 %v936
    %1028 = vmatpush1.msra.mxu0 %v935
    %1029 = vmatprep.subr.mxu0 %v940
    %1030 = vmatpush1.msra.mxu0 %v939
    %1031 = vmatprep.subr.mxu0 %v944
    %1032 = vmatpush1.msra.mxu0 %v943
    %1033 = vmatprep.subr.mxu0 %v948
    %1034 = vmatpush1.msra.mxu0 %v947
    %1035 = vmatprep.subr.mxu0 %v952
    %1036 = vmatpush1.msra.mxu0 %v951
    %1037 = vmatprep.subr.mxu0 %v956
    %1038 = vmatpush1.msra.mxu0 %v955
    %1039 = vmatprep.subr.mxu0 %v960
    %1040 = vmatpush1.msra.mxu0 %v959
    %1041 = vmatprep.subr.mxu0 %v964
    %1042 = vmatpush1.msra.mxu0 %v963
    %1043 = vmatprep.subr.mxu0 %v968
    %1044 = vmatpush1.msra.mxu0 %v967
    %1045 = vmatprep.subr.mxu0 %v972
    %1046 = vmatpush1.msra.mxu0 %v971
    %1047 = vmatprep.subr.mxu0 %v976
    %1048 = vmatpush1.msra.mxu0 %v975
    %1049 = vmatprep.subr.mxu0 %v980
    %1050 = vmatpush1.msra.mxu0 %v979
    %1051 = vmatprep.subr.mxu0 %v984
    %1052 = vmatpush1.msra.mxu0 %v983
    %1053 = vmatprep.subr.mxu0 %v988
    %1054 = vmatpush1.msra.mxu0 %v987
    %1055 = vmatprep.subr.mxu0 %v992
    %1056 = vmatpush1.msra.mxu0 %v991
    %1057 = vmatprep.subr.mxu0 %v996
    %1058 = vmatpush1.msra.mxu0 %v995
    %1059 = vmatprep.subr.mxu0 0.0
    %1060 = vmatpush1.msra.mxu0 0.0
    %1061 = vmatprep.subr.mxu0 0.0
    %1062 = vmatpush1.msra.mxu0 0.0
    %1063 = vmatprep.subr.mxu0 0.0
    %1064 = vmatpush1.msra.mxu0 0.0
    %1065 = vmatprep.subr.mxu0 0.0
    %1066 = vmatpush1.msra.mxu0 0.0
    %1067 = vmatprep.subr.mxu0 0.0
    %1068 = vmatpush1.msra.mxu0 0.0
    %1069 = vmatprep.subr.mxu0 0.0
    %1070 = vmatpush1.msra.mxu0 0.0
    %1071 = vmatprep.subr.mxu0 0.0
    %1072 = vmatpush1.msra.mxu0 0.0
    %1073 = vmatprep.subr.mxu0 0.0
    %1074 = vmatpush1.msra.mxu0 0.0
    %1075 = vmatprep.subr.mxu0 0.0
    %1076 = vmatpush1.msra.mxu0 0.0
    %1077 = vmatprep.subr.mxu0 0.0
    %1078 = vmatpush1.msra.mxu0 0.0
    %1079 = vmatprep.subr.mxu0 0.0
    %1080 = vmatpush1.msra.mxu0 0.0
    %1081 = vmatprep.subr.mxu0 0.0
    %1082 = vmatpush1.msra.mxu0 0.0
    %1083 = vmatprep.subr.mxu0 0.0
    %1084 = vmatpush1.msra.mxu0 0.0
    %1085 = vmatprep.subr.mxu0 0.0
    %1086 = vmatpush1.msra.mxu0 0.0
    %1087 = vmatprep.subr.mxu0 0.0
    %1088 = vmatpush1.msra.mxu0 0.0
    %1089 = vmatprep.subr.mxu0 0.0
    %1090 = vmatpush1.msra.mxu0 0.0
    %1091 = vmatprep.mubr.f32.mxu0 0.0
    %1092 = vmatmul.mubr.f32.gmra.mrb[0].mxu0 %v1025
    %v1093 = vpop.f32.mrb[0].mxu0
    %v1094 = vadd.f32 %v1005, %v1093
    %v1095 = vpop.f32.mrb[0].mxu0
    %v1096 = vadd.f32 %v1009, %v1095
    %1097 = vdwg.mxu0
    %1098 = vmatprep.subr.mxu0 %v938
    %1099 = vmatpush1.msra.mxu0 %v937
    %1100 = vmatprep.subr.mxu0 %v942
    %1101 = vmatpush1.msra.mxu0 %v941
    %1102 = vmatprep.subr.mxu0 %v946
    %1103 = vmatpush1.msra.mxu0 %v945
    %1104 = vmatprep.subr.mxu0 %v950
    %1105 = vmatpush1.msra.mxu0 %v949
    %1106 = vmatprep.subr.mxu0 %v954
    %1107 = vmatpush1.msra.mxu0 %v953
    %1108 = vmatprep.subr.mxu0 %v958
    %1109 = vmatpush1.msra.mxu0 %v957
    %1110 = vmatprep.subr.mxu0 %v962
    %1111 = vmatpush1.msra.mxu0 %v961
    %1112 = vmatprep.subr.mxu0 %v966
    %1113 = vmatpush1.msra.mxu0 %v965
    %1114 = vmatprep.subr.mxu0 %v970
    %1115 = vmatpush1.msra.mxu0 %v969
    %1116 = vmatprep.subr.mxu0 %v974
    %1117 = vmatpush1.msra.mxu0 %v973
    %1118 = vmatprep.subr.mxu0 %v978
    %1119 = vmatpush1.msra.mxu0 %v977
    %1120 = vmatprep.subr.mxu0 %v982
    %1121 = vmatpush1.msra.mxu0 %v981
    %1122 = vmatprep.subr.mxu0 %v986
    %1123 = vmatpush1.msra.mxu0 %v985
    %1124 = vmatprep.subr.mxu0 %v990
    %1125 = vmatpush1.msra.mxu0 %v989
    %1126 = vmatprep.subr.mxu0 %v994
    %1127 = vmatpush1.msra.mxu0 %v993
    %1128 = vmatprep.subr.mxu0 %v998
    %1129 = vmatpush1.msra.mxu0 %v997
    %1130 = vmatprep.subr.mxu0 0.0
    %1131 = vmatpush1.msra.mxu0 0.0
    %1132 = vmatprep.subr.mxu0 0.0
    %1133 = vmatpush1.msra.mxu0 0.0
    %1134 = vmatprep.subr.mxu0 0.0
    %1135 = vmatpush1.msra.mxu0 0.0
    %1136 = vmatprep.subr.mxu0 0.0
    %1137 = vmatpush1.msra.mxu0 0.0
    %1138 = vmatprep.subr.mxu0 0.0
    %1139 = vmatpush1.msra.mxu0 0.0
    %1140 = vmatprep.subr.mxu0 0.0
    %1141 = vmatpush1.msra.mxu0 0.0
    %1142 = vmatprep.subr.mxu0 0.0
    %1143 = vmatpush1.msra.mxu0 0.0
    %1144 = vmatprep.subr.mxu0 0.0
    %1145 = vmatpush1.msra.mxu0 0.0
    %1146 = vmatprep.subr.mxu0 0.0
    %1147 = vmatpush1.msra.mxu0 0.0
    %1148 = vmatprep.subr.mxu0 0.0
    %1149 = vmatpush1.msra.mxu0 0.0
    %1150 = vmatprep.subr.mxu0 0.0
    %1151 = vmatpush1.msra.mxu0 0.0
    %1152 = vmatprep.subr.mxu0 0.0
    %1153 = vmatpush1.msra.mxu0 0.0
    %1154 = vmatprep.subr.mxu0 0.0
    %1155 = vmatpush1.msra.mxu0 0.0
    %1156 = vmatprep.subr.mxu0 0.0
    %1157 = vmatpush1.msra.mxu0 0.0
    %1158 = vmatprep.subr.mxu0 0.0
    %1159 = vmatpush1.msra.mxu0 0.0
    %1160 = vmatprep.subr.mxu0 0.0
    %1161 = vmatpush1.msra.mxu0 0.0
    %1162 = vmatprep.mubr.f32.mxu0 0.0
    %1163 = vmatmul.mubr.f32.gmra.mrb[0].mxu0 %v1025
    %v1164 = vpop.f32.mrb[0].mxu0
    %v1165 = vadd.f32 %v1013, %v1164
    %v1166 = vpop.f32.mrb[0].mxu0
    %v1167 = vadd.f32 %v1017, %v1166
    %1168 = vdwg.mxu0
    %v1169 = vcombine.low %v1094, %v1165
    %v1171 = vunpack.c.l.s4 1983009808
    %v1172 = vunpack.c.0.s8 %v1171
    %v1173 = vlaneseq
    %v1174 = vshrl.u32 %v1173, 7
    %v1175 = vsub.s32 %v1172, %v1174
    %v1176 = vrot.slane %v1169, %v1175
    %v1177 = vcombine.low %v1096, %v1167
    %v1179 = vunpack.c.l.s4 1983009808
    %v1180 = vunpack.c.0.s8 %v1179
    %v1181 = vlaneseq
    %v1182 = vshrl.u32 %v1181, 7
    %v1183 = vsub.s32 %v1180, %v1182
    %v1184 = vrot.slane %v1177, %v1183
    %v1185 = vcombine.low %v1176, %v1184
    %v1187 = vunpack.c.l.s4 1934713408
    %v1188 = vunpack.c.0.s8 %v1187
    %v1189 = vlaneseq
    %v1190 = vshrl.u32 %v1189, 7
    %v1191 = vsub.s32 %v1188, %v1190
    %v1192 = vrot.slane %v1185, %v1191
    %v1193 = vcombine.high %v1192, 0.0
    %v1194 = vlaneseq
    %v1195 = vand.u32 %v1194, 127
    %vm1196 = vcmp.lt.s32.totalorder %v1195, 5
    %v1197 = vsel %vm1196, 1, 0
    %vm1198 = vcmp.eq.s32.totalorder %v1197, 1
    %v1199 = vsel %vm1198, %v1192, -inf
    %v1200 = vsel %vm1198, %v1193, -inf
    %vm1201 = vcmask 1043456
    %v1202 = vsel %vm1201, %v1199, -inf
    %1203 = vmax.xlane.f32.xlu0 %v1202
    %v1204 = vpop.xlane.xlu0 %1203
    %v1205 = vsel %vm1201, %v1200, -inf
    %1206 = vmax.xlane.f32.xlu0 %v1205
    %v1207 = vpop.xlane.xlu0 %1206
    %v1208 = vsub.f32 %v1199, %v1204
    %v1209 = vsub.f32 %v1200, %v1207
    %v1210 = vmul.f32 %v1208, 1.442695
    %v1211 = vpow.pop %v1210
    %v1212 = vmul.f32 %v1209, 1.442695
    %v1213 = vpow.pop %v1212
    %v1214 = vsel %vm1201, %v1211, 0.0
    %1215 = vadd.xlane.f32.xlu0 %v1214
    %v1216 = vpop.xlane.xlu0 %1215
    %v1217 = vsel %vm1201, %v1213, 0.0
    %1218 = vadd.xlane.f32.xlu0 %v1217
    %v1219 = vpop.xlane.xlu0 %1218
    %v1220 = vlog2.pop %v1216
    %v1221 = vmul.f32 %v1220, 0.6931472
    %v1222 = vlog2.pop %v1219
    %v1223 = vmul.f32 %v1222, 0.6931472
    %v1224 = vadd.f32 %v1204, %v1221
    %v1225 = vadd.f32 %v1207, %v1223
    %v1226 = vsub.f32 %v1199, %v1224
    %v1227 = vsub.f32 %v1200, %v1225
    %1228 = vst [vmem:[#allocation13] sm:$0xf] %v1226
    %1229 = vst [vmem:[#allocation13 + $0x4] sm:$0xf] %v1227
    // Predicated region
    $region62: #{tpu_custom_call.1} parent=1 // pred_check
      _
    $region63: #{tpu_custom_call.1} parent=1 // pred_check_branch
      %1231 = sbr.rel (0) target = $region65
    $region64: #{tpu_custom_call.1} parent=1 // pred_region
      %s1233 = ssub.s32 128, 128
      %1234 = vsyncadd [#allocation4], %s1233
      %s1235 = sshll.u32 [#allocation13], 4
      %s1236 = int_to_ptr.vmem [resolvable:$true] %s1235
      %1241 = dma.vmem_to_hbm [thread:$0]  %s1236, 128, %s9, [#allocation4], 64, 64, 4
    $region65: #{tpu_custom_call.1} parent=1 // pred_fallthru
      _
    // Predicated region
    $region66: #{tpu_custom_call.1} parent=1 // pred_check
      _
    $region67: #{tpu_custom_call.1} parent=1 // pred_check_branch
      %1243 = sbr.rel (0) target = $region69
    $region68: #{tpu_custom_call.1} parent=1 // pred_region
      %1244 = dma.done [#allocation4], 128
    $region69: #{tpu_custom_call.1} parent=1 // pred_fallthru
      _
    %1245 = vsyncpa [#allocation3], 1
    %1246 = vsyncpa [#allocation6], 1
    %1247 = vsyncpa [#allocation9], 1
    %1248 = vsyncpa [#allocation12], 1
    %1249 = vsyncpa [#allocation4], 1

</llo_original>
